<compile_context>
chip_gen: v7x
topology: tpu7x:2x2x1
jax: 0.10.0
libtpu: 0.0.40
codegen_flags: <defaults>
</compile_context>

<pallas_src>
import functools

import jax
import jax.numpy as jnp
from jax.experimental import pallas as pl
from jax.experimental.pallas import tpu as pltpu


# ----------------------------------------------------------------------------
# Fused kernel: staged input -> n_layers LSTM recurrence -> fused head + residual
# ----------------------------------------------------------------------------
def _ex_lstm_kernel(x_ref, wx_ref, wh_ref, b_ref, wp_ref, bp_ref, xres_ref, out_ref,
                    seq_sc, gx_sc, *, n_layers, L, H, Dmax, Cflat):
    """Forward for one batch chunk.

    x_ref   : [bb, L, Dmax]           LSTM input, zero-padded to width Dmax
    wx_ref  : [n_layers, Dmax, 4H]    input->gates weights (zero-padded rows)
    wh_ref  : [n_layers, H, 4H]       hidden->gates weights
    b_ref   : [n_layers, 1, 4H]       bias_ih + bias_hh per layer
    wp_ref  : [H, Cflat]              fused head weight  (fc_w * pw)
    bp_ref  : [1, Cflat]              fused head bias    (fc_b * pw + pb)
    xres_ref: [bb, L, Cflat]          residual X, last two dims flattened
    out_ref : [bb, L, Cflat]
    seq_sc  : [L, bb, Dmax]           VMEM scratch: inter-layer activations (time-major)
    gx_sc   : [L, bb, 4H]             VMEM scratch: precomputed input-gate projections
    """
    bb = x_ref.shape[0]

    # Stage the input chunk into time-major scratch (static copies inside the
    # kernel; no wrapper transpose / extra HBM pass).
    xall = x_ref[...]
    for t in range(L):
        seq_sc[t] = xall[:, t, :]

    # ---- stacked LSTM layers, recurrence fully inside the kernel ------------
    for layer in range(n_layers):                      # static, n_layers is tiny
        wx = wx_ref[layer]                             # [Dmax, 4H]  (hoisted load)
        wh = wh_ref[layer]                             # [H, 4H]     (hoisted load)
        bias = jnp.broadcast_to(b_ref[layer], (bb, 4 * H))   # hoisted broadcast

        # Input projections for all timesteps: independent of the recurrence,
        # so they are issued up-front (off the sequential critical path).
        for t in range(L):                             # static loop
            gx_sc[t] = (jnp.dot(seq_sc[t], wx, preferred_element_type=jnp.float32)
                        + bias)

        def step(t, carry, wh=wh):
            h, c = carry                               # carries stay in vregs
            gates = gx_sc[t] + jnp.dot(h, wh, preferred_element_type=jnp.float32)
            i = jax.nn.sigmoid(gates[:, 0 * H:1 * H])
            f = jax.nn.sigmoid(gates[:, 1 * H:2 * H])
            g = jnp.tanh(gates[:, 2 * H:3 * H])
            o = jax.nn.sigmoid(gates[:, 3 * H:4 * H])
            c_new = f * c + i * g
            h_new = o * jnp.tanh(c_new)
            h_out = h_new
            if Dmax > H:                  # static pad (no-op when Dmax == H)
                h_out = jnp.concatenate(
                    [h_out, jnp.zeros((bb, Dmax - H), jnp.float32)], axis=-1)
            seq_sc[t] = h_out             # layer output overwrites its input
            return (h_new, c_new)

        zeros = jnp.zeros((bb, H), jnp.float32)
        jax.lax.fori_loop(0, L, step, (zeros, zeros), unroll=True)

    # ---- fused output head: relu(h) @ W' + b' + X ----------------------------
    wp = wp_ref[...]                                          # [H, Cflat]
    bias_p = jnp.broadcast_to(bp_ref[...], (bb, Cflat))       # hoisted broadcast
    xres = xres_ref[...]                                      # [bb, L, Cflat]
    for t in range(L):                                        # static, L small
        hid_t = jnp.maximum(seq_sc[t][:, :H], 0.0)            # ReLU
        y_t = jnp.dot(hid_t, wp, preferred_element_type=jnp.float32) + bias_p
        y_t = y_t + xres[:, t, :]
        out_ref[:, t:t + 1, :] = y_t[:, None, :].astype(out_ref.dtype)


# ----------------------------------------------------------------------------
# Wrapper: parameter folding + single pallas_call
# ----------------------------------------------------------------------------
def ex_lstm_forward(X, X_ex, params):
    B, L, c_in, ex_c_out = X.shape
    H = params["fc_w"].shape[0]                    # d_model
    n_layers = len(params["lstm"])
    Din0 = c_in + X_ex.shape[-1]
    Dmax = max(Din0, H)
    Cflat = c_in * ex_c_out

    # Input prep: mean over exogenous channels, concat, zero-pad width to Dmax.
    inputs = jnp.concatenate([X.mean(axis=-1), X_ex], axis=-1)   # [B, L, Din0]
    if Dmax > Din0:
        inputs = jnp.pad(inputs, ((0, 0), (0, 0), (0, Dmax - Din0)))

    # Stack per-layer LSTM weights into uniform operands: input weights are
    # zero-padded to Dmax rows so every layer uses the same shapes.
    Wx, Wh, bs = [], [], []
    for (wih, whh, b) in params["lstm"]:
        w_in = jnp.zeros((Dmax, 4 * H), jnp.float32).at[: wih.shape[0]].set(wih)
        Wx.append(w_in)                                          # [Dmax, 4H]
        Wh.append(whh)                                           # [H, 4H]
        bs.append(b)                                             # [1, 4H]
    Wx = jnp.stack(Wx, axis=0)                                   # [n_layers, Dmax, 4H]
    Wh = jnp.stack(Wh, axis=0)                                   # [n_layers, H, 4H]
    Bias = jnp.stack(bs, axis=0)                                 # [n_layers, 1, 4H]

    # Fold the two head linears into one matmul:
    #   y[n,c,e] = (relu(h) @ fc_w + fc_b)[n,c] * pw[e] + pb[e] + X[n,c,e]
    wp = (params["fc_w"][:, :, None] * params["pw"][0][None, None, :]
          ).reshape(H, Cflat)
    bp = (params["fc_b"][0][:, None] * params["pw"][0][None, :]
          + params["pb"][0][None, :]).reshape(1, Cflat)

    xres = X.reshape(B, L, Cflat)                                # free contiguous reshape

    # Batch-chunk grid: chunks are fully independent -> "parallel"
    # (shards across v7x's two TensorCores when B > chunk size).
    bb = B if B <= 8 else 8
    Bp = ((B + bb - 1) // bb) * bb
    if Bp != B:
        pad = ((0, Bp - B), (0, 0), (0, 0))
        inputs = jnp.pad(inputs, pad)
        xres = jnp.pad(xres, pad)
    nb = Bp // bb

    kernel = functools.partial(_ex_lstm_kernel, n_layers=n_layers, L=L, H=H,
                               Dmax=Dmax, Cflat=Cflat)
    out = pl.pallas_call(
        kernel,
        out_shape=jax.ShapeDtypeStruct((Bp, L, Cflat), jnp.float32),
        grid_spec=pltpu.PrefetchScalarGridSpec(
            num_scalar_prefetch=0,
            grid=(nb,),
            in_specs=[
                pl.BlockSpec((bb, L, Dmax), lambda i: (i, 0, 0)),
                pl.BlockSpec((n_layers, Dmax, 4 * H), lambda i: (0, 0, 0)),
                pl.BlockSpec((n_layers, H, 4 * H), lambda i: (0, 0, 0)),
                pl.BlockSpec((n_layers, 1, 4 * H), lambda i: (0, 0, 0)),
                pl.BlockSpec((H, Cflat), lambda i: (0, 0)),
                pl.BlockSpec((1, Cflat), lambda i: (0, 0)),
                pl.BlockSpec((bb, L, Cflat), lambda i: (i, 0, 0)),
            ],
            out_specs=pl.BlockSpec((bb, L, Cflat), lambda i: (i, 0, 0)),
            scratch_shapes=[
                pltpu.VMEM((L, bb, Dmax), jnp.float32),    # inter-layer activations
                pltpu.VMEM((L, bb, 4 * H), jnp.float32),   # hoisted input projections
            ],
        ),
        compiler_params=pltpu.CompilerParams(
            dimension_semantics=("parallel",)),
    )(inputs, Wx, Wh, Bias, wp, bp, xres)

    return out[:B].reshape(B, L, c_in, ex_c_out)


# ----------------------------------------------------------------------------
# Pure-JAX reference (same math, lax.scan), used to verify the kernel.
# ----------------------------------------------------------------------------
def ex_lstm_reference(X, X_ex, params):
    B, L, c_in, ex_c_out = X.shape
    h_seq = jnp.concatenate([X.mean(axis=-1), X_ex], axis=-1)
    for (wih, whh, b) in params["lstm"]:
        H = whh.shape[0]

        def step(carry, x_t):
            h, c = carry
            gates = x_t @ wih + h @ whh + b[0]
            i = jax.nn.sigmoid(gates[:, 0 * H:1 * H])
            f = jax.nn.sigmoid(gates[:, 1 * H:2 * H])
            g = jnp.tanh(gates[:, 2 * H:3 * H])
            o = jax.nn.sigmoid(gates[:, 3 * H:4 * H])
            c = f * c + i * g
            h = o * jnp.tanh(c)
            return (h, c), h

        init = (jnp.zeros((B, H), jnp.float32), jnp.zeros((B, H), jnp.float32))
        _, outs = jax.lax.scan(step, init, jnp.swapaxes(h_seq, 0, 1))
        h_seq = jnp.swapaxes(outs, 0, 1)
    s = jnp.maximum(h_seq, 0.0) @ params["fc_w"] + params["fc_b"][0]
    y = s[..., None] * params["pw"][0] + params["pb"][0]
    return y + X


def make_params(key, c_in, ex_dim, d_model, n_layers, ex_c_out, scale=0.1):
    params = {"lstm": []}
    d_in = c_in + ex_dim
    for layer in range(n_layers):
        key, k1, k2, k3 = jax.random.split(key, 4)
        din = d_in if layer == 0 else d_model
        wih = scale * jax.random.normal(k1, (din, 4 * d_model), jnp.float32)
        whh = scale * jax.random.normal(k2, (d_model, 4 * d_model), jnp.float32)
        b = scale * jax.random.normal(k3, (1, 4 * d_model), jnp.float32)
        params["lstm"].append((wih, whh, b))
    key, k1, k2, k3, k4 = jax.random.split(key, 5)
    params["fc_w"] = scale * jax.random.normal(k1, (d_model, c_in), jnp.float32)
    params["fc_b"] = scale * jax.random.normal(k2, (1, c_in), jnp.float32)
    params["pw"] = scale * jax.random.normal(k3, (1, ex_c_out), jnp.float32)
    params["pb"] = scale * jax.random.normal(k4, (1, ex_c_out), jnp.float32)
    return params


if __name__ == "__main__":
    # configs: c_in=4, ex_dim=3, d_model=32, n_layers=2, ex_c_out=5
    B, L, c_in, ex_dim, d_model, n_layers, ex_c_out = 2, 8, 4, 3, 32, 2, 5

    key = jax.random.PRNGKey(0)
    kx, kex, kp = jax.random.split(key, 3)
    X = jax.random.normal(kx, (B, L, c_in, ex_c_out), jnp.float32)
    X_ex = jax.random.normal(kex, (B, L, ex_dim), jnp.float32)
    params = make_params(kp, c_in, ex_dim, d_model, n_layers, ex_c_out)

    out = jax.block_until_ready(ex_lstm_forward(X, X_ex, params))
    ref = jax.block_until_ready(ex_lstm_reference(X, X_ex, params))

    assert out.shape == (B, L, c_in, ex_c_out)
    assert jnp.allclose(out, ref, atol=1e-4, rtol=1e-4), "mismatch vs reference"

    print("KERNEL_OK")
</pallas_src>

<mosaic_0001>
module attributes {stable_mosaic.version = 11 : i64} {
  func.func @_ex_lstm_kernel(%arg0: i32, %arg1: memref<2x8x32xf32, #tpu.memory_space<vmem>>, %arg2: memref<2x32x128xf32, #tpu.memory_space<vmem>>, %arg3: memref<2x32x128xf32, #tpu.memory_space<vmem>>, %arg4: memref<2x1x128xf32, #tpu.memory_space<vmem>>, %arg5: memref<32x20xf32, #tpu.memory_space<vmem>>, %arg6: memref<1x20xf32, #tpu.memory_space<vmem>>, %arg7: memref<2x8x20xf32, #tpu.memory_space<vmem>>, %arg8: memref<2x8x20xf32, #tpu.memory_space<vmem>>, %arg9: memref<8x2x32xf32, #tpu.memory_space<vmem>>, %arg10: memref<8x2x128xf32, #tpu.memory_space<vmem>>) attributes {dimension_semantics = [#tpu.dimension_semantics<parallel>], iteration_bounds = array<i64: 1>, scalar_prefetch = 0 : i64, scratch_operands = 2 : i64, tpu.core_type = #tpu.core_type<tc>, window_params = [{transform_indices = @transform_0, window_bounds = array<i64: 2, 8, 32>}, {pipeline_mode = #tpu.pipeline_mode<synchronous>, transform_indices = @transform_1, window_bounds = array<i64: 2, 32, 128>}, {pipeline_mode = #tpu.pipeline_mode<synchronous>, transform_indices = @transform_2, window_bounds = array<i64: 2, 32, 128>}, {pipeline_mode = #tpu.pipeline_mode<synchronous>, transform_indices = @transform_3, window_bounds = array<i64: 2, 1, 128>}, {pipeline_mode = #tpu.pipeline_mode<synchronous>, transform_indices = @transform_4, window_bounds = array<i64: 32, 20>}, {pipeline_mode = #tpu.pipeline_mode<synchronous>, transform_indices = @transform_5, window_bounds = array<i64: 1, 20>}, {transform_indices = @transform_6, window_bounds = array<i64: 2, 8, 20>}, {transform_indices = @transform_7, window_bounds = array<i64: 2, 8, 20>}]} {
    %c0 = arith.constant 0 : index
    %c0_0 = arith.constant 0 : index
    %c0_1 = arith.constant 0 : index
    %0 = vector.load %arg1[%c0, %c0_0, %c0_1] : memref<2x8x32xf32, #tpu.memory_space<vmem>>, vector<2x8x32xf32>
    %1 = vector.extract_strided_slice %0 {offsets = [0, 0, 0], sizes = [2, 1, 32], strides = [1, 1, 1]} : vector<2x8x32xf32> to vector<2x1x32xf32>
    %2 = vector.shape_cast %1 : vector<2x1x32xf32> to vector<2x32xf32>
    %c0_2 = arith.constant 0 : index
    %c0_3 = arith.constant 0 : index
    %c0_4 = arith.constant 0 : index
    %3 = vector.load %arg9[%c0_2, %c0_3, %c0_4] : memref<8x2x32xf32, #tpu.memory_space<vmem>>, vector<1x2x32xf32>
    %4 = vector.shape_cast %3 : vector<1x2x32xf32> to vector<2x32xf32>
    %5 = vector.shape_cast %2 : vector<2x32xf32> to vector<1x2x32xf32>
    tpu.vector_store %arg9[%c0_2, %c0_3, %c0_4], %5 {strides = array<i32>} : memref<8x2x32xf32, #tpu.memory_space<vmem>>, vector<1x2x32xf32>,
    %6 = vector.extract_strided_slice %0 {offsets = [0, 1, 0], sizes = [2, 1, 32], strides = [1, 1, 1]} : vector<2x8x32xf32> to vector<2x1x32xf32>
    %7 = vector.shape_cast %6 : vector<2x1x32xf32> to vector<2x32xf32>
    %c1 = arith.constant 1 : index
    %c0_5 = arith.constant 0 : index
    %c0_6 = arith.constant 0 : index
    %8 = vector.load %arg9[%c1, %c0_5, %c0_6] : memref<8x2x32xf32, #tpu.memory_space<vmem>>, vector<1x2x32xf32>
    %9 = vector.shape_cast %8 : vector<1x2x32xf32> to vector<2x32xf32>
    %10 = vector.shape_cast %7 : vector<2x32xf32> to vector<1x2x32xf32>
    tpu.vector_store %arg9[%c1, %c0_5, %c0_6], %10 {strides = array<i32>} : memref<8x2x32xf32, #tpu.memory_space<vmem>>, vector<1x2x32xf32>,
    %11 = vector.extract_strided_slice %0 {offsets = [0, 2, 0], sizes = [2, 1, 32], strides = [1, 1, 1]} : vector<2x8x32xf32> to vector<2x1x32xf32>
    %12 = vector.shape_cast %11 : vector<2x1x32xf32> to vector<2x32xf32>
    %c2 = arith.constant 2 : index
    %c0_7 = arith.constant 0 : index
    %c0_8 = arith.constant 0 : index
    %13 = vector.load %arg9[%c2, %c0_7, %c0_8] : memref<8x2x32xf32, #tpu.memory_space<vmem>>, vector<1x2x32xf32>
    %14 = vector.shape_cast %13 : vector<1x2x32xf32> to vector<2x32xf32>
    %15 = vector.shape_cast %12 : vector<2x32xf32> to vector<1x2x32xf32>
    tpu.vector_store %arg9[%c2, %c0_7, %c0_8], %15 {strides = array<i32>} : memref<8x2x32xf32, #tpu.memory_space<vmem>>, vector<1x2x32xf32>,
    %16 = vector.extract_strided_slice %0 {offsets = [0, 3, 0], sizes = [2, 1, 32], strides = [1, 1, 1]} : vector<2x8x32xf32> to vector<2x1x32xf32>
    %17 = vector.shape_cast %16 : vector<2x1x32xf32> to vector<2x32xf32>
    %c3 = arith.constant 3 : index
    %c0_9 = arith.constant 0 : index
    %c0_10 = arith.constant 0 : index
    %18 = vector.load %arg9[%c3, %c0_9, %c0_10] : memref<8x2x32xf32, #tpu.memory_space<vmem>>, vector<1x2x32xf32>
    %19 = vector.shape_cast %18 : vector<1x2x32xf32> to vector<2x32xf32>
    %20 = vector.shape_cast %17 : vector<2x32xf32> to vector<1x2x32xf32>
    tpu.vector_store %arg9[%c3, %c0_9, %c0_10], %20 {strides = array<i32>} : memref<8x2x32xf32, #tpu.memory_space<vmem>>, vector<1x2x32xf32>,
    %21 = vector.extract_strided_slice %0 {offsets = [0, 4, 0], sizes = [2, 1, 32], strides = [1, 1, 1]} : vector<2x8x32xf32> to vector<2x1x32xf32>
    %22 = vector.shape_cast %21 : vector<2x1x32xf32> to vector<2x32xf32>
    %c4 = arith.constant 4 : index
    %c0_11 = arith.constant 0 : index
    %c0_12 = arith.constant 0 : index
    %23 = vector.load %arg9[%c4, %c0_11, %c0_12] : memref<8x2x32xf32, #tpu.memory_space<vmem>>, vector<1x2x32xf32>
    %24 = vector.shape_cast %23 : vector<1x2x32xf32> to vector<2x32xf32>
    %25 = vector.shape_cast %22 : vector<2x32xf32> to vector<1x2x32xf32>
    tpu.vector_store %arg9[%c4, %c0_11, %c0_12], %25 {strides = array<i32>} : memref<8x2x32xf32, #tpu.memory_space<vmem>>, vector<1x2x32xf32>,
    %26 = vector.extract_strided_slice %0 {offsets = [0, 5, 0], sizes = [2, 1, 32], strides = [1, 1, 1]} : vector<2x8x32xf32> to vector<2x1x32xf32>
    %27 = vector.shape_cast %26 : vector<2x1x32xf32> to vector<2x32xf32>
    %c5 = arith.constant 5 : index
    %c0_13 = arith.constant 0 : index
    %c0_14 = arith.constant 0 : index
    %28 = vector.load %arg9[%c5, %c0_13, %c0_14] : memref<8x2x32xf32, #tpu.memory_space<vmem>>, vector<1x2x32xf32>
    %29 = vector.shape_cast %28 : vector<1x2x32xf32> to vector<2x32xf32>
    %30 = vector.shape_cast %27 : vector<2x32xf32> to vector<1x2x32xf32>
    tpu.vector_store %arg9[%c5, %c0_13, %c0_14], %30 {strides = array<i32>} : memref<8x2x32xf32, #tpu.memory_space<vmem>>, vector<1x2x32xf32>,
    %31 = vector.extract_strided_slice %0 {offsets = [0, 6, 0], sizes = [2, 1, 32], strides = [1, 1, 1]} : vector<2x8x32xf32> to vector<2x1x32xf32>
    %32 = vector.shape_cast %31 : vector<2x1x32xf32> to vector<2x32xf32>
    %c6 = arith.constant 6 : index
    %c0_15 = arith.constant 0 : index
    %c0_16 = arith.constant 0 : index
    %33 = vector.load %arg9[%c6, %c0_15, %c0_16] : memref<8x2x32xf32, #tpu.memory_space<vmem>>, vector<1x2x32xf32>
    %34 = vector.shape_cast %33 : vector<1x2x32xf32> to vector<2x32xf32>
    %35 = vector.shape_cast %32 : vector<2x32xf32> to vector<1x2x32xf32>
    tpu.vector_store %arg9[%c6, %c0_15, %c0_16], %35 {strides = array<i32>} : memref<8x2x32xf32, #tpu.memory_space<vmem>>, vector<1x2x32xf32>,
    %36 = vector.extract_strided_slice %0 {offsets = [0, 7, 0], sizes = [2, 1, 32], strides = [1, 1, 1]} : vector<2x8x32xf32> to vector<2x1x32xf32>
    %37 = vector.shape_cast %36 : vector<2x1x32xf32> to vector<2x32xf32>
    %c7 = arith.constant 7 : index
    %c0_17 = arith.constant 0 : index
    %c0_18 = arith.constant 0 : index
    %38 = vector.load %arg9[%c7, %c0_17, %c0_18] : memref<8x2x32xf32, #tpu.memory_space<vmem>>, vector<1x2x32xf32>
    %39 = vector.shape_cast %38 : vector<1x2x32xf32> to vector<2x32xf32>
    %40 = vector.shape_cast %37 : vector<2x32xf32> to vector<1x2x32xf32>
    tpu.vector_store %arg9[%c7, %c0_17, %c0_18], %40 {strides = array<i32>} : memref<8x2x32xf32, #tpu.memory_space<vmem>>, vector<1x2x32xf32>,
    %c0_19 = arith.constant 0 : index
    %c0_20 = arith.constant 0 : index
    %c0_21 = arith.constant 0 : index
    %41 = vector.load %arg2[%c0_19, %c0_20, %c0_21] : memref<2x32x128xf32, #tpu.memory_space<vmem>>, vector<1x32x128xf32>
    %42 = vector.shape_cast %41 : vector<1x32x128xf32> to vector<32x128xf32>
    %c0_22 = arith.constant 0 : index
    %c0_23 = arith.constant 0 : index
    %c0_24 = arith.constant 0 : index
    %43 = vector.load %arg3[%c0_22, %c0_23, %c0_24] : memref<2x32x128xf32, #tpu.memory_space<vmem>>, vector<1x32x128xf32>
    %44 = vector.shape_cast %43 : vector<1x32x128xf32> to vector<32x128xf32>
    %c0_25 = arith.constant 0 : index
    %c0_26 = arith.constant 0 : index
    %c0_27 = arith.constant 0 : index
    %45 = vector.load %arg4[%c0_25, %c0_26, %c0_27] : memref<2x1x128xf32, #tpu.memory_space<vmem>>, vector<1x1x128xf32>
    %46 = vector.shape_cast %45 : vector<1x1x128xf32> to vector<1x128xf32>
    %47 = vector.shape_cast %46 : vector<1x128xf32> to vector<1x128xf32>
    %48 = vector.broadcast %47 : vector<1x128xf32> to vector<2x128xf32>
    %c0_28 = arith.constant 0 : index
    %c0_29 = arith.constant 0 : index
    %c0_30 = arith.constant 0 : index
    %49 = vector.load %arg9[%c0_28, %c0_29, %c0_30] : memref<8x2x32xf32, #tpu.memory_space<vmem>>, vector<1x2x32xf32>
    %50 = vector.shape_cast %49 : vector<1x2x32xf32> to vector<2x32xf32>
    %cst = arith.constant dense<0.000000e+00> : vector<2x128xf32>
    %51 = tpu.matmul %50, %42, %cst {dimension_numbers = #tpu.dot_dimension_numbers<[1], [0], [0], [1], [0, 0, 1, 1], [], []>} : vector<2x32xf32>, vector<32x128xf32>, vector<2x128xf32> -> vector<2x128xf32>
    %52 = arith.addf %51, %48 : vector<2x128xf32>
    %c0_31 = arith.constant 0 : index
    %c0_32 = arith.constant 0 : index
    %c0_33 = arith.constant 0 : index
    %53 = vector.load %arg10[%c0_31, %c0_32, %c0_33] : memref<8x2x128xf32, #tpu.memory_space<vmem>>, vector<1x2x128xf32>
    %54 = vector.shape_cast %53 : vector<1x2x128xf32> to vector<2x128xf32>
    %55 = vector.shape_cast %52 : vector<2x128xf32> to vector<1x2x128xf32>
    tpu.vector_store %arg10[%c0_31, %c0_32, %c0_33], %55 {strides = array<i32>} : memref<8x2x128xf32, #tpu.memory_space<vmem>>, vector<1x2x128xf32>,
    %c1_34 = arith.constant 1 : index
    %c0_35 = arith.constant 0 : index
    %c0_36 = arith.constant 0 : index
    %56 = vector.load %arg9[%c1_34, %c0_35, %c0_36] : memref<8x2x32xf32, #tpu.memory_space<vmem>>, vector<1x2x32xf32>
    %57 = vector.shape_cast %56 : vector<1x2x32xf32> to vector<2x32xf32>
    %cst_37 = arith.constant dense<0.000000e+00> : vector<2x128xf32>
    %58 = tpu.matmul %57, %42, %cst_37 {dimension_numbers = #tpu.dot_dimension_numbers<[1], [0], [0], [1], [0, 0, 1, 1], [], []>} : vector<2x32xf32>, vector<32x128xf32>, vector<2x128xf32> -> vector<2x128xf32>
    %59 = arith.addf %58, %48 : vector<2x128xf32>
    %c1_38 = arith.constant 1 : index
    %c0_39 = arith.constant 0 : index
    %c0_40 = arith.constant 0 : index
    %60 = vector.load %arg10[%c1_38, %c0_39, %c0_40] : memref<8x2x128xf32, #tpu.memory_space<vmem>>, vector<1x2x128xf32>
    %61 = vector.shape_cast %60 : vector<1x2x128xf32> to vector<2x128xf32>
    %62 = vector.shape_cast %59 : vector<2x128xf32> to vector<1x2x128xf32>
    tpu.vector_store %arg10[%c1_38, %c0_39, %c0_40], %62 {strides = array<i32>} : memref<8x2x128xf32, #tpu.memory_space<vmem>>, vector<1x2x128xf32>,
    %c2_41 = arith.constant 2 : index
    %c0_42 = arith.constant 0 : index
    %c0_43 = arith.constant 0 : index
    %63 = vector.load %arg9[%c2_41, %c0_42, %c0_43] : memref<8x2x32xf32, #tpu.memory_space<vmem>>, vector<1x2x32xf32>
    %64 = vector.shape_cast %63 : vector<1x2x32xf32> to vector<2x32xf32>
    %cst_44 = arith.constant dense<0.000000e+00> : vector<2x128xf32>
    %65 = tpu.matmul %64, %42, %cst_44 {dimension_numbers = #tpu.dot_dimension_numbers<[1], [0], [0], [1], [0, 0, 1, 1], [], []>} : vector<2x32xf32>, vector<32x128xf32>, vector<2x128xf32> -> vector<2x128xf32>
    %66 = arith.addf %65, %48 : vector<2x128xf32>
    %c2_45 = arith.constant 2 : index
    %c0_46 = arith.constant 0 : index
    %c0_47 = arith.constant 0 : index
    %67 = vector.load %arg10[%c2_45, %c0_46, %c0_47] : memref<8x2x128xf32, #tpu.memory_space<vmem>>, vector<1x2x128xf32>
    %68 = vector.shape_cast %67 : vector<1x2x128xf32> to vector<2x128xf32>
    %69 = vector.shape_cast %66 : vector<2x128xf32> to vector<1x2x128xf32>
    tpu.vector_store %arg10[%c2_45, %c0_46, %c0_47], %69 {strides = array<i32>} : memref<8x2x128xf32, #tpu.memory_space<vmem>>, vector<1x2x128xf32>,
    %c3_48 = arith.constant 3 : index
    %c0_49 = arith.constant 0 : index
    %c0_50 = arith.constant 0 : index
    %70 = vector.load %arg9[%c3_48, %c0_49, %c0_50] : memref<8x2x32xf32, #tpu.memory_space<vmem>>, vector<1x2x32xf32>
    %71 = vector.shape_cast %70 : vector<1x2x32xf32> to vector<2x32xf32>
    %cst_51 = arith.constant dense<0.000000e+00> : vector<2x128xf32>
    %72 = tpu.matmul %71, %42, %cst_51 {dimension_numbers = #tpu.dot_dimension_numbers<[1], [0], [0], [1], [0, 0, 1, 1], [], []>} : vector<2x32xf32>, vector<32x128xf32>, vector<2x128xf32> -> vector<2x128xf32>
    %73 = arith.addf %72, %48 : vector<2x128xf32>
    %c3_52 = arith.constant 3 : index
    %c0_53 = arith.constant 0 : index
    %c0_54 = arith.constant 0 : index
    %74 = vector.load %arg10[%c3_52, %c0_53, %c0_54] : memref<8x2x128xf32, #tpu.memory_space<vmem>>, vector<1x2x128xf32>
    %75 = vector.shape_cast %74 : vector<1x2x128xf32> to vector<2x128xf32>
    %76 = vector.shape_cast %73 : vector<2x128xf32> to vector<1x2x128xf32>
    tpu.vector_store %arg10[%c3_52, %c0_53, %c0_54], %76 {strides = array<i32>} : memref<8x2x128xf32, #tpu.memory_space<vmem>>, vector<1x2x128xf32>,
    %c4_55 = arith.constant 4 : index
    %c0_56 = arith.constant 0 : index
    %c0_57 = arith.constant 0 : index
    %77 = vector.load %arg9[%c4_55, %c0_56, %c0_57] : memref<8x2x32xf32, #tpu.memory_space<vmem>>, vector<1x2x32xf32>
    %78 = vector.shape_cast %77 : vector<1x2x32xf32> to vector<2x32xf32>
    %cst_58 = arith.constant dense<0.000000e+00> : vector<2x128xf32>
    %79 = tpu.matmul %78, %42, %cst_58 {dimension_numbers = #tpu.dot_dimension_numbers<[1], [0], [0], [1], [0, 0, 1, 1], [], []>} : vector<2x32xf32>, vector<32x128xf32>, vector<2x128xf32> -> vector<2x128xf32>
    %80 = arith.addf %79, %48 : vector<2x128xf32>
    %c4_59 = arith.constant 4 : index
    %c0_60 = arith.constant 0 : index
    %c0_61 = arith.constant 0 : index
    %81 = vector.load %arg10[%c4_59, %c0_60, %c0_61] : memref<8x2x128xf32, #tpu.memory_space<vmem>>, vector<1x2x128xf32>
    %82 = vector.shape_cast %81 : vector<1x2x128xf32> to vector<2x128xf32>
    %83 = vector.shape_cast %80 : vector<2x128xf32> to vector<1x2x128xf32>
    tpu.vector_store %arg10[%c4_59, %c0_60, %c0_61], %83 {strides = array<i32>} : memref<8x2x128xf32, #tpu.memory_space<vmem>>, vector<1x2x128xf32>,
    %c5_62 = arith.constant 5 : index
    %c0_63 = arith.constant 0 : index
    %c0_64 = arith.constant 0 : index
    %84 = vector.load %arg9[%c5_62, %c0_63, %c0_64] : memref<8x2x32xf32, #tpu.memory_space<vmem>>, vector<1x2x32xf32>
    %85 = vector.shape_cast %84 : vector<1x2x32xf32> to vector<2x32xf32>
    %cst_65 = arith.constant dense<0.000000e+00> : vector<2x128xf32>
    %86 = tpu.matmul %85, %42, %cst_65 {dimension_numbers = #tpu.dot_dimension_numbers<[1], [0], [0], [1], [0, 0, 1, 1], [], []>} : vector<2x32xf32>, vector<32x128xf32>, vector<2x128xf32> -> vector<2x128xf32>
    %87 = arith.addf %86, %48 : vector<2x128xf32>
    %c5_66 = arith.constant 5 : index
    %c0_67 = arith.constant 0 : index
    %c0_68 = arith.constant 0 : index
    %88 = vector.load %arg10[%c5_66, %c0_67, %c0_68] : memref<8x2x128xf32, #tpu.memory_space<vmem>>, vector<1x2x128xf32>
    %89 = vector.shape_cast %88 : vector<1x2x128xf32> to vector<2x128xf32>
    %90 = vector.shape_cast %87 : vector<2x128xf32> to vector<1x2x128xf32>
    tpu.vector_store %arg10[%c5_66, %c0_67, %c0_68], %90 {strides = array<i32>} : memref<8x2x128xf32, #tpu.memory_space<vmem>>, vector<1x2x128xf32>,
    %c6_69 = arith.constant 6 : index
    %c0_70 = arith.constant 0 : index
    %c0_71 = arith.constant 0 : index
    %91 = vector.load %arg9[%c6_69, %c0_70, %c0_71] : memref<8x2x32xf32, #tpu.memory_space<vmem>>, vector<1x2x32xf32>
    %92 = vector.shape_cast %91 : vector<1x2x32xf32> to vector<2x32xf32>
    %cst_72 = arith.constant dense<0.000000e+00> : vector<2x128xf32>
    %93 = tpu.matmul %92, %42, %cst_72 {dimension_numbers = #tpu.dot_dimension_numbers<[1], [0], [0], [1], [0, 0, 1, 1], [], []>} : vector<2x32xf32>, vector<32x128xf32>, vector<2x128xf32> -> vector<2x128xf32>
    %94 = arith.addf %93, %48 : vector<2x128xf32>
    %c6_73 = arith.constant 6 : index
    %c0_74 = arith.constant 0 : index
    %c0_75 = arith.constant 0 : index
    %95 = vector.load %arg10[%c6_73, %c0_74, %c0_75] : memref<8x2x128xf32, #tpu.memory_space<vmem>>, vector<1x2x128xf32>
    %96 = vector.shape_cast %95 : vector<1x2x128xf32> to vector<2x128xf32>
    %97 = vector.shape_cast %94 : vector<2x128xf32> to vector<1x2x128xf32>
    tpu.vector_store %arg10[%c6_73, %c0_74, %c0_75], %97 {strides = array<i32>} : memref<8x2x128xf32, #tpu.memory_space<vmem>>, vector<1x2x128xf32>,
    %c7_76 = arith.constant 7 : index
    %c0_77 = arith.constant 0 : index
    %c0_78 = arith.constant 0 : index
    %98 = vector.load %arg9[%c7_76, %c0_77, %c0_78] : memref<8x2x32xf32, #tpu.memory_space<vmem>>, vector<1x2x32xf32>
    %99 = vector.shape_cast %98 : vector<1x2x32xf32> to vector<2x32xf32>
    %cst_79 = arith.constant dense<0.000000e+00> : vector<2x128xf32>
    %100 = tpu.matmul %99, %42, %cst_79 {dimension_numbers = #tpu.dot_dimension_numbers<[1], [0], [0], [1], [0, 0, 1, 1], [], []>} : vector<2x32xf32>, vector<32x128xf32>, vector<2x128xf32> -> vector<2x128xf32>
    %101 = arith.addf %100, %48 : vector<2x128xf32>
    %c7_80 = arith.constant 7 : index
    %c0_81 = arith.constant 0 : index
    %c0_82 = arith.constant 0 : index
    %102 = vector.load %arg10[%c7_80, %c0_81, %c0_82] : memref<8x2x128xf32, #tpu.memory_space<vmem>>, vector<1x2x128xf32>
    %103 = vector.shape_cast %102 : vector<1x2x128xf32> to vector<2x128xf32>
    %104 = vector.shape_cast %101 : vector<2x128xf32> to vector<1x2x128xf32>
    tpu.vector_store %arg10[%c7_80, %c0_81, %c0_82], %104 {strides = array<i32>} : memref<8x2x128xf32, #tpu.memory_space<vmem>>, vector<1x2x128xf32>,
    %cst_83 = arith.constant 0.000000e+00 : f32
    %105 = vector.broadcast %cst_83 : f32 to vector<2x32xf32>
    %c0_i32 = arith.constant 0 : i32
    %106 = arith.index_cast %c0_i32 : i32 to index
    %c0_84 = arith.constant 0 : index
    %c0_85 = arith.constant 0 : index
    %107 = vector.load %arg10[%106, %c0_84, %c0_85] : memref<8x2x128xf32, #tpu.memory_space<vmem>>, vector<1x2x128xf32>
    %108 = vector.shape_cast %107 : vector<1x2x128xf32> to vector<2x128xf32>
    %cst_86 = arith.constant dense<0.000000e+00> : vector<2x128xf32>
    %109 = tpu.matmul %105, %44, %cst_86 {dimension_numbers = #tpu.dot_dimension_numbers<[1], [0], [0], [1], [0, 0, 1, 1], [], []>} : vector<2x32xf32>, vector<32x128xf32>, vector<2x128xf32> -> vector<2x128xf32>
    %110 = arith.addf %108, %109 : vector<2x128xf32>
    %111 = vector.extract_strided_slice %110 {offsets = [0, 0], sizes = [2, 32], strides = [1, 1]} : vector<2x128xf32> to vector<2x32xf32>
    %112 = arith.negf %111 : vector<2x32xf32>
    %113 = math.exp %112 : vector<2x32xf32>
    %cst_87 = arith.constant 1.000000e+00 : f32
    %114 = vector.broadcast %cst_87 : f32 to vector<2x32xf32>
    %115 = arith.addf %114, %113 : vector<2x32xf32>
    %116 = arith.divf %114, %115 : vector<2x32xf32>
    %117 = vector.extract_strided_slice %110 {offsets = [0, 32], sizes = [2, 32], strides = [1, 1]} : vector<2x128xf32> to vector<2x32xf32>
    %118 = arith.negf %117 : vector<2x32xf32>
    %119 = math.exp %118 : vector<2x32xf32>
    %cst_88 = arith.constant 1.000000e+00 : f32
    %120 = vector.broadcast %cst_88 : f32 to vector<2x32xf32>
    %121 = arith.addf %120, %119 : vector<2x32xf32>
    %122 = arith.divf %120, %121 : vector<2x32xf32>
    %123 = vector.extract_strided_slice %110 {offsets = [0, 64], sizes = [2, 32], strides = [1, 1]} : vector<2x128xf32> to vector<2x32xf32>
    %124 = math.tanh %123 : vector<2x32xf32>
    %125 = vector.extract_strided_slice %110 {offsets = [0, 96], sizes = [2, 32], strides = [1, 1]} : vector<2x128xf32> to vector<2x32xf32>
    %126 = arith.negf %125 : vector<2x32xf32>
    %127 = math.exp %126 : vector<2x32xf32>
    %cst_89 = arith.constant 1.000000e+00 : f32
    %128 = vector.broadcast %cst_89 : f32 to vector<2x32xf32>
    %129 = arith.addf %128, %127 : vector<2x32xf32>
    %130 = arith.divf %128, %129 : vector<2x32xf32>
    %131 = arith.mulf %122, %105 : vector<2x32xf32>
    %132 = arith.mulf %116, %124 : vector<2x32xf32>
    %133 = arith.addf %131, %132 : vector<2x32xf32>
    %134 = math.tanh %133 : vector<2x32xf32>
    %135 = arith.mulf %130, %134 : vector<2x32xf32>
    %136 = arith.index_cast %c0_i32 : i32 to index
    %c0_90 = arith.constant 0 : index
    %c0_91 = arith.constant 0 : index
    %137 = vector.load %arg9[%136, %c0_90, %c0_91] : memref<8x2x32xf32, #tpu.memory_space<vmem>>, vector<1x2x32xf32>
    %138 = vector.shape_cast %137 : vector<1x2x32xf32> to vector<2x32xf32>
    %139 = vector.shape_cast %135 : vector<2x32xf32> to vector<1x2x32xf32>
    tpu.vector_store %arg9[%136, %c0_90, %c0_91], %139 {strides = array<i32>} : memref<8x2x32xf32, #tpu.memory_space<vmem>>, vector<1x2x32xf32>,
    %c1_i32 = arith.constant 1 : i32
    %140 = arith.index_cast %c1_i32 : i32 to index
    %c0_92 = arith.constant 0 : index
    %c0_93 = arith.constant 0 : index
    %141 = vector.load %arg10[%140, %c0_92, %c0_93] : memref<8x2x128xf32, #tpu.memory_space<vmem>>, vector<1x2x128xf32>
    %142 = vector.shape_cast %141 : vector<1x2x128xf32> to vector<2x128xf32>
    %cst_94 = arith.constant dense<0.000000e+00> : vector<2x128xf32>
    %143 = tpu.matmul %135, %44, %cst_94 {dimension_numbers = #tpu.dot_dimension_numbers<[1], [0], [0], [1], [0, 0, 1, 1], [], []>} : vector<2x32xf32>, vector<32x128xf32>, vector<2x128xf32> -> vector<2x128xf32>
    %144 = arith.addf %142, %143 : vector<2x128xf32>
    %145 = vector.extract_strided_slice %144 {offsets = [0, 0], sizes = [2, 32], strides = [1, 1]} : vector<2x128xf32> to vector<2x32xf32>
    %146 = arith.negf %145 : vector<2x32xf32>
    %147 = math.exp %146 : vector<2x32xf32>
    %cst_95 = arith.constant 1.000000e+00 : f32
    %148 = vector.broadcast %cst_95 : f32 to vector<2x32xf32>
    %149 = arith.addf %148, %147 : vector<2x32xf32>
    %150 = arith.divf %148, %149 : vector<2x32xf32>
    %151 = vector.extract_strided_slice %144 {offsets = [0, 32], sizes = [2, 32], strides = [1, 1]} : vector<2x128xf32> to vector<2x32xf32>
    %152 = arith.negf %151 : vector<2x32xf32>
    %153 = math.exp %152 : vector<2x32xf32>
    %cst_96 = arith.constant 1.000000e+00 : f32
    %154 = vector.broadcast %cst_96 : f32 to vector<2x32xf32>
    %155 = arith.addf %154, %153 : vector<2x32xf32>
    %156 = arith.divf %154, %155 : vector<2x32xf32>
    %157 = vector.extract_strided_slice %144 {offsets = [0, 64], sizes = [2, 32], strides = [1, 1]} : vector<2x128xf32> to vector<2x32xf32>
    %158 = math.tanh %157 : vector<2x32xf32>
    %159 = vector.extract_strided_slice %144 {offsets = [0, 96], sizes = [2, 32], strides = [1, 1]} : vector<2x128xf32> to vector<2x32xf32>
    %160 = arith.negf %159 : vector<2x32xf32>
    %161 = math.exp %160 : vector<2x32xf32>
    %cst_97 = arith.constant 1.000000e+00 : f32
    %162 = vector.broadcast %cst_97 : f32 to vector<2x32xf32>
    %163 = arith.addf %162, %161 : vector<2x32xf32>
    %164 = arith.divf %162, %163 : vector<2x32xf32>
    %165 = arith.mulf %156, %133 : vector<2x32xf32>
    %166 = arith.mulf %150, %158 : vector<2x32xf32>
    %167 = arith.addf %165, %166 : vector<2x32xf32>
    %168 = math.tanh %167 : vector<2x32xf32>
    %169 = arith.mulf %164, %168 : vector<2x32xf32>
    %170 = arith.index_cast %c1_i32 : i32 to index
    %c0_98 = arith.constant 0 : index
    %c0_99 = arith.constant 0 : index
    %171 = vector.load %arg9[%170, %c0_98, %c0_99] : memref<8x2x32xf32, #tpu.memory_space<vmem>>, vector<1x2x32xf32>
    %172 = vector.shape_cast %171 : vector<1x2x32xf32> to vector<2x32xf32>
    %173 = vector.shape_cast %169 : vector<2x32xf32> to vector<1x2x32xf32>
    tpu.vector_store %arg9[%170, %c0_98, %c0_99], %173 {strides = array<i32>} : memref<8x2x32xf32, #tpu.memory_space<vmem>>, vector<1x2x32xf32>,
    %c2_i32 = arith.constant 2 : i32
    %174 = arith.index_cast %c2_i32 : i32 to index
    %c0_100 = arith.constant 0 : index
    %c0_101 = arith.constant 0 : index
    %175 = vector.load %arg10[%174, %c0_100, %c0_101] : memref<8x2x128xf32, #tpu.memory_space<vmem>>, vector<1x2x128xf32>
    %176 = vector.shape_cast %175 : vector<1x2x128xf32> to vector<2x128xf32>
    %cst_102 = arith.constant dense<0.000000e+00> : vector<2x128xf32>
    %177 = tpu.matmul %169, %44, %cst_102 {dimension_numbers = #tpu.dot_dimension_numbers<[1], [0], [0], [1], [0, 0, 1, 1], [], []>} : vector<2x32xf32>, vector<32x128xf32>, vector<2x128xf32> -> vector<2x128xf32>
    %178 = arith.addf %176, %177 : vector<2x128xf32>
    %179 = vector.extract_strided_slice %178 {offsets = [0, 0], sizes = [2, 32], strides = [1, 1]} : vector<2x128xf32> to vector<2x32xf32>
    %180 = arith.negf %179 : vector<2x32xf32>
    %181 = math.exp %180 : vector<2x32xf32>
    %cst_103 = arith.constant 1.000000e+00 : f32
    %182 = vector.broadcast %cst_103 : f32 to vector<2x32xf32>
    %183 = arith.addf %182, %181 : vector<2x32xf32>
    %184 = arith.divf %182, %183 : vector<2x32xf32>
    %185 = vector.extract_strided_slice %178 {offsets = [0, 32], sizes = [2, 32], strides = [1, 1]} : vector<2x128xf32> to vector<2x32xf32>
    %186 = arith.negf %185 : vector<2x32xf32>
    %187 = math.exp %186 : vector<2x32xf32>
    %cst_104 = arith.constant 1.000000e+00 : f32
    %188 = vector.broadcast %cst_104 : f32 to vector<2x32xf32>
    %189 = arith.addf %188, %187 : vector<2x32xf32>
    %190 = arith.divf %188, %189 : vector<2x32xf32>
    %191 = vector.extract_strided_slice %178 {offsets = [0, 64], sizes = [2, 32], strides = [1, 1]} : vector<2x128xf32> to vector<2x32xf32>
    %192 = math.tanh %191 : vector<2x32xf32>
    %193 = vector.extract_strided_slice %178 {offsets = [0, 96], sizes = [2, 32], strides = [1, 1]} : vector<2x128xf32> to vector<2x32xf32>
    %194 = arith.negf %193 : vector<2x32xf32>
    %195 = math.exp %194 : vector<2x32xf32>
    %cst_105 = arith.constant 1.000000e+00 : f32
    %196 = vector.broadcast %cst_105 : f32 to vector<2x32xf32>
    %197 = arith.addf %196, %195 : vector<2x32xf32>
    %198 = arith.divf %196, %197 : vector<2x32xf32>
    %199 = arith.mulf %190, %167 : vector<2x32xf32>
    %200 = arith.mulf %184, %192 : vector<2x32xf32>
    %201 = arith.addf %199, %200 : vector<2x32xf32>
    %202 = math.tanh %201 : vector<2x32xf32>
    %203 = arith.mulf %198, %202 : vector<2x32xf32>
    %204 = arith.index_cast %c2_i32 : i32 to index
    %c0_106 = arith.constant 0 : index
    %c0_107 = arith.constant 0 : index
    %205 = vector.load %arg9[%204, %c0_106, %c0_107] : memref<8x2x32xf32, #tpu.memory_space<vmem>>, vector<1x2x32xf32>
    %206 = vector.shape_cast %205 : vector<1x2x32xf32> to vector<2x32xf32>
    %207 = vector.shape_cast %203 : vector<2x32xf32> to vector<1x2x32xf32>
    tpu.vector_store %arg9[%204, %c0_106, %c0_107], %207 {strides = array<i32>} : memref<8x2x32xf32, #tpu.memory_space<vmem>>, vector<1x2x32xf32>,
    %c3_i32 = arith.constant 3 : i32
    %208 = arith.index_cast %c3_i32 : i32 to index
    %c0_108 = arith.constant 0 : index
    %c0_109 = arith.constant 0 : index
    %209 = vector.load %arg10[%208, %c0_108, %c0_109] : memref<8x2x128xf32, #tpu.memory_space<vmem>>, vector<1x2x128xf32>
    %210 = vector.shape_cast %209 : vector<1x2x128xf32> to vector<2x128xf32>
    %cst_110 = arith.constant dense<0.000000e+00> : vector<2x128xf32>
    %211 = tpu.matmul %203, %44, %cst_110 {dimension_numbers = #tpu.dot_dimension_numbers<[1], [0], [0], [1], [0, 0, 1, 1], [], []>} : vector<2x32xf32>, vector<32x128xf32>, vector<2x128xf32> -> vector<2x128xf32>
    %212 = arith.addf %210, %211 : vector<2x128xf32>
    %213 = vector.extract_strided_slice %212 {offsets = [0, 0], sizes = [2, 32], strides = [1, 1]} : vector<2x128xf32> to vector<2x32xf32>
    %214 = arith.negf %213 : vector<2x32xf32>
    %215 = math.exp %214 : vector<2x32xf32>
    %cst_111 = arith.constant 1.000000e+00 : f32
    %216 = vector.broadcast %cst_111 : f32 to vector<2x32xf32>
    %217 = arith.addf %216, %215 : vector<2x32xf32>
    %218 = arith.divf %216, %217 : vector<2x32xf32>
    %219 = vector.extract_strided_slice %212 {offsets = [0, 32], sizes = [2, 32], strides = [1, 1]} : vector<2x128xf32> to vector<2x32xf32>
    %220 = arith.negf %219 : vector<2x32xf32>
    %221 = math.exp %220 : vector<2x32xf32>
    %cst_112 = arith.constant 1.000000e+00 : f32
    %222 = vector.broadcast %cst_112 : f32 to vector<2x32xf32>
    %223 = arith.addf %222, %221 : vector<2x32xf32>
    %224 = arith.divf %222, %223 : vector<2x32xf32>
    %225 = vector.extract_strided_slice %212 {offsets = [0, 64], sizes = [2, 32], strides = [1, 1]} : vector<2x128xf32> to vector<2x32xf32>
    %226 = math.tanh %225 : vector<2x32xf32>
    %227 = vector.extract_strided_slice %212 {offsets = [0, 96], sizes = [2, 32], strides = [1, 1]} : vector<2x128xf32> to vector<2x32xf32>
    %228 = arith.negf %227 : vector<2x32xf32>
    %229 = math.exp %228 : vector<2x32xf32>
    %cst_113 = arith.constant 1.000000e+00 : f32
    %230 = vector.broadcast %cst_113 : f32 to vector<2x32xf32>
    %231 = arith.addf %230, %229 : vector<2x32xf32>
    %232 = arith.divf %230, %231 : vector<2x32xf32>
    %233 = arith.mulf %224, %201 : vector<2x32xf32>
    %234 = arith.mulf %218, %226 : vector<2x32xf32>
    %235 = arith.addf %233, %234 : vector<2x32xf32>
    %236 = math.tanh %235 : vector<2x32xf32>
    %237 = arith.mulf %232, %236 : vector<2x32xf32>
    %238 = arith.index_cast %c3_i32 : i32 to index
    %c0_114 = arith.constant 0 : index
    %c0_115 = arith.constant 0 : index
    %239 = vector.load %arg9[%238, %c0_114, %c0_115] : memref<8x2x32xf32, #tpu.memory_space<vmem>>, vector<1x2x32xf32>
    %240 = vector.shape_cast %239 : vector<1x2x32xf32> to vector<2x32xf32>
    %241 = vector.shape_cast %237 : vector<2x32xf32> to vector<1x2x32xf32>
    tpu.vector_store %arg9[%238, %c0_114, %c0_115], %241 {strides = array<i32>} : memref<8x2x32xf32, #tpu.memory_space<vmem>>, vector<1x2x32xf32>,
    %c4_i32 = arith.constant 4 : i32
    %242 = arith.index_cast %c4_i32 : i32 to index
    %c0_116 = arith.constant 0 : index
    %c0_117 = arith.constant 0 : index
    %243 = vector.load %arg10[%242, %c0_116, %c0_117] : memref<8x2x128xf32, #tpu.memory_space<vmem>>, vector<1x2x128xf32>
    %244 = vector.shape_cast %243 : vector<1x2x128xf32> to vector<2x128xf32>
    %cst_118 = arith.constant dense<0.000000e+00> : vector<2x128xf32>
    %245 = tpu.matmul %237, %44, %cst_118 {dimension_numbers = #tpu.dot_dimension_numbers<[1], [0], [0], [1], [0, 0, 1, 1], [], []>} : vector<2x32xf32>, vector<32x128xf32>, vector<2x128xf32> -> vector<2x128xf32>
    %246 = arith.addf %244, %245 : vector<2x128xf32>
    %247 = vector.extract_strided_slice %246 {offsets = [0, 0], sizes = [2, 32], strides = [1, 1]} : vector<2x128xf32> to vector<2x32xf32>
    %248 = arith.negf %247 : vector<2x32xf32>
    %249 = math.exp %248 : vector<2x32xf32>
    %cst_119 = arith.constant 1.000000e+00 : f32
    %250 = vector.broadcast %cst_119 : f32 to vector<2x32xf32>
    %251 = arith.addf %250, %249 : vector<2x32xf32>
    %252 = arith.divf %250, %251 : vector<2x32xf32>
    %253 = vector.extract_strided_slice %246 {offsets = [0, 32], sizes = [2, 32], strides = [1, 1]} : vector<2x128xf32> to vector<2x32xf32>
    %254 = arith.negf %253 : vector<2x32xf32>
    %255 = math.exp %254 : vector<2x32xf32>
    %cst_120 = arith.constant 1.000000e+00 : f32
    %256 = vector.broadcast %cst_120 : f32 to vector<2x32xf32>
    %257 = arith.addf %256, %255 : vector<2x32xf32>
    %258 = arith.divf %256, %257 : vector<2x32xf32>
    %259 = vector.extract_strided_slice %246 {offsets = [0, 64], sizes = [2, 32], strides = [1, 1]} : vector<2x128xf32> to vector<2x32xf32>
    %260 = math.tanh %259 : vector<2x32xf32>
    %261 = vector.extract_strided_slice %246 {offsets = [0, 96], sizes = [2, 32], strides = [1, 1]} : vector<2x128xf32> to vector<2x32xf32>
    %262 = arith.negf %261 : vector<2x32xf32>
    %263 = math.exp %262 : vector<2x32xf32>
    %cst_121 = arith.constant 1.000000e+00 : f32
    %264 = vector.broadcast %cst_121 : f32 to vector<2x32xf32>
    %265 = arith.addf %264, %263 : vector<2x32xf32>
    %266 = arith.divf %264, %265 : vector<2x32xf32>
    %267 = arith.mulf %258, %235 : vector<2x32xf32>
    %268 = arith.mulf %252, %260 : vector<2x32xf32>
    %269 = arith.addf %267, %268 : vector<2x32xf32>
    %270 = math.tanh %269 : vector<2x32xf32>
    %271 = arith.mulf %266, %270 : vector<2x32xf32>
    %272 = arith.index_cast %c4_i32 : i32 to index
    %c0_122 = arith.constant 0 : index
    %c0_123 = arith.constant 0 : index
    %273 = vector.load %arg9[%272, %c0_122, %c0_123] : memref<8x2x32xf32, #tpu.memory_space<vmem>>, vector<1x2x32xf32>
    %274 = vector.shape_cast %273 : vector<1x2x32xf32> to vector<2x32xf32>
    %275 = vector.shape_cast %271 : vector<2x32xf32> to vector<1x2x32xf32>
    tpu.vector_store %arg9[%272, %c0_122, %c0_123], %275 {strides = array<i32>} : memref<8x2x32xf32, #tpu.memory_space<vmem>>, vector<1x2x32xf32>,
    %c5_i32 = arith.constant 5 : i32
    %276 = arith.index_cast %c5_i32 : i32 to index
    %c0_124 = arith.constant 0 : index
    %c0_125 = arith.constant 0 : index
    %277 = vector.load %arg10[%276, %c0_124, %c0_125] : memref<8x2x128xf32, #tpu.memory_space<vmem>>, vector<1x2x128xf32>
    %278 = vector.shape_cast %277 : vector<1x2x128xf32> to vector<2x128xf32>
    %cst_126 = arith.constant dense<0.000000e+00> : vector<2x128xf32>
    %279 = tpu.matmul %271, %44, %cst_126 {dimension_numbers = #tpu.dot_dimension_numbers<[1], [0], [0], [1], [0, 0, 1, 1], [], []>} : vector<2x32xf32>, vector<32x128xf32>, vector<2x128xf32> -> vector<2x128xf32>
    %280 = arith.addf %278, %279 : vector<2x128xf32>
    %281 = vector.extract_strided_slice %280 {offsets = [0, 0], sizes = [2, 32], strides = [1, 1]} : vector<2x128xf32> to vector<2x32xf32>
    %282 = arith.negf %281 : vector<2x32xf32>
    %283 = math.exp %282 : vector<2x32xf32>
    %cst_127 = arith.constant 1.000000e+00 : f32
    %284 = vector.broadcast %cst_127 : f32 to vector<2x32xf32>
    %285 = arith.addf %284, %283 : vector<2x32xf32>
    %286 = arith.divf %284, %285 : vector<2x32xf32>
    %287 = vector.extract_strided_slice %280 {offsets = [0, 32], sizes = [2, 32], strides = [1, 1]} : vector<2x128xf32> to vector<2x32xf32>
    %288 = arith.negf %287 : vector<2x32xf32>
    %289 = math.exp %288 : vector<2x32xf32>
    %cst_128 = arith.constant 1.000000e+00 : f32
    %290 = vector.broadcast %cst_128 : f32 to vector<2x32xf32>
    %291 = arith.addf %290, %289 : vector<2x32xf32>
    %292 = arith.divf %290, %291 : vector<2x32xf32>
    %293 = vector.extract_strided_slice %280 {offsets = [0, 64], sizes = [2, 32], strides = [1, 1]} : vector<2x128xf32> to vector<2x32xf32>
    %294 = math.tanh %293 : vector<2x32xf32>
    %295 = vector.extract_strided_slice %280 {offsets = [0, 96], sizes = [2, 32], strides = [1, 1]} : vector<2x128xf32> to vector<2x32xf32>
    %296 = arith.negf %295 : vector<2x32xf32>
    %297 = math.exp %296 : vector<2x32xf32>
    %cst_129 = arith.constant 1.000000e+00 : f32
    %298 = vector.broadcast %cst_129 : f32 to vector<2x32xf32>
    %299 = arith.addf %298, %297 : vector<2x32xf32>
    %300 = arith.divf %298, %299 : vector<2x32xf32>
    %301 = arith.mulf %292, %269 : vector<2x32xf32>
    %302 = arith.mulf %286, %294 : vector<2x32xf32>
    %303 = arith.addf %301, %302 : vector<2x32xf32>
    %304 = math.tanh %303 : vector<2x32xf32>
    %305 = arith.mulf %300, %304 : vector<2x32xf32>
    %306 = arith.index_cast %c5_i32 : i32 to index
    %c0_130 = arith.constant 0 : index
    %c0_131 = arith.constant 0 : index
    %307 = vector.load %arg9[%306, %c0_130, %c0_131] : memref<8x2x32xf32, #tpu.memory_space<vmem>>, vector<1x2x32xf32>
    %308 = vector.shape_cast %307 : vector<1x2x32xf32> to vector<2x32xf32>
    %309 = vector.shape_cast %305 : vector<2x32xf32> to vector<1x2x32xf32>
    tpu.vector_store %arg9[%306, %c0_130, %c0_131], %309 {strides = array<i32>} : memref<8x2x32xf32, #tpu.memory_space<vmem>>, vector<1x2x32xf32>,
    %c6_i32 = arith.constant 6 : i32
    %310 = arith.index_cast %c6_i32 : i32 to index
    %c0_132 = arith.constant 0 : index
    %c0_133 = arith.constant 0 : index
    %311 = vector.load %arg10[%310, %c0_132, %c0_133] : memref<8x2x128xf32, #tpu.memory_space<vmem>>, vector<1x2x128xf32>
    %312 = vector.shape_cast %311 : vector<1x2x128xf32> to vector<2x128xf32>
    %cst_134 = arith.constant dense<0.000000e+00> : vector<2x128xf32>
    %313 = tpu.matmul %305, %44, %cst_134 {dimension_numbers = #tpu.dot_dimension_numbers<[1], [0], [0], [1], [0, 0, 1, 1], [], []>} : vector<2x32xf32>, vector<32x128xf32>, vector<2x128xf32> -> vector<2x128xf32>
    %314 = arith.addf %312, %313 : vector<2x128xf32>
    %315 = vector.extract_strided_slice %314 {offsets = [0, 0], sizes = [2, 32], strides = [1, 1]} : vector<2x128xf32> to vector<2x32xf32>
    %316 = arith.negf %315 : vector<2x32xf32>
    %317 = math.exp %316 : vector<2x32xf32>
    %cst_135 = arith.constant 1.000000e+00 : f32
    %318 = vector.broadcast %cst_135 : f32 to vector<2x32xf32>
    %319 = arith.addf %318, %317 : vector<2x32xf32>
    %320 = arith.divf %318, %319 : vector<2x32xf32>
    %321 = vector.extract_strided_slice %314 {offsets = [0, 32], sizes = [2, 32], strides = [1, 1]} : vector<2x128xf32> to vector<2x32xf32>
    %322 = arith.negf %321 : vector<2x32xf32>
    %323 = math.exp %322 : vector<2x32xf32>
    %cst_136 = arith.constant 1.000000e+00 : f32
    %324 = vector.broadcast %cst_136 : f32 to vector<2x32xf32>
    %325 = arith.addf %324, %323 : vector<2x32xf32>
    %326 = arith.divf %324, %325 : vector<2x32xf32>
    %327 = vector.extract_strided_slice %314 {offsets = [0, 64], sizes = [2, 32], strides = [1, 1]} : vector<2x128xf32> to vector<2x32xf32>
    %328 = math.tanh %327 : vector<2x32xf32>
    %329 = vector.extract_strided_slice %314 {offsets = [0, 96], sizes = [2, 32], strides = [1, 1]} : vector<2x128xf32> to vector<2x32xf32>
    %330 = arith.negf %329 : vector<2x32xf32>
    %331 = math.exp %330 : vector<2x32xf32>
    %cst_137 = arith.constant 1.000000e+00 : f32
    %332 = vector.broadcast %cst_137 : f32 to vector<2x32xf32>
    %333 = arith.addf %332, %331 : vector<2x32xf32>
    %334 = arith.divf %332, %333 : vector<2x32xf32>
    %335 = arith.mulf %326, %303 : vector<2x32xf32>
    %336 = arith.mulf %320, %328 : vector<2x32xf32>
    %337 = arith.addf %335, %336 : vector<2x32xf32>
    %338 = math.tanh %337 : vector<2x32xf32>
    %339 = arith.mulf %334, %338 : vector<2x32xf32>
    %340 = arith.index_cast %c6_i32 : i32 to index
    %c0_138 = arith.constant 0 : index
    %c0_139 = arith.constant 0 : index
    %341 = vector.load %arg9[%340, %c0_138, %c0_139] : memref<8x2x32xf32, #tpu.memory_space<vmem>>, vector<1x2x32xf32>
    %342 = vector.shape_cast %341 : vector<1x2x32xf32> to vector<2x32xf32>
    %343 = vector.shape_cast %339 : vector<2x32xf32> to vector<1x2x32xf32>
    tpu.vector_store %arg9[%340, %c0_138, %c0_139], %343 {strides = array<i32>} : memref<8x2x32xf32, #tpu.memory_space<vmem>>, vector<1x2x32xf32>,
    %c7_i32 = arith.constant 7 : i32
    %344 = arith.index_cast %c7_i32 : i32 to index
    %c0_140 = arith.constant 0 : index
    %c0_141 = arith.constant 0 : index
    %345 = vector.load %arg10[%344, %c0_140, %c0_141] : memref<8x2x128xf32, #tpu.memory_space<vmem>>, vector<1x2x128xf32>
    %346 = vector.shape_cast %345 : vector<1x2x128xf32> to vector<2x128xf32>
    %cst_142 = arith.constant dense<0.000000e+00> : vector<2x128xf32>
    %347 = tpu.matmul %339, %44, %cst_142 {dimension_numbers = #tpu.dot_dimension_numbers<[1], [0], [0], [1], [0, 0, 1, 1], [], []>} : vector<2x32xf32>, vector<32x128xf32>, vector<2x128xf32> -> vector<2x128xf32>
    %348 = arith.addf %346, %347 : vector<2x128xf32>
    %349 = vector.extract_strided_slice %348 {offsets = [0, 0], sizes = [2, 32], strides = [1, 1]} : vector<2x128xf32> to vector<2x32xf32>
    %350 = arith.negf %349 : vector<2x32xf32>
    %351 = math.exp %350 : vector<2x32xf32>
    %cst_143 = arith.constant 1.000000e+00 : f32
    %352 = vector.broadcast %cst_143 : f32 to vector<2x32xf32>
    %353 = arith.addf %352, %351 : vector<2x32xf32>
    %354 = arith.divf %352, %353 : vector<2x32xf32>
    %355 = vector.extract_strided_slice %348 {offsets = [0, 32], sizes = [2, 32], strides = [1, 1]} : vector<2x128xf32> to vector<2x32xf32>
    %356 = arith.negf %355 : vector<2x32xf32>
    %357 = math.exp %356 : vector<2x32xf32>
    %cst_144 = arith.constant 1.000000e+00 : f32
    %358 = vector.broadcast %cst_144 : f32 to vector<2x32xf32>
    %359 = arith.addf %358, %357 : vector<2x32xf32>
    %360 = arith.divf %358, %359 : vector<2x32xf32>
    %361 = vector.extract_strided_slice %348 {offsets = [0, 64], sizes = [2, 32], strides = [1, 1]} : vector<2x128xf32> to vector<2x32xf32>
    %362 = math.tanh %361 : vector<2x32xf32>
    %363 = vector.extract_strided_slice %348 {offsets = [0, 96], sizes = [2, 32], strides = [1, 1]} : vector<2x128xf32> to vector<2x32xf32>
    %364 = arith.negf %363 : vector<2x32xf32>
    %365 = math.exp %364 : vector<2x32xf32>
    %cst_145 = arith.constant 1.000000e+00 : f32
    %366 = vector.broadcast %cst_145 : f32 to vector<2x32xf32>
    %367 = arith.addf %366, %365 : vector<2x32xf32>
    %368 = arith.divf %366, %367 : vector<2x32xf32>
    %369 = arith.mulf %360, %337 : vector<2x32xf32>
    %370 = arith.mulf %354, %362 : vector<2x32xf32>
    %371 = arith.addf %369, %370 : vector<2x32xf32>
    %372 = math.tanh %371 : vector<2x32xf32>
    %373 = arith.mulf %368, %372 : vector<2x32xf32>
    %374 = arith.index_cast %c7_i32 : i32 to index
    %c0_146 = arith.constant 0 : index
    %c0_147 = arith.constant 0 : index
    %375 = vector.load %arg9[%374, %c0_146, %c0_147] : memref<8x2x32xf32, #tpu.memory_space<vmem>>, vector<1x2x32xf32>
    %376 = vector.shape_cast %375 : vector<1x2x32xf32> to vector<2x32xf32>
    %377 = vector.shape_cast %373 : vector<2x32xf32> to vector<1x2x32xf32>
    tpu.vector_store %arg9[%374, %c0_146, %c0_147], %377 {strides = array<i32>} : memref<8x2x32xf32, #tpu.memory_space<vmem>>, vector<1x2x32xf32>,
    %c8_i32 = arith.constant 8 : i32
    %c1_148 = arith.constant 1 : index
    %c0_149 = arith.constant 0 : index
    %c0_150 = arith.constant 0 : index
    %378 = vector.load %arg2[%c1_148, %c0_149, %c0_150] : memref<2x32x128xf32, #tpu.memory_space<vmem>>, vector<1x32x128xf32>
    %379 = vector.shape_cast %378 : vector<1x32x128xf32> to vector<32x128xf32>
    %c1_151 = arith.constant 1 : index
    %c0_152 = arith.constant 0 : index
    %c0_153 = arith.constant 0 : index
    %380 = vector.load %arg3[%c1_151, %c0_152, %c0_153] : memref<2x32x128xf32, #tpu.memory_space<vmem>>, vector<1x32x128xf32>
    %381 = vector.shape_cast %380 : vector<1x32x128xf32> to vector<32x128xf32>
    %c1_154 = arith.constant 1 : index
    %c0_155 = arith.constant 0 : index
    %c0_156 = arith.constant 0 : index
    %382 = vector.load %arg4[%c1_154, %c0_155, %c0_156] : memref<2x1x128xf32, #tpu.memory_space<vmem>>, vector<1x1x128xf32>
    %383 = vector.shape_cast %382 : vector<1x1x128xf32> to vector<1x128xf32>
    %384 = vector.shape_cast %383 : vector<1x128xf32> to vector<1x128xf32>
    %385 = vector.broadcast %384 : vector<1x128xf32> to vector<2x128xf32>
    %c0_157 = arith.constant 0 : index
    %c0_158 = arith.constant 0 : index
    %c0_159 = arith.constant 0 : index
    %386 = vector.load %arg9[%c0_157, %c0_158, %c0_159] : memref<8x2x32xf32, #tpu.memory_space<vmem>>, vector<1x2x32xf32>
    %387 = vector.shape_cast %386 : vector<1x2x32xf32> to vector<2x32xf32>
    %cst_160 = arith.constant dense<0.000000e+00> : vector<2x128xf32>
    %388 = tpu.matmul %387, %379, %cst_160 {dimension_numbers = #tpu.dot_dimension_numbers<[1], [0], [0], [1], [0, 0, 1, 1], [], []>} : vector<2x32xf32>, vector<32x128xf32>, vector<2x128xf32> -> vector<2x128xf32>
    %389 = arith.addf %388, %385 : vector<2x128xf32>
    %c0_161 = arith.constant 0 : index
    %c0_162 = arith.constant 0 : index
    %c0_163 = arith.constant 0 : index
    %390 = vector.load %arg10[%c0_161, %c0_162, %c0_163] : memref<8x2x128xf32, #tpu.memory_space<vmem>>, vector<1x2x128xf32>
    %391 = vector.shape_cast %390 : vector<1x2x128xf32> to vector<2x128xf32>
    %392 = vector.shape_cast %389 : vector<2x128xf32> to vector<1x2x128xf32>
    tpu.vector_store %arg10[%c0_161, %c0_162, %c0_163], %392 {strides = array<i32>} : memref<8x2x128xf32, #tpu.memory_space<vmem>>, vector<1x2x128xf32>,
    %c1_164 = arith.constant 1 : index
    %c0_165 = arith.constant 0 : index
    %c0_166 = arith.constant 0 : index
    %393 = vector.load %arg9[%c1_164, %c0_165, %c0_166] : memref<8x2x32xf32, #tpu.memory_space<vmem>>, vector<1x2x32xf32>
    %394 = vector.shape_cast %393 : vector<1x2x32xf32> to vector<2x32xf32>
    %cst_167 = arith.constant dense<0.000000e+00> : vector<2x128xf32>
    %395 = tpu.matmul %394, %379, %cst_167 {dimension_numbers = #tpu.dot_dimension_numbers<[1], [0], [0], [1], [0, 0, 1, 1], [], []>} : vector<2x32xf32>, vector<32x128xf32>, vector<2x128xf32> -> vector<2x128xf32>
    %396 = arith.addf %395, %385 : vector<2x128xf32>
    %c1_168 = arith.constant 1 : index
    %c0_169 = arith.constant 0 : index
    %c0_170 = arith.constant 0 : index
    %397 = vector.load %arg10[%c1_168, %c0_169, %c0_170] : memref<8x2x128xf32, #tpu.memory_space<vmem>>, vector<1x2x128xf32>
    %398 = vector.shape_cast %397 : vector<1x2x128xf32> to vector<2x128xf32>
    %399 = vector.shape_cast %396 : vector<2x128xf32> to vector<1x2x128xf32>
    tpu.vector_store %arg10[%c1_168, %c0_169, %c0_170], %399 {strides = array<i32>} : memref<8x2x128xf32, #tpu.memory_space<vmem>>, vector<1x2x128xf32>,
    %c2_171 = arith.constant 2 : index
    %c0_172 = arith.constant 0 : index
    %c0_173 = arith.constant 0 : index
    %400 = vector.load %arg9[%c2_171, %c0_172, %c0_173] : memref<8x2x32xf32, #tpu.memory_space<vmem>>, vector<1x2x32xf32>
    %401 = vector.shape_cast %400 : vector<1x2x32xf32> to vector<2x32xf32>
    %cst_174 = arith.constant dense<0.000000e+00> : vector<2x128xf32>
    %402 = tpu.matmul %401, %379, %cst_174 {dimension_numbers = #tpu.dot_dimension_numbers<[1], [0], [0], [1], [0, 0, 1, 1], [], []>} : vector<2x32xf32>, vector<32x128xf32>, vector<2x128xf32> -> vector<2x128xf32>
    %403 = arith.addf %402, %385 : vector<2x128xf32>
    %c2_175 = arith.constant 2 : index
    %c0_176 = arith.constant 0 : index
    %c0_177 = arith.constant 0 : index
    %404 = vector.load %arg10[%c2_175, %c0_176, %c0_177] : memref<8x2x128xf32, #tpu.memory_space<vmem>>, vector<1x2x128xf32>
    %405 = vector.shape_cast %404 : vector<1x2x128xf32> to vector<2x128xf32>
    %406 = vector.shape_cast %403 : vector<2x128xf32> to vector<1x2x128xf32>
    tpu.vector_store %arg10[%c2_175, %c0_176, %c0_177], %406 {strides = array<i32>} : memref<8x2x128xf32, #tpu.memory_space<vmem>>, vector<1x2x128xf32>,
    %c3_178 = arith.constant 3 : index
    %c0_179 = arith.constant 0 : index
    %c0_180 = arith.constant 0 : index
    %407 = vector.load %arg9[%c3_178, %c0_179, %c0_180] : memref<8x2x32xf32, #tpu.memory_space<vmem>>, vector<1x2x32xf32>
    %408 = vector.shape_cast %407 : vector<1x2x32xf32> to vector<2x32xf32>
    %cst_181 = arith.constant dense<0.000000e+00> : vector<2x128xf32>
    %409 = tpu.matmul %408, %379, %cst_181 {dimension_numbers = #tpu.dot_dimension_numbers<[1], [0], [0], [1], [0, 0, 1, 1], [], []>} : vector<2x32xf32>, vector<32x128xf32>, vector<2x128xf32> -> vector<2x128xf32>
    %410 = arith.addf %409, %385 : vector<2x128xf32>
    %c3_182 = arith.constant 3 : index
    %c0_183 = arith.constant 0 : index
    %c0_184 = arith.constant 0 : index
    %411 = vector.load %arg10[%c3_182, %c0_183, %c0_184] : memref<8x2x128xf32, #tpu.memory_space<vmem>>, vector<1x2x128xf32>
    %412 = vector.shape_cast %411 : vector<1x2x128xf32> to vector<2x128xf32>
    %413 = vector.shape_cast %410 : vector<2x128xf32> to vector<1x2x128xf32>
    tpu.vector_store %arg10[%c3_182, %c0_183, %c0_184], %413 {strides = array<i32>} : memref<8x2x128xf32, #tpu.memory_space<vmem>>, vector<1x2x128xf32>,
    %c4_185 = arith.constant 4 : index
    %c0_186 = arith.constant 0 : index
    %c0_187 = arith.constant 0 : index
    %414 = vector.load %arg9[%c4_185, %c0_186, %c0_187] : memref<8x2x32xf32, #tpu.memory_space<vmem>>, vector<1x2x32xf32>
    %415 = vector.shape_cast %414 : vector<1x2x32xf32> to vector<2x32xf32>
    %cst_188 = arith.constant dense<0.000000e+00> : vector<2x128xf32>
    %416 = tpu.matmul %415, %379, %cst_188 {dimension_numbers = #tpu.dot_dimension_numbers<[1], [0], [0], [1], [0, 0, 1, 1], [], []>} : vector<2x32xf32>, vector<32x128xf32>, vector<2x128xf32> -> vector<2x128xf32>
    %417 = arith.addf %416, %385 : vector<2x128xf32>
    %c4_189 = arith.constant 4 : index
    %c0_190 = arith.constant 0 : index
    %c0_191 = arith.constant 0 : index
    %418 = vector.load %arg10[%c4_189, %c0_190, %c0_191] : memref<8x2x128xf32, #tpu.memory_space<vmem>>, vector<1x2x128xf32>
    %419 = vector.shape_cast %418 : vector<1x2x128xf32> to vector<2x128xf32>
    %420 = vector.shape_cast %417 : vector<2x128xf32> to vector<1x2x128xf32>
    tpu.vector_store %arg10[%c4_189, %c0_190, %c0_191], %420 {strides = array<i32>} : memref<8x2x128xf32, #tpu.memory_space<vmem>>, vector<1x2x128xf32>,
    %c5_192 = arith.constant 5 : index
    %c0_193 = arith.constant 0 : index
    %c0_194 = arith.constant 0 : index
    %421 = vector.load %arg9[%c5_192, %c0_193, %c0_194] : memref<8x2x32xf32, #tpu.memory_space<vmem>>, vector<1x2x32xf32>
    %422 = vector.shape_cast %421 : vector<1x2x32xf32> to vector<2x32xf32>
    %cst_195 = arith.constant dense<0.000000e+00> : vector<2x128xf32>
    %423 = tpu.matmul %422, %379, %cst_195 {dimension_numbers = #tpu.dot_dimension_numbers<[1], [0], [0], [1], [0, 0, 1, 1], [], []>} : vector<2x32xf32>, vector<32x128xf32>, vector<2x128xf32> -> vector<2x128xf32>
    %424 = arith.addf %423, %385 : vector<2x128xf32>
    %c5_196 = arith.constant 5 : index
    %c0_197 = arith.constant 0 : index
    %c0_198 = arith.constant 0 : index
    %425 = vector.load %arg10[%c5_196, %c0_197, %c0_198] : memref<8x2x128xf32, #tpu.memory_space<vmem>>, vector<1x2x128xf32>
    %426 = vector.shape_cast %425 : vector<1x2x128xf32> to vector<2x128xf32>
    %427 = vector.shape_cast %424 : vector<2x128xf32> to vector<1x2x128xf32>
    tpu.vector_store %arg10[%c5_196, %c0_197, %c0_198], %427 {strides = array<i32>} : memref<8x2x128xf32, #tpu.memory_space<vmem>>, vector<1x2x128xf32>,
    %c6_199 = arith.constant 6 : index
    %c0_200 = arith.constant 0 : index
    %c0_201 = arith.constant 0 : index
    %428 = vector.load %arg9[%c6_199, %c0_200, %c0_201] : memref<8x2x32xf32, #tpu.memory_space<vmem>>, vector<1x2x32xf32>
    %429 = vector.shape_cast %428 : vector<1x2x32xf32> to vector<2x32xf32>
    %cst_202 = arith.constant dense<0.000000e+00> : vector<2x128xf32>
    %430 = tpu.matmul %429, %379, %cst_202 {dimension_numbers = #tpu.dot_dimension_numbers<[1], [0], [0], [1], [0, 0, 1, 1], [], []>} : vector<2x32xf32>, vector<32x128xf32>, vector<2x128xf32> -> vector<2x128xf32>
    %431 = arith.addf %430, %385 : vector<2x128xf32>
    %c6_203 = arith.constant 6 : index
    %c0_204 = arith.constant 0 : index
    %c0_205 = arith.constant 0 : index
    %432 = vector.load %arg10[%c6_203, %c0_204, %c0_205] : memref<8x2x128xf32, #tpu.memory_space<vmem>>, vector<1x2x128xf32>
    %433 = vector.shape_cast %432 : vector<1x2x128xf32> to vector<2x128xf32>
    %434 = vector.shape_cast %431 : vector<2x128xf32> to vector<1x2x128xf32>
    tpu.vector_store %arg10[%c6_203, %c0_204, %c0_205], %434 {strides = array<i32>} : memref<8x2x128xf32, #tpu.memory_space<vmem>>, vector<1x2x128xf32>,
    %c7_206 = arith.constant 7 : index
    %c0_207 = arith.constant 0 : index
    %c0_208 = arith.constant 0 : index
    %435 = vector.load %arg9[%c7_206, %c0_207, %c0_208] : memref<8x2x32xf32, #tpu.memory_space<vmem>>, vector<1x2x32xf32>
    %436 = vector.shape_cast %435 : vector<1x2x32xf32> to vector<2x32xf32>
    %cst_209 = arith.constant dense<0.000000e+00> : vector<2x128xf32>
    %437 = tpu.matmul %436, %379, %cst_209 {dimension_numbers = #tpu.dot_dimension_numbers<[1], [0], [0], [1], [0, 0, 1, 1], [], []>} : vector<2x32xf32>, vector<32x128xf32>, vector<2x128xf32> -> vector<2x128xf32>
    %438 = arith.addf %437, %385 : vector<2x128xf32>
    %c7_210 = arith.constant 7 : index
    %c0_211 = arith.constant 0 : index
    %c0_212 = arith.constant 0 : index
    %439 = vector.load %arg10[%c7_210, %c0_211, %c0_212] : memref<8x2x128xf32, #tpu.memory_space<vmem>>, vector<1x2x128xf32>
    %440 = vector.shape_cast %439 : vector<1x2x128xf32> to vector<2x128xf32>
    %441 = vector.shape_cast %438 : vector<2x128xf32> to vector<1x2x128xf32>
    tpu.vector_store %arg10[%c7_210, %c0_211, %c0_212], %441 {strides = array<i32>} : memref<8x2x128xf32, #tpu.memory_space<vmem>>, vector<1x2x128xf32>,
    %cst_213 = arith.constant 0.000000e+00 : f32
    %442 = vector.broadcast %cst_213 : f32 to vector<2x32xf32>
    %c0_i32_214 = arith.constant 0 : i32
    %443 = arith.index_cast %c0_i32_214 : i32 to index
    %c0_215 = arith.constant 0 : index
    %c0_216 = arith.constant 0 : index
    %444 = vector.load %arg10[%443, %c0_215, %c0_216] : memref<8x2x128xf32, #tpu.memory_space<vmem>>, vector<1x2x128xf32>
    %445 = vector.shape_cast %444 : vector<1x2x128xf32> to vector<2x128xf32>
    %cst_217 = arith.constant dense<0.000000e+00> : vector<2x128xf32>
    %446 = tpu.matmul %442, %381, %cst_217 {dimension_numbers = #tpu.dot_dimension_numbers<[1], [0], [0], [1], [0, 0, 1, 1], [], []>} : vector<2x32xf32>, vector<32x128xf32>, vector<2x128xf32> -> vector<2x128xf32>
    %447 = arith.addf %445, %446 : vector<2x128xf32>
    %448 = vector.extract_strided_slice %447 {offsets = [0, 0], sizes = [2, 32], strides = [1, 1]} : vector<2x128xf32> to vector<2x32xf32>
    %449 = arith.negf %448 : vector<2x32xf32>
    %450 = math.exp %449 : vector<2x32xf32>
    %cst_218 = arith.constant 1.000000e+00 : f32
    %451 = vector.broadcast %cst_218 : f32 to vector<2x32xf32>
    %452 = arith.addf %451, %450 : vector<2x32xf32>
    %453 = arith.divf %451, %452 : vector<2x32xf32>
    %454 = vector.extract_strided_slice %447 {offsets = [0, 32], sizes = [2, 32], strides = [1, 1]} : vector<2x128xf32> to vector<2x32xf32>
    %455 = arith.negf %454 : vector<2x32xf32>
    %456 = math.exp %455 : vector<2x32xf32>
    %cst_219 = arith.constant 1.000000e+00 : f32
    %457 = vector.broadcast %cst_219 : f32 to vector<2x32xf32>
    %458 = arith.addf %457, %456 : vector<2x32xf32>
    %459 = arith.divf %457, %458 : vector<2x32xf32>
    %460 = vector.extract_strided_slice %447 {offsets = [0, 64], sizes = [2, 32], strides = [1, 1]} : vector<2x128xf32> to vector<2x32xf32>
    %461 = math.tanh %460 : vector<2x32xf32>
    %462 = vector.extract_strided_slice %447 {offsets = [0, 96], sizes = [2, 32], strides = [1, 1]} : vector<2x128xf32> to vector<2x32xf32>
    %463 = arith.negf %462 : vector<2x32xf32>
    %464 = math.exp %463 : vector<2x32xf32>
    %cst_220 = arith.constant 1.000000e+00 : f32
    %465 = vector.broadcast %cst_220 : f32 to vector<2x32xf32>
    %466 = arith.addf %465, %464 : vector<2x32xf32>
    %467 = arith.divf %465, %466 : vector<2x32xf32>
    %468 = arith.mulf %459, %442 : vector<2x32xf32>
    %469 = arith.mulf %453, %461 : vector<2x32xf32>
    %470 = arith.addf %468, %469 : vector<2x32xf32>
    %471 = math.tanh %470 : vector<2x32xf32>
    %472 = arith.mulf %467, %471 : vector<2x32xf32>
    %473 = arith.index_cast %c0_i32_214 : i32 to index
    %c0_221 = arith.constant 0 : index
    %c0_222 = arith.constant 0 : index
    %474 = vector.load %arg9[%473, %c0_221, %c0_222] : memref<8x2x32xf32, #tpu.memory_space<vmem>>, vector<1x2x32xf32>
    %475 = vector.shape_cast %474 : vector<1x2x32xf32> to vector<2x32xf32>
    %476 = vector.shape_cast %472 : vector<2x32xf32> to vector<1x2x32xf32>
    tpu.vector_store %arg9[%473, %c0_221, %c0_222], %476 {strides = array<i32>} : memref<8x2x32xf32, #tpu.memory_space<vmem>>, vector<1x2x32xf32>,
    %c1_i32_223 = arith.constant 1 : i32
    %477 = arith.index_cast %c1_i32_223 : i32 to index
    %c0_224 = arith.constant 0 : index
    %c0_225 = arith.constant 0 : index
    %478 = vector.load %arg10[%477, %c0_224, %c0_225] : memref<8x2x128xf32, #tpu.memory_space<vmem>>, vector<1x2x128xf32>
    %479 = vector.shape_cast %478 : vector<1x2x128xf32> to vector<2x128xf32>
    %cst_226 = arith.constant dense<0.000000e+00> : vector<2x128xf32>
    %480 = tpu.matmul %472, %381, %cst_226 {dimension_numbers = #tpu.dot_dimension_numbers<[1], [0], [0], [1], [0, 0, 1, 1], [], []>} : vector<2x32xf32>, vector<32x128xf32>, vector<2x128xf32> -> vector<2x128xf32>
    %481 = arith.addf %479, %480 : vector<2x128xf32>
    %482 = vector.extract_strided_slice %481 {offsets = [0, 0], sizes = [2, 32], strides = [1, 1]} : vector<2x128xf32> to vector<2x32xf32>
    %483 = arith.negf %482 : vector<2x32xf32>
    %484 = math.exp %483 : vector<2x32xf32>
    %cst_227 = arith.constant 1.000000e+00 : f32
    %485 = vector.broadcast %cst_227 : f32 to vector<2x32xf32>
    %486 = arith.addf %485, %484 : vector<2x32xf32>
    %487 = arith.divf %485, %486 : vector<2x32xf32>
    %488 = vector.extract_strided_slice %481 {offsets = [0, 32], sizes = [2, 32], strides = [1, 1]} : vector<2x128xf32> to vector<2x32xf32>
    %489 = arith.negf %488 : vector<2x32xf32>
    %490 = math.exp %489 : vector<2x32xf32>
    %cst_228 = arith.constant 1.000000e+00 : f32
    %491 = vector.broadcast %cst_228 : f32 to vector<2x32xf32>
    %492 = arith.addf %491, %490 : vector<2x32xf32>
    %493 = arith.divf %491, %492 : vector<2x32xf32>
    %494 = vector.extract_strided_slice %481 {offsets = [0, 64], sizes = [2, 32], strides = [1, 1]} : vector<2x128xf32> to vector<2x32xf32>
    %495 = math.tanh %494 : vector<2x32xf32>
    %496 = vector.extract_strided_slice %481 {offsets = [0, 96], sizes = [2, 32], strides = [1, 1]} : vector<2x128xf32> to vector<2x32xf32>
    %497 = arith.negf %496 : vector<2x32xf32>
    %498 = math.exp %497 : vector<2x32xf32>
    %cst_229 = arith.constant 1.000000e+00 : f32
    %499 = vector.broadcast %cst_229 : f32 to vector<2x32xf32>
    %500 = arith.addf %499, %498 : vector<2x32xf32>
    %501 = arith.divf %499, %500 : vector<2x32xf32>
    %502 = arith.mulf %493, %470 : vector<2x32xf32>
    %503 = arith.mulf %487, %495 : vector<2x32xf32>
    %504 = arith.addf %502, %503 : vector<2x32xf32>
    %505 = math.tanh %504 : vector<2x32xf32>
    %506 = arith.mulf %501, %505 : vector<2x32xf32>
    %507 = arith.index_cast %c1_i32_223 : i32 to index
    %c0_230 = arith.constant 0 : index
    %c0_231 = arith.constant 0 : index
    %508 = vector.load %arg9[%507, %c0_230, %c0_231] : memref<8x2x32xf32, #tpu.memory_space<vmem>>, vector<1x2x32xf32>
    %509 = vector.shape_cast %508 : vector<1x2x32xf32> to vector<2x32xf32>
    %510 = vector.shape_cast %506 : vector<2x32xf32> to vector<1x2x32xf32>
    tpu.vector_store %arg9[%507, %c0_230, %c0_231], %510 {strides = array<i32>} : memref<8x2x32xf32, #tpu.memory_space<vmem>>, vector<1x2x32xf32>,
    %c2_i32_232 = arith.constant 2 : i32
    %511 = arith.index_cast %c2_i32_232 : i32 to index
    %c0_233 = arith.constant 0 : index
    %c0_234 = arith.constant 0 : index
    %512 = vector.load %arg10[%511, %c0_233, %c0_234] : memref<8x2x128xf32, #tpu.memory_space<vmem>>, vector<1x2x128xf32>
    %513 = vector.shape_cast %512 : vector<1x2x128xf32> to vector<2x128xf32>
    %cst_235 = arith.constant dense<0.000000e+00> : vector<2x128xf32>
    %514 = tpu.matmul %506, %381, %cst_235 {dimension_numbers = #tpu.dot_dimension_numbers<[1], [0], [0], [1], [0, 0, 1, 1], [], []>} : vector<2x32xf32>, vector<32x128xf32>, vector<2x128xf32> -> vector<2x128xf32>
    %515 = arith.addf %513, %514 : vector<2x128xf32>
    %516 = vector.extract_strided_slice %515 {offsets = [0, 0], sizes = [2, 32], strides = [1, 1]} : vector<2x128xf32> to vector<2x32xf32>
    %517 = arith.negf %516 : vector<2x32xf32>
    %518 = math.exp %517 : vector<2x32xf32>
    %cst_236 = arith.constant 1.000000e+00 : f32
    %519 = vector.broadcast %cst_236 : f32 to vector<2x32xf32>
    %520 = arith.addf %519, %518 : vector<2x32xf32>
    %521 = arith.divf %519, %520 : vector<2x32xf32>
    %522 = vector.extract_strided_slice %515 {offsets = [0, 32], sizes = [2, 32], strides = [1, 1]} : vector<2x128xf32> to vector<2x32xf32>
    %523 = arith.negf %522 : vector<2x32xf32>
    %524 = math.exp %523 : vector<2x32xf32>
    %cst_237 = arith.constant 1.000000e+00 : f32
    %525 = vector.broadcast %cst_237 : f32 to vector<2x32xf32>
    %526 = arith.addf %525, %524 : vector<2x32xf32>
    %527 = arith.divf %525, %526 : vector<2x32xf32>
    %528 = vector.extract_strided_slice %515 {offsets = [0, 64], sizes = [2, 32], strides = [1, 1]} : vector<2x128xf32> to vector<2x32xf32>
    %529 = math.tanh %528 : vector<2x32xf32>
    %530 = vector.extract_strided_slice %515 {offsets = [0, 96], sizes = [2, 32], strides = [1, 1]} : vector<2x128xf32> to vector<2x32xf32>
    %531 = arith.negf %530 : vector<2x32xf32>
    %532 = math.exp %531 : vector<2x32xf32>
    %cst_238 = arith.constant 1.000000e+00 : f32
    %533 = vector.broadcast %cst_238 : f32 to vector<2x32xf32>
    %534 = arith.addf %533, %532 : vector<2x32xf32>
    %535 = arith.divf %533, %534 : vector<2x32xf32>
    %536 = arith.mulf %527, %504 : vector<2x32xf32>
    %537 = arith.mulf %521, %529 : vector<2x32xf32>
    %538 = arith.addf %536, %537 : vector<2x32xf32>
    %539 = math.tanh %538 : vector<2x32xf32>
    %540 = arith.mulf %535, %539 : vector<2x32xf32>
    %541 = arith.index_cast %c2_i32_232 : i32 to index
    %c0_239 = arith.constant 0 : index
    %c0_240 = arith.constant 0 : index
    %542 = vector.load %arg9[%541, %c0_239, %c0_240] : memref<8x2x32xf32, #tpu.memory_space<vmem>>, vector<1x2x32xf32>
    %543 = vector.shape_cast %542 : vector<1x2x32xf32> to vector<2x32xf32>
    %544 = vector.shape_cast %540 : vector<2x32xf32> to vector<1x2x32xf32>
    tpu.vector_store %arg9[%541, %c0_239, %c0_240], %544 {strides = array<i32>} : memref<8x2x32xf32, #tpu.memory_space<vmem>>, vector<1x2x32xf32>,
    %c3_i32_241 = arith.constant 3 : i32
    %545 = arith.index_cast %c3_i32_241 : i32 to index
    %c0_242 = arith.constant 0 : index
    %c0_243 = arith.constant 0 : index
    %546 = vector.load %arg10[%545, %c0_242, %c0_243] : memref<8x2x128xf32, #tpu.memory_space<vmem>>, vector<1x2x128xf32>
    %547 = vector.shape_cast %546 : vector<1x2x128xf32> to vector<2x128xf32>
    %cst_244 = arith.constant dense<0.000000e+00> : vector<2x128xf32>
    %548 = tpu.matmul %540, %381, %cst_244 {dimension_numbers = #tpu.dot_dimension_numbers<[1], [0], [0], [1], [0, 0, 1, 1], [], []>} : vector<2x32xf32>, vector<32x128xf32>, vector<2x128xf32> -> vector<2x128xf32>
    %549 = arith.addf %547, %548 : vector<2x128xf32>
    %550 = vector.extract_strided_slice %549 {offsets = [0, 0], sizes = [2, 32], strides = [1, 1]} : vector<2x128xf32> to vector<2x32xf32>
    %551 = arith.negf %550 : vector<2x32xf32>
    %552 = math.exp %551 : vector<2x32xf32>
    %cst_245 = arith.constant 1.000000e+00 : f32
    %553 = vector.broadcast %cst_245 : f32 to vector<2x32xf32>
    %554 = arith.addf %553, %552 : vector<2x32xf32>
    %555 = arith.divf %553, %554 : vector<2x32xf32>
    %556 = vector.extract_strided_slice %549 {offsets = [0, 32], sizes = [2, 32], strides = [1, 1]} : vector<2x128xf32> to vector<2x32xf32>
    %557 = arith.negf %556 : vector<2x32xf32>
    %558 = math.exp %557 : vector<2x32xf32>
    %cst_246 = arith.constant 1.000000e+00 : f32
    %559 = vector.broadcast %cst_246 : f32 to vector<2x32xf32>
    %560 = arith.addf %559, %558 : vector<2x32xf32>
    %561 = arith.divf %559, %560 : vector<2x32xf32>
    %562 = vector.extract_strided_slice %549 {offsets = [0, 64], sizes = [2, 32], strides = [1, 1]} : vector<2x128xf32> to vector<2x32xf32>
    %563 = math.tanh %562 : vector<2x32xf32>
    %564 = vector.extract_strided_slice %549 {offsets = [0, 96], sizes = [2, 32], strides = [1, 1]} : vector<2x128xf32> to vector<2x32xf32>
    %565 = arith.negf %564 : vector<2x32xf32>
    %566 = math.exp %565 : vector<2x32xf32>
    %cst_247 = arith.constant 1.000000e+00 : f32
    %567 = vector.broadcast %cst_247 : f32 to vector<2x32xf32>
    %568 = arith.addf %567, %566 : vector<2x32xf32>
    %569 = arith.divf %567, %568 : vector<2x32xf32>
    %570 = arith.mulf %561, %538 : vector<2x32xf32>
    %571 = arith.mulf %555, %563 : vector<2x32xf32>
    %572 = arith.addf %570, %571 : vector<2x32xf32>
    %573 = math.tanh %572 : vector<2x32xf32>
    %574 = arith.mulf %569, %573 : vector<2x32xf32>
    %575 = arith.index_cast %c3_i32_241 : i32 to index
    %c0_248 = arith.constant 0 : index
    %c0_249 = arith.constant 0 : index
    %576 = vector.load %arg9[%575, %c0_248, %c0_249] : memref<8x2x32xf32, #tpu.memory_space<vmem>>, vector<1x2x32xf32>
    %577 = vector.shape_cast %576 : vector<1x2x32xf32> to vector<2x32xf32>
    %578 = vector.shape_cast %574 : vector<2x32xf32> to vector<1x2x32xf32>
    tpu.vector_store %arg9[%575, %c0_248, %c0_249], %578 {strides = array<i32>} : memref<8x2x32xf32, #tpu.memory_space<vmem>>, vector<1x2x32xf32>,
    %c4_i32_250 = arith.constant 4 : i32
    %579 = arith.index_cast %c4_i32_250 : i32 to index
    %c0_251 = arith.constant 0 : index
    %c0_252 = arith.constant 0 : index
    %580 = vector.load %arg10[%579, %c0_251, %c0_252] : memref<8x2x128xf32, #tpu.memory_space<vmem>>, vector<1x2x128xf32>
    %581 = vector.shape_cast %580 : vector<1x2x128xf32> to vector<2x128xf32>
    %cst_253 = arith.constant dense<0.000000e+00> : vector<2x128xf32>
    %582 = tpu.matmul %574, %381, %cst_253 {dimension_numbers = #tpu.dot_dimension_numbers<[1], [0], [0], [1], [0, 0, 1, 1], [], []>} : vector<2x32xf32>, vector<32x128xf32>, vector<2x128xf32> -> vector<2x128xf32>
    %583 = arith.addf %581, %582 : vector<2x128xf32>
    %584 = vector.extract_strided_slice %583 {offsets = [0, 0], sizes = [2, 32], strides = [1, 1]} : vector<2x128xf32> to vector<2x32xf32>
    %585 = arith.negf %584 : vector<2x32xf32>
    %586 = math.exp %585 : vector<2x32xf32>
    %cst_254 = arith.constant 1.000000e+00 : f32
    %587 = vector.broadcast %cst_254 : f32 to vector<2x32xf32>
    %588 = arith.addf %587, %586 : vector<2x32xf32>
    %589 = arith.divf %587, %588 : vector<2x32xf32>
    %590 = vector.extract_strided_slice %583 {offsets = [0, 32], sizes = [2, 32], strides = [1, 1]} : vector<2x128xf32> to vector<2x32xf32>
    %591 = arith.negf %590 : vector<2x32xf32>
    %592 = math.exp %591 : vector<2x32xf32>
    %cst_255 = arith.constant 1.000000e+00 : f32
    %593 = vector.broadcast %cst_255 : f32 to vector<2x32xf32>
    %594 = arith.addf %593, %592 : vector<2x32xf32>
    %595 = arith.divf %593, %594 : vector<2x32xf32>
    %596 = vector.extract_strided_slice %583 {offsets = [0, 64], sizes = [2, 32], strides = [1, 1]} : vector<2x128xf32> to vector<2x32xf32>
    %597 = math.tanh %596 : vector<2x32xf32>
    %598 = vector.extract_strided_slice %583 {offsets = [0, 96], sizes = [2, 32], strides = [1, 1]} : vector<2x128xf32> to vector<2x32xf32>
    %599 = arith.negf %598 : vector<2x32xf32>
    %600 = math.exp %599 : vector<2x32xf32>
    %cst_256 = arith.constant 1.000000e+00 : f32
    %601 = vector.broadcast %cst_256 : f32 to vector<2x32xf32>
    %602 = arith.addf %601, %600 : vector<2x32xf32>
    %603 = arith.divf %601, %602 : vector<2x32xf32>
    %604 = arith.mulf %595, %572 : vector<2x32xf32>
    %605 = arith.mulf %589, %597 : vector<2x32xf32>
    %606 = arith.addf %604, %605 : vector<2x32xf32>
    %607 = math.tanh %606 : vector<2x32xf32>
    %608 = arith.mulf %603, %607 : vector<2x32xf32>
    %609 = arith.index_cast %c4_i32_250 : i32 to index
    %c0_257 = arith.constant 0 : index
    %c0_258 = arith.constant 0 : index
    %610 = vector.load %arg9[%609, %c0_257, %c0_258] : memref<8x2x32xf32, #tpu.memory_space<vmem>>, vector<1x2x32xf32>
    %611 = vector.shape_cast %610 : vector<1x2x32xf32> to vector<2x32xf32>
    %612 = vector.shape_cast %608 : vector<2x32xf32> to vector<1x2x32xf32>
    tpu.vector_store %arg9[%609, %c0_257, %c0_258], %612 {strides = array<i32>} : memref<8x2x32xf32, #tpu.memory_space<vmem>>, vector<1x2x32xf32>,
    %c5_i32_259 = arith.constant 5 : i32
    %613 = arith.index_cast %c5_i32_259 : i32 to index
    %c0_260 = arith.constant 0 : index
    %c0_261 = arith.constant 0 : index
    %614 = vector.load %arg10[%613, %c0_260, %c0_261] : memref<8x2x128xf32, #tpu.memory_space<vmem>>, vector<1x2x128xf32>
    %615 = vector.shape_cast %614 : vector<1x2x128xf32> to vector<2x128xf32>
    %cst_262 = arith.constant dense<0.000000e+00> : vector<2x128xf32>
    %616 = tpu.matmul %608, %381, %cst_262 {dimension_numbers = #tpu.dot_dimension_numbers<[1], [0], [0], [1], [0, 0, 1, 1], [], []>} : vector<2x32xf32>, vector<32x128xf32>, vector<2x128xf32> -> vector<2x128xf32>
    %617 = arith.addf %615, %616 : vector<2x128xf32>
    %618 = vector.extract_strided_slice %617 {offsets = [0, 0], sizes = [2, 32], strides = [1, 1]} : vector<2x128xf32> to vector<2x32xf32>
    %619 = arith.negf %618 : vector<2x32xf32>
    %620 = math.exp %619 : vector<2x32xf32>
    %cst_263 = arith.constant 1.000000e+00 : f32
    %621 = vector.broadcast %cst_263 : f32 to vector<2x32xf32>
    %622 = arith.addf %621, %620 : vector<2x32xf32>
    %623 = arith.divf %621, %622 : vector<2x32xf32>
    %624 = vector.extract_strided_slice %617 {offsets = [0, 32], sizes = [2, 32], strides = [1, 1]} : vector<2x128xf32> to vector<2x32xf32>
    %625 = arith.negf %624 : vector<2x32xf32>
    %626 = math.exp %625 : vector<2x32xf32>
    %cst_264 = arith.constant 1.000000e+00 : f32
    %627 = vector.broadcast %cst_264 : f32 to vector<2x32xf32>
    %628 = arith.addf %627, %626 : vector<2x32xf32>
    %629 = arith.divf %627, %628 : vector<2x32xf32>
    %630 = vector.extract_strided_slice %617 {offsets = [0, 64], sizes = [2, 32], strides = [1, 1]} : vector<2x128xf32> to vector<2x32xf32>
    %631 = math.tanh %630 : vector<2x32xf32>
    %632 = vector.extract_strided_slice %617 {offsets = [0, 96], sizes = [2, 32], strides = [1, 1]} : vector<2x128xf32> to vector<2x32xf32>
    %633 = arith.negf %632 : vector<2x32xf32>
    %634 = math.exp %633 : vector<2x32xf32>
    %cst_265 = arith.constant 1.000000e+00 : f32
    %635 = vector.broadcast %cst_265 : f32 to vector<2x32xf32>
    %636 = arith.addf %635, %634 : vector<2x32xf32>
    %637 = arith.divf %635, %636 : vector<2x32xf32>
    %638 = arith.mulf %629, %606 : vector<2x32xf32>
    %639 = arith.mulf %623, %631 : vector<2x32xf32>
    %640 = arith.addf %638, %639 : vector<2x32xf32>
    %641 = math.tanh %640 : vector<2x32xf32>
    %642 = arith.mulf %637, %641 : vector<2x32xf32>
    %643 = arith.index_cast %c5_i32_259 : i32 to index
    %c0_266 = arith.constant 0 : index
    %c0_267 = arith.constant 0 : index
    %644 = vector.load %arg9[%643, %c0_266, %c0_267] : memref<8x2x32xf32, #tpu.memory_space<vmem>>, vector<1x2x32xf32>
    %645 = vector.shape_cast %644 : vector<1x2x32xf32> to vector<2x32xf32>
    %646 = vector.shape_cast %642 : vector<2x32xf32> to vector<1x2x32xf32>
    tpu.vector_store %arg9[%643, %c0_266, %c0_267], %646 {strides = array<i32>} : memref<8x2x32xf32, #tpu.memory_space<vmem>>, vector<1x2x32xf32>,
    %c6_i32_268 = arith.constant 6 : i32
    %647 = arith.index_cast %c6_i32_268 : i32 to index
    %c0_269 = arith.constant 0 : index
    %c0_270 = arith.constant 0 : index
    %648 = vector.load %arg10[%647, %c0_269, %c0_270] : memref<8x2x128xf32, #tpu.memory_space<vmem>>, vector<1x2x128xf32>
    %649 = vector.shape_cast %648 : vector<1x2x128xf32> to vector<2x128xf32>
    %cst_271 = arith.constant dense<0.000000e+00> : vector<2x128xf32>
    %650 = tpu.matmul %642, %381, %cst_271 {dimension_numbers = #tpu.dot_dimension_numbers<[1], [0], [0], [1], [0, 0, 1, 1], [], []>} : vector<2x32xf32>, vector<32x128xf32>, vector<2x128xf32> -> vector<2x128xf32>
    %651 = arith.addf %649, %650 : vector<2x128xf32>
    %652 = vector.extract_strided_slice %651 {offsets = [0, 0], sizes = [2, 32], strides = [1, 1]} : vector<2x128xf32> to vector<2x32xf32>
    %653 = arith.negf %652 : vector<2x32xf32>
    %654 = math.exp %653 : vector<2x32xf32>
    %cst_272 = arith.constant 1.000000e+00 : f32
    %655 = vector.broadcast %cst_272 : f32 to vector<2x32xf32>
    %656 = arith.addf %655, %654 : vector<2x32xf32>
    %657 = arith.divf %655, %656 : vector<2x32xf32>
    %658 = vector.extract_strided_slice %651 {offsets = [0, 32], sizes = [2, 32], strides = [1, 1]} : vector<2x128xf32> to vector<2x32xf32>
    %659 = arith.negf %658 : vector<2x32xf32>
    %660 = math.exp %659 : vector<2x32xf32>
    %cst_273 = arith.constant 1.000000e+00 : f32
    %661 = vector.broadcast %cst_273 : f32 to vector<2x32xf32>
    %662 = arith.addf %661, %660 : vector<2x32xf32>
    %663 = arith.divf %661, %662 : vector<2x32xf32>
    %664 = vector.extract_strided_slice %651 {offsets = [0, 64], sizes = [2, 32], strides = [1, 1]} : vector<2x128xf32> to vector<2x32xf32>
    %665 = math.tanh %664 : vector<2x32xf32>
    %666 = vector.extract_strided_slice %651 {offsets = [0, 96], sizes = [2, 32], strides = [1, 1]} : vector<2x128xf32> to vector<2x32xf32>
    %667 = arith.negf %666 : vector<2x32xf32>
    %668 = math.exp %667 : vector<2x32xf32>
    %cst_274 = arith.constant 1.000000e+00 : f32
    %669 = vector.broadcast %cst_274 : f32 to vector<2x32xf32>
    %670 = arith.addf %669, %668 : vector<2x32xf32>
    %671 = arith.divf %669, %670 : vector<2x32xf32>
    %672 = arith.mulf %663, %640 : vector<2x32xf32>
    %673 = arith.mulf %657, %665 : vector<2x32xf32>
    %674 = arith.addf %672, %673 : vector<2x32xf32>
    %675 = math.tanh %674 : vector<2x32xf32>
    %676 = arith.mulf %671, %675 : vector<2x32xf32>
    %677 = arith.index_cast %c6_i32_268 : i32 to index
    %c0_275 = arith.constant 0 : index
    %c0_276 = arith.constant 0 : index
    %678 = vector.load %arg9[%677, %c0_275, %c0_276] : memref<8x2x32xf32, #tpu.memory_space<vmem>>, vector<1x2x32xf32>
    %679 = vector.shape_cast %678 : vector<1x2x32xf32> to vector<2x32xf32>
    %680 = vector.shape_cast %676 : vector<2x32xf32> to vector<1x2x32xf32>
    tpu.vector_store %arg9[%677, %c0_275, %c0_276], %680 {strides = array<i32>} : memref<8x2x32xf32, #tpu.memory_space<vmem>>, vector<1x2x32xf32>,
    %c7_i32_277 = arith.constant 7 : i32
    %681 = arith.index_cast %c7_i32_277 : i32 to index
    %c0_278 = arith.constant 0 : index
    %c0_279 = arith.constant 0 : index
    %682 = vector.load %arg10[%681, %c0_278, %c0_279] : memref<8x2x128xf32, #tpu.memory_space<vmem>>, vector<1x2x128xf32>
    %683 = vector.shape_cast %682 : vector<1x2x128xf32> to vector<2x128xf32>
    %cst_280 = arith.constant dense<0.000000e+00> : vector<2x128xf32>
    %684 = tpu.matmul %676, %381, %cst_280 {dimension_numbers = #tpu.dot_dimension_numbers<[1], [0], [0], [1], [0, 0, 1, 1], [], []>} : vector<2x32xf32>, vector<32x128xf32>, vector<2x128xf32> -> vector<2x128xf32>
    %685 = arith.addf %683, %684 : vector<2x128xf32>
    %686 = vector.extract_strided_slice %685 {offsets = [0, 0], sizes = [2, 32], strides = [1, 1]} : vector<2x128xf32> to vector<2x32xf32>
    %687 = arith.negf %686 : vector<2x32xf32>
    %688 = math.exp %687 : vector<2x32xf32>
    %cst_281 = arith.constant 1.000000e+00 : f32
    %689 = vector.broadcast %cst_281 : f32 to vector<2x32xf32>
    %690 = arith.addf %689, %688 : vector<2x32xf32>
    %691 = arith.divf %689, %690 : vector<2x32xf32>
    %692 = vector.extract_strided_slice %685 {offsets = [0, 32], sizes = [2, 32], strides = [1, 1]} : vector<2x128xf32> to vector<2x32xf32>
    %693 = arith.negf %692 : vector<2x32xf32>
    %694 = math.exp %693 : vector<2x32xf32>
    %cst_282 = arith.constant 1.000000e+00 : f32
    %695 = vector.broadcast %cst_282 : f32 to vector<2x32xf32>
    %696 = arith.addf %695, %694 : vector<2x32xf32>
    %697 = arith.divf %695, %696 : vector<2x32xf32>
    %698 = vector.extract_strided_slice %685 {offsets = [0, 64], sizes = [2, 32], strides = [1, 1]} : vector<2x128xf32> to vector<2x32xf32>
    %699 = math.tanh %698 : vector<2x32xf32>
    %700 = vector.extract_strided_slice %685 {offsets = [0, 96], sizes = [2, 32], strides = [1, 1]} : vector<2x128xf32> to vector<2x32xf32>
    %701 = arith.negf %700 : vector<2x32xf32>
    %702 = math.exp %701 : vector<2x32xf32>
    %cst_283 = arith.constant 1.000000e+00 : f32
    %703 = vector.broadcast %cst_283 : f32 to vector<2x32xf32>
    %704 = arith.addf %703, %702 : vector<2x32xf32>
    %705 = arith.divf %703, %704 : vector<2x32xf32>
    %706 = arith.mulf %697, %674 : vector<2x32xf32>
    %707 = arith.mulf %691, %699 : vector<2x32xf32>
    %708 = arith.addf %706, %707 : vector<2x32xf32>
    %709 = math.tanh %708 : vector<2x32xf32>
    %710 = arith.mulf %705, %709 : vector<2x32xf32>
    %711 = arith.index_cast %c7_i32_277 : i32 to index
    %c0_284 = arith.constant 0 : index
    %c0_285 = arith.constant 0 : index
    %712 = vector.load %arg9[%711, %c0_284, %c0_285] : memref<8x2x32xf32, #tpu.memory_space<vmem>>, vector<1x2x32xf32>
    %713 = vector.shape_cast %712 : vector<1x2x32xf32> to vector<2x32xf32>
    %714 = vector.shape_cast %710 : vector<2x32xf32> to vector<1x2x32xf32>
    tpu.vector_store %arg9[%711, %c0_284, %c0_285], %714 {strides = array<i32>} : memref<8x2x32xf32, #tpu.memory_space<vmem>>, vector<1x2x32xf32>,
    %c8_i32_286 = arith.constant 8 : i32
    %c0_287 = arith.constant 0 : index
    %c0_288 = arith.constant 0 : index
    %715 = vector.load %arg5[%c0_287, %c0_288] : memref<32x20xf32, #tpu.memory_space<vmem>>, vector<32x20xf32>
    %c0_289 = arith.constant 0 : index
    %c0_290 = arith.constant 0 : index
    %716 = vector.load %arg6[%c0_289, %c0_290] : memref<1x20xf32, #tpu.memory_space<vmem>>, vector<1x20xf32>
    %717 = vector.shape_cast %716 : vector<1x20xf32> to vector<1x20xf32>
    %718 = vector.broadcast %717 : vector<1x20xf32> to vector<2x20xf32>
    %c0_291 = arith.constant 0 : index
    %c0_292 = arith.constant 0 : index
    %c0_293 = arith.constant 0 : index
    %719 = vector.load %arg7[%c0_291, %c0_292, %c0_293] : memref<2x8x20xf32, #tpu.memory_space<vmem>>, vector<2x8x20xf32>
    %c0_294 = arith.constant 0 : index
    %c0_295 = arith.constant 0 : index
    %c0_296 = arith.constant 0 : index
    %720 = vector.load %arg9[%c0_294, %c0_295, %c0_296] : memref<8x2x32xf32, #tpu.memory_space<vmem>>, vector<1x2x32xf32>
    %721 = vector.shape_cast %720 : vector<1x2x32xf32> to vector<2x32xf32>
    %cst_297 = arith.constant 0.000000e+00 : f32
    %722 = vector.broadcast %cst_297 : f32 to vector<2x32xf32>
    %723 = arith.maximumf %721, %722 : vector<2x32xf32>
    %cst_298 = arith.constant dense<0.000000e+00> : vector<2x20xf32>
    %724 = tpu.matmul %723, %715, %cst_298 {dimension_numbers = #tpu.dot_dimension_numbers<[1], [0], [0], [1], [0, 0, 1, 1], [], []>} : vector<2x32xf32>, vector<32x20xf32>, vector<2x20xf32> -> vector<2x20xf32>
    %725 = arith.addf %724, %718 : vector<2x20xf32>
    %726 = vector.extract_strided_slice %719 {offsets = [0, 0, 0], sizes = [2, 1, 20], strides = [1, 1, 1]} : vector<2x8x20xf32> to vector<2x1x20xf32>
    %727 = vector.shape_cast %726 : vector<2x1x20xf32> to vector<2x20xf32>
    %728 = arith.addf %725, %727 : vector<2x20xf32>
    %729 = vector.shape_cast %728 : vector<2x20xf32> to vector<2x1x20xf32>
    %c0_299 = arith.constant 0 : index
    %c0_300 = arith.constant 0 : index
    %c0_301 = arith.constant 0 : index
    %730 = vector.load %arg8[%c0_299, %c0_300, %c0_301] : memref<2x8x20xf32, #tpu.memory_space<vmem>>, vector<2x1x20xf32>
    tpu.vector_store %arg8[%c0_299, %c0_300, %c0_301], %729 {strides = array<i32>} : memref<2x8x20xf32, #tpu.memory_space<vmem>>, vector<2x1x20xf32>,
    %c1_302 = arith.constant 1 : index
    %c0_303 = arith.constant 0 : index
    %c0_304 = arith.constant 0 : index
    %731 = vector.load %arg9[%c1_302, %c0_303, %c0_304] : memref<8x2x32xf32, #tpu.memory_space<vmem>>, vector<1x2x32xf32>
    %732 = vector.shape_cast %731 : vector<1x2x32xf32> to vector<2x32xf32>
    %cst_305 = arith.constant 0.000000e+00 : f32
    %733 = vector.broadcast %cst_305 : f32 to vector<2x32xf32>
    %734 = arith.maximumf %732, %733 : vector<2x32xf32>
    %cst_306 = arith.constant dense<0.000000e+00> : vector<2x20xf32>
    %735 = tpu.matmul %734, %715, %cst_306 {dimension_numbers = #tpu.dot_dimension_numbers<[1], [0], [0], [1], [0, 0, 1, 1], [], []>} : vector<2x32xf32>, vector<32x20xf32>, vector<2x20xf32> -> vector<2x20xf32>
    %736 = arith.addf %735, %718 : vector<2x20xf32>
    %737 = vector.extract_strided_slice %719 {offsets = [0, 1, 0], sizes = [2, 1, 20], strides = [1, 1, 1]} : vector<2x8x20xf32> to vector<2x1x20xf32>
    %738 = vector.shape_cast %737 : vector<2x1x20xf32> to vector<2x20xf32>
    %739 = arith.addf %736, %738 : vector<2x20xf32>
    %740 = vector.shape_cast %739 : vector<2x20xf32> to vector<2x1x20xf32>
    %c0_307 = arith.constant 0 : index
    %c1_308 = arith.constant 1 : index
    %c0_309 = arith.constant 0 : index
    %741 = vector.load %arg8[%c0_307, %c1_308, %c0_309] : memref<2x8x20xf32, #tpu.memory_space<vmem>>, vector<2x1x20xf32>
    tpu.vector_store %arg8[%c0_307, %c1_308, %c0_309], %740 {strides = array<i32>} : memref<2x8x20xf32, #tpu.memory_space<vmem>>, vector<2x1x20xf32>,
    %c2_310 = arith.constant 2 : index
    %c0_311 = arith.constant 0 : index
    %c0_312 = arith.constant 0 : index
    %742 = vector.load %arg9[%c2_310, %c0_311, %c0_312] : memref<8x2x32xf32, #tpu.memory_space<vmem>>, vector<1x2x32xf32>
    %743 = vector.shape_cast %742 : vector<1x2x32xf32> to vector<2x32xf32>
    %cst_313 = arith.constant 0.000000e+00 : f32
    %744 = vector.broadcast %cst_313 : f32 to vector<2x32xf32>
    %745 = arith.maximumf %743, %744 : vector<2x32xf32>
    %cst_314 = arith.constant dense<0.000000e+00> : vector<2x20xf32>
    %746 = tpu.matmul %745, %715, %cst_314 {dimension_numbers = #tpu.dot_dimension_numbers<[1], [0], [0], [1], [0, 0, 1, 1], [], []>} : vector<2x32xf32>, vector<32x20xf32>, vector<2x20xf32> -> vector<2x20xf32>
    %747 = arith.addf %746, %718 : vector<2x20xf32>
    %748 = vector.extract_strided_slice %719 {offsets = [0, 2, 0], sizes = [2, 1, 20], strides = [1, 1, 1]} : vector<2x8x20xf32> to vector<2x1x20xf32>
    %749 = vector.shape_cast %748 : vector<2x1x20xf32> to vector<2x20xf32>
    %750 = arith.addf %747, %749 : vector<2x20xf32>
    %751 = vector.shape_cast %750 : vector<2x20xf32> to vector<2x1x20xf32>
    %c0_315 = arith.constant 0 : index
    %c2_316 = arith.constant 2 : index
    %c0_317 = arith.constant 0 : index
    %752 = vector.load %arg8[%c0_315, %c2_316, %c0_317] : memref<2x8x20xf32, #tpu.memory_space<vmem>>, vector<2x1x20xf32>
    tpu.vector_store %arg8[%c0_315, %c2_316, %c0_317], %751 {strides = array<i32>} : memref<2x8x20xf32, #tpu.memory_space<vmem>>, vector<2x1x20xf32>,
    %c3_318 = arith.constant 3 : index
    %c0_319 = arith.constant 0 : index
    %c0_320 = arith.constant 0 : index
    %753 = vector.load %arg9[%c3_318, %c0_319, %c0_320] : memref<8x2x32xf32, #tpu.memory_space<vmem>>, vector<1x2x32xf32>
    %754 = vector.shape_cast %753 : vector<1x2x32xf32> to vector<2x32xf32>
    %cst_321 = arith.constant 0.000000e+00 : f32
    %755 = vector.broadcast %cst_321 : f32 to vector<2x32xf32>
    %756 = arith.maximumf %754, %755 : vector<2x32xf32>
    %cst_322 = arith.constant dense<0.000000e+00> : vector<2x20xf32>
    %757 = tpu.matmul %756, %715, %cst_322 {dimension_numbers = #tpu.dot_dimension_numbers<[1], [0], [0], [1], [0, 0, 1, 1], [], []>} : vector<2x32xf32>, vector<32x20xf32>, vector<2x20xf32> -> vector<2x20xf32>
    %758 = arith.addf %757, %718 : vector<2x20xf32>
    %759 = vector.extract_strided_slice %719 {offsets = [0, 3, 0], sizes = [2, 1, 20], strides = [1, 1, 1]} : vector<2x8x20xf32> to vector<2x1x20xf32>
    %760 = vector.shape_cast %759 : vector<2x1x20xf32> to vector<2x20xf32>
    %761 = arith.addf %758, %760 : vector<2x20xf32>
    %762 = vector.shape_cast %761 : vector<2x20xf32> to vector<2x1x20xf32>
    %c0_323 = arith.constant 0 : index
    %c3_324 = arith.constant 3 : index
    %c0_325 = arith.constant 0 : index
    %763 = vector.load %arg8[%c0_323, %c3_324, %c0_325] : memref<2x8x20xf32, #tpu.memory_space<vmem>>, vector<2x1x20xf32>
    tpu.vector_store %arg8[%c0_323, %c3_324, %c0_325], %762 {strides = array<i32>} : memref<2x8x20xf32, #tpu.memory_space<vmem>>, vector<2x1x20xf32>,
    %c4_326 = arith.constant 4 : index
    %c0_327 = arith.constant 0 : index
    %c0_328 = arith.constant 0 : index
    %764 = vector.load %arg9[%c4_326, %c0_327, %c0_328] : memref<8x2x32xf32, #tpu.memory_space<vmem>>, vector<1x2x32xf32>
    %765 = vector.shape_cast %764 : vector<1x2x32xf32> to vector<2x32xf32>
    %cst_329 = arith.constant 0.000000e+00 : f32
    %766 = vector.broadcast %cst_329 : f32 to vector<2x32xf32>
    %767 = arith.maximumf %765, %766 : vector<2x32xf32>
    %cst_330 = arith.constant dense<0.000000e+00> : vector<2x20xf32>
    %768 = tpu.matmul %767, %715, %cst_330 {dimension_numbers = #tpu.dot_dimension_numbers<[1], [0], [0], [1], [0, 0, 1, 1], [], []>} : vector<2x32xf32>, vector<32x20xf32>, vector<2x20xf32> -> vector<2x20xf32>
    %769 = arith.addf %768, %718 : vector<2x20xf32>
    %770 = vector.extract_strided_slice %719 {offsets = [0, 4, 0], sizes = [2, 1, 20], strides = [1, 1, 1]} : vector<2x8x20xf32> to vector<2x1x20xf32>
    %771 = vector.shape_cast %770 : vector<2x1x20xf32> to vector<2x20xf32>
    %772 = arith.addf %769, %771 : vector<2x20xf32>
    %773 = vector.shape_cast %772 : vector<2x20xf32> to vector<2x1x20xf32>
    %c0_331 = arith.constant 0 : index
    %c4_332 = arith.constant 4 : index
    %c0_333 = arith.constant 0 : index
    %774 = vector.load %arg8[%c0_331, %c4_332, %c0_333] : memref<2x8x20xf32, #tpu.memory_space<vmem>>, vector<2x1x20xf32>
    tpu.vector_store %arg8[%c0_331, %c4_332, %c0_333], %773 {strides = array<i32>} : memref<2x8x20xf32, #tpu.memory_space<vmem>>, vector<2x1x20xf32>,
    %c5_334 = arith.constant 5 : index
    %c0_335 = arith.constant 0 : index
    %c0_336 = arith.constant 0 : index
    %775 = vector.load %arg9[%c5_334, %c0_335, %c0_336] : memref<8x2x32xf32, #tpu.memory_space<vmem>>, vector<1x2x32xf32>
    %776 = vector.shape_cast %775 : vector<1x2x32xf32> to vector<2x32xf32>
    %cst_337 = arith.constant 0.000000e+00 : f32
    %777 = vector.broadcast %cst_337 : f32 to vector<2x32xf32>
    %778 = arith.maximumf %776, %777 : vector<2x32xf32>
    %cst_338 = arith.constant dense<0.000000e+00> : vector<2x20xf32>
    %779 = tpu.matmul %778, %715, %cst_338 {dimension_numbers = #tpu.dot_dimension_numbers<[1], [0], [0], [1], [0, 0, 1, 1], [], []>} : vector<2x32xf32>, vector<32x20xf32>, vector<2x20xf32> -> vector<2x20xf32>
    %780 = arith.addf %779, %718 : vector<2x20xf32>
    %781 = vector.extract_strided_slice %719 {offsets = [0, 5, 0], sizes = [2, 1, 20], strides = [1, 1, 1]} : vector<2x8x20xf32> to vector<2x1x20xf32>
    %782 = vector.shape_cast %781 : vector<2x1x20xf32> to vector<2x20xf32>
    %783 = arith.addf %780, %782 : vector<2x20xf32>
    %784 = vector.shape_cast %783 : vector<2x20xf32> to vector<2x1x20xf32>
    %c0_339 = arith.constant 0 : index
    %c5_340 = arith.constant 5 : index
    %c0_341 = arith.constant 0 : index
    %785 = vector.load %arg8[%c0_339, %c5_340, %c0_341] : memref<2x8x20xf32, #tpu.memory_space<vmem>>, vector<2x1x20xf32>
    tpu.vector_store %arg8[%c0_339, %c5_340, %c0_341], %784 {strides = array<i32>} : memref<2x8x20xf32, #tpu.memory_space<vmem>>, vector<2x1x20xf32>,
    %c6_342 = arith.constant 6 : index
    %c0_343 = arith.constant 0 : index
    %c0_344 = arith.constant 0 : index
    %786 = vector.load %arg9[%c6_342, %c0_343, %c0_344] : memref<8x2x32xf32, #tpu.memory_space<vmem>>, vector<1x2x32xf32>
    %787 = vector.shape_cast %786 : vector<1x2x32xf32> to vector<2x32xf32>
    %cst_345 = arith.constant 0.000000e+00 : f32
    %788 = vector.broadcast %cst_345 : f32 to vector<2x32xf32>
    %789 = arith.maximumf %787, %788 : vector<2x32xf32>
    %cst_346 = arith.constant dense<0.000000e+00> : vector<2x20xf32>
    %790 = tpu.matmul %789, %715, %cst_346 {dimension_numbers = #tpu.dot_dimension_numbers<[1], [0], [0], [1], [0, 0, 1, 1], [], []>} : vector<2x32xf32>, vector<32x20xf32>, vector<2x20xf32> -> vector<2x20xf32>
    %791 = arith.addf %790, %718 : vector<2x20xf32>
    %792 = vector.extract_strided_slice %719 {offsets = [0, 6, 0], sizes = [2, 1, 20], strides = [1, 1, 1]} : vector<2x8x20xf32> to vector<2x1x20xf32>
    %793 = vector.shape_cast %792 : vector<2x1x20xf32> to vector<2x20xf32>
    %794 = arith.addf %791, %793 : vector<2x20xf32>
    %795 = vector.shape_cast %794 : vector<2x20xf32> to vector<2x1x20xf32>
    %c0_347 = arith.constant 0 : index
    %c6_348 = arith.constant 6 : index
    %c0_349 = arith.constant 0 : index
    %796 = vector.load %arg8[%c0_347, %c6_348, %c0_349] : memref<2x8x20xf32, #tpu.memory_space<vmem>>, vector<2x1x20xf32>
    tpu.vector_store %arg8[%c0_347, %c6_348, %c0_349], %795 {strides = array<i32>} : memref<2x8x20xf32, #tpu.memory_space<vmem>>, vector<2x1x20xf32>,
    %c7_350 = arith.constant 7 : index
    %c0_351 = arith.constant 0 : index
    %c0_352 = arith.constant 0 : index
    %797 = vector.load %arg9[%c7_350, %c0_351, %c0_352] : memref<8x2x32xf32, #tpu.memory_space<vmem>>, vector<1x2x32xf32>
    %798 = vector.shape_cast %797 : vector<1x2x32xf32> to vector<2x32xf32>
    %cst_353 = arith.constant 0.000000e+00 : f32
    %799 = vector.broadcast %cst_353 : f32 to vector<2x32xf32>
    %800 = arith.maximumf %798, %799 : vector<2x32xf32>
    %cst_354 = arith.constant dense<0.000000e+00> : vector<2x20xf32>
    %801 = tpu.matmul %800, %715, %cst_354 {dimension_numbers = #tpu.dot_dimension_numbers<[1], [0], [0], [1], [0, 0, 1, 1], [], []>} : vector<2x32xf32>, vector<32x20xf32>, vector<2x20xf32> -> vector<2x20xf32>
    %802 = arith.addf %801, %718 : vector<2x20xf32>
    %803 = vector.extract_strided_slice %719 {offsets = [0, 7, 0], sizes = [2, 1, 20], strides = [1, 1, 1]} : vector<2x8x20xf32> to vector<2x1x20xf32>
    %804 = vector.shape_cast %803 : vector<2x1x20xf32> to vector<2x20xf32>
    %805 = arith.addf %802, %804 : vector<2x20xf32>
    %806 = vector.shape_cast %805 : vector<2x20xf32> to vector<2x1x20xf32>
    %c0_355 = arith.constant 0 : index
    %c7_356 = arith.constant 7 : index
    %c0_357 = arith.constant 0 : index
    %807 = vector.load %arg8[%c0_355, %c7_356, %c0_357] : memref<2x8x20xf32, #tpu.memory_space<vmem>>, vector<2x1x20xf32>
    tpu.vector_store %arg8[%c0_355, %c7_356, %c0_357], %806 {strides = array<i32>} : memref<2x8x20xf32, #tpu.memory_space<vmem>>, vector<2x1x20xf32>,
    return
  }
  func.func @transform_0(%arg0: i32) -> (i32, i32, i32) {
    %c0_i32 = arith.constant 0 : i32
    %c0_i32_0 = arith.constant 0 : i32
    %c0_i32_1 = arith.constant 0 : i32
    return %arg0, %c0_i32, %c0_i32_0 : i32, i32, i32
  }
  func.func @transform_1(%arg0: i32) -> (i32, i32, i32) {
    %c0_i32 = arith.constant 0 : i32
    %c0_i32_0 = arith.constant 0 : i32
    %c0_i32_1 = arith.constant 0 : i32
    %c0_i32_2 = arith.constant 0 : i32
    return %c0_i32, %c0_i32_0, %c0_i32_1 : i32, i32, i32
  }
  func.func @transform_2(%arg0: i32) -> (i32, i32, i32) {
    %c0_i32 = arith.constant 0 : i32
    %c0_i32_0 = arith.constant 0 : i32
    %c0_i32_1 = arith.constant 0 : i32
    %c0_i32_2 = arith.constant 0 : i32
    return %c0_i32, %c0_i32_0, %c0_i32_1 : i32, i32, i32
  }
  func.func @transform_3(%arg0: i32) -> (i32, i32, i32) {
    %c0_i32 = arith.constant 0 : i32
    %c0_i32_0 = arith.constant 0 : i32
    %c0_i32_1 = arith.constant 0 : i32
    %c0_i32_2 = arith.constant 0 : i32
    return %c0_i32, %c0_i32_0, %c0_i32_1 : i32, i32, i32
  }
  func.func @transform_4(%arg0: i32) -> (i32, i32) {
    %c0_i32 = arith.constant 0 : i32
    %c0_i32_0 = arith.constant 0 : i32
    %c0_i32_1 = arith.constant 0 : i32
    return %c0_i32, %c0_i32_0 : i32, i32
  }
  func.func @transform_5(%arg0: i32) -> (i32, i32) {
    %c0_i32 = arith.constant 0 : i32
    %c0_i32_0 = arith.constant 0 : i32
    %c0_i32_1 = arith.constant 0 : i32
    return %c0_i32, %c0_i32_0 : i32, i32
  }
  func.func @transform_6(%arg0: i32) -> (i32, i32, i32) {
    %c0_i32 = arith.constant 0 : i32
    %c0_i32_0 = arith.constant 0 : i32
    %c0_i32_1 = arith.constant 0 : i32
    return %arg0, %c0_i32, %c0_i32_0 : i32, i32, i32
  }
  func.func @transform_7(%arg0: i32) -> (i32, i32, i32) {
    %c0_i32 = arith.constant 0 : i32
    %c0_i32_0 = arith.constant 0 : i32
    %c0_i32_1 = arith.constant 0 : i32
    return %arg0, %c0_i32, %c0_i32_0 : i32, i32, i32
  }
}

</mosaic_0001>

<llo_original>
// kernel: tpu_custom_call.1
$region0: #{tpu_custom_call.1}
  #allocation0 [shape = 'u32[]', space=smem, size = 0x4, offset = 0x4, fixed_abs, tag = 'smem constant byte address 0x4 - core index']
  #allocation1 [shape = 'u32[144,128]{1,0:T(1,128)}', space=vmem, size = 0x12000, scoped, tag = 'internal scratch']
  #allocation2 [shape = 'f32[8,2,32]{2,1,0:T(2,128)}', space=vmem, size = 0x2000, scoped, tag = 'scratch operand']
  #allocation3 [shape = 'f32[8,2,128]{2,1,0:T(2,128)}', space=vmem, size = 0x2000, scoped, tag = 'scratch operand']
  %s0 = inlined_call_operand.vmem [shape: f32[2,8,32], index: 0, kind: input, shape index: {}]
  %s1 = inlined_call_operand.hbm [shape: f32[2,32,128], index: 1, kind: input, shape index: {}]
  %s2 = inlined_call_operand.hbm [shape: f32[2,32,128], index: 2, kind: input, shape index: {}]
  %s3 = inlined_call_operand.vmem [shape: f32[2,1,128], index: 3, kind: input, shape index: {}]
  %s4 = inlined_call_operand.vmem [shape: f32[32,20], index: 4, kind: input, shape index: {}]
  %s5 = inlined_call_operand.vmem [shape: f32[1,20], index: 5, kind: input, shape index: {}]
  %s6 = inlined_call_operand.vmem [shape: f32[2,8,20], index: 6, kind: input, shape index: {}]
  %s7 = inlined_call_operand.hbm [shape: f32[2,8,20], index: 7, kind: output, shape index: {}]
  %s8 = sld [smem:[#allocation0]]
  $region46: #{tpu_custom_call.1} parent=0
    _
  %s10 = ssub.s32 1, %s8
  %s11 = scalar_select 0, %s10, %s8
  $region1: #{tpu_custom_call.1} parent=0
    #allocation4 [shape = 'u8[32768]{0}', space=vmem, size = 0x8000, scoped, tag = 'input window, operand 1, single buffered']
    #allocation5 [shape = 's32[1]{0}', space=sflag, size = 0x4, scoped, tag = 'scoped memory for tpu_custom_call.1']
    #allocation6 [shape = 's32[1]{0}', space=sflag, size = 0x4, scoped, tag = 'scoped memory for tpu_custom_call.1']
    #allocation7 [shape = 'u8[32768]{0}', space=vmem, size = 0x8000, scoped, tag = 'input window, operand 2, single buffered']
    #allocation8 [shape = 's32[1]{0}', space=sflag, size = 0x4, scoped, tag = 'scoped memory for tpu_custom_call.1']
    #allocation9 [shape = 'u8[8192]{0}', space=vmem, size = 0x2000, scoped, tag = 'output window, operand 0, single buffered']
    %12 = vsyncpa [#allocation5], 0
    %13 = vsyncpa [#allocation8], 0
    %14 = vsyncpa [#allocation6], 0
    // Predicated region
    $region2: #{tpu_custom_call.1} parent=1 // pred_check
      _
    $region3: #{tpu_custom_call.1} parent=1 // pred_check_branch
      %16 = sbr.rel (0) target = $region5
    $region4: #{tpu_custom_call.1} parent=1 // pred_region
      _
    $region5: #{tpu_custom_call.1} parent=1 // pred_fallthru
      _
    // Predicated region
    $region6: #{tpu_custom_call.1} parent=1 // pred_check
      _
    $region7: #{tpu_custom_call.1} parent=1 // pred_check_branch
      %18 = sbr.rel (0) target = $region9
    $region8: #{tpu_custom_call.1} parent=1 // pred_region
      %s20 = ssub.s32 1024, 1024
      %21 = vsyncadd [#allocation5], %s20
      %s22 = sshll.u32 [#allocation4], 4
      %s23 = int_to_ptr.vmem [resolvable:$true] %s22
      %28 = dma.hbm_to_vmem [thread:$0]  %s1, 1024, %s23, [#allocation5], 128, 128, 8
    $region9: #{tpu_custom_call.1} parent=1 // pred_fallthru
      _
    // Predicated region
    $region10: #{tpu_custom_call.1} parent=1 // pred_check
      _
    $region11: #{tpu_custom_call.1} parent=1 // pred_check_branch
      %30 = sbr.rel (0) target = $region13
    $region12: #{tpu_custom_call.1} parent=1 // pred_region
      %s32 = ssub.s32 1024, 1024
      %33 = vsyncadd [#allocation8], %s32
      %s34 = sshll.u32 [#allocation7], 4
      %s35 = int_to_ptr.vmem [resolvable:$true] %s34
      %40 = dma.hbm_to_vmem [thread:$0]  %s2, 1024, %s35, [#allocation8], 128, 128, 8
    $region13: #{tpu_custom_call.1} parent=1 // pred_fallthru
      _
    // Predicated region
    $region14: #{tpu_custom_call.1} parent=1 // pred_check
      _
    $region15: #{tpu_custom_call.1} parent=1 // pred_check_branch
      %42 = sbr.rel (0) target = $region17
    $region16: #{tpu_custom_call.1} parent=1 // pred_region
      _
    $region17: #{tpu_custom_call.1} parent=1 // pred_fallthru
      _
    // Predicated region
    $region18: #{tpu_custom_call.1} parent=1 // pred_check
      _
    $region19: #{tpu_custom_call.1} parent=1 // pred_check_branch
      %44 = sbr.rel (0) target = $region21
    $region20: #{tpu_custom_call.1} parent=1 // pred_region
      _
    $region21: #{tpu_custom_call.1} parent=1 // pred_fallthru
      _
    // Predicated region
    $region22: #{tpu_custom_call.1} parent=1 // pred_check
      _
    $region23: #{tpu_custom_call.1} parent=1 // pred_check_branch
      %46 = sbr.rel (0) target = $region25
    $region24: #{tpu_custom_call.1} parent=1 // pred_region
      _
    $region25: #{tpu_custom_call.1} parent=1 // pred_fallthru
      _
    // Predicated region
    $region26: #{tpu_custom_call.1} parent=1 // pred_check
      _
    $region27: #{tpu_custom_call.1} parent=1 // pred_check_branch
      %48 = sbr.rel (0) target = $region29
    $region28: #{tpu_custom_call.1} parent=1 // pred_region
      _
    $region29: #{tpu_custom_call.1} parent=1 // pred_fallthru
      _
    // Predicated region
    $region30: #{tpu_custom_call.1} parent=1 // pred_check
      _
    $region31: #{tpu_custom_call.1} parent=1 // pred_check_branch
      %50 = sbr.rel (0) target = $region33
    $region32: #{tpu_custom_call.1} parent=1 // pred_region
      %51 = dma.done [#allocation5], 1024
    $region33: #{tpu_custom_call.1} parent=1 // pred_fallthru
      _
    // Predicated region
    $region34: #{tpu_custom_call.1} parent=1 // pred_check
      _
    $region35: #{tpu_custom_call.1} parent=1 // pred_check_branch
      %53 = sbr.rel (0) target = $region37
    $region36: #{tpu_custom_call.1} parent=1 // pred_region
      %54 = dma.done [#allocation8], 1024
    $region37: #{tpu_custom_call.1} parent=1 // pred_fallthru
      _
    %v55 = vld [vmem:[%s0] sm:$0xff]
    %v56 = vld [vmem:[%s0 + $0x8] sm:$0xff]
    %v59 = vrot.slane %v56, 7
    %vm60 = vcmask 1041409
    %v61 = vsel %vm60, %v59, %v55
    %vm63 = vcmask 254976
    %64 = vst.msk [vmem:[#allocation2] sm:$0x3] %vm63, %v61
    %vm65 = vcmask 1042434
    %v66 = vsel %vm65, %v59, %v55
    %s68 = scalar_lea.vmem [#allocation2], 2
    %vm69 = vcmask 256001
    %70 = vst.msk [vmem:[%s68 - $0x1] sm:$0x6] %vm69, %v66
    %vm71 = vcmask 1043459
    %v72 = vsel %vm71, %v59, %v55
    %s74 = scalar_lea.vmem [#allocation2], 4
    %vm75 = vcmask 257026
    %76 = vst.msk [vmem:[%s74 - $0x2] sm:$0xc] %vm75, %v72
    %vm77 = vcmask 1044484
    %v78 = vsel %vm77, %v59, %v55
    %s80 = scalar_lea.vmem [#allocation2], 6
    %vm81 = vcmask 258051
    %82 = vst.msk [vmem:[%s80 - $0x3] sm:$0x18] %vm81, %v78
    %vm83 = vcmask 1045509
    %v84 = vsel %vm83, %v59, %v55
    %s86 = scalar_lea.vmem [#allocation2], 8
    %vm87 = vcmask 259076
    %88 = vst.msk [vmem:[%s86 - $0x4] sm:$0x30] %vm87, %v84
    %vm89 = vcmask 1046534
    %v90 = vsel %vm89, %v59, %v55
    %s92 = scalar_lea.vmem [#allocation2], 10
    %vm93 = vcmask 260101
    %94 = vst.msk [vmem:[%s92 - $0x5] sm:$0x60] %vm93, %v90
    %vm95 = vcmask 1047559
    %v96 = vsel %vm95, %v59, %v55
    %s98 = scalar_lea.vmem [#allocation2], 12
    %vm99 = vcmask 261126
    %100 = vst.msk [vmem:[%s98 - $0x6] sm:$0xc0] %vm99, %v96
    %s103 = scalar_lea.vmem [#allocation2], 14
    %vm104 = vcmask 261127
    %105 = vst.msk [vmem:[%s103 - $0x7] sm:$0x80] %vm104, %v55
    %vm106 = vcmask 253952
    %107 = vst.msk [vmem:[%s103 + $0x1] sm:$0x1] %vm106, %v59
    %v108 = vld [vmem:[#allocation4] sm:$0xff]
    %v109 = vld [vmem:[#allocation4 + $0x8] sm:$0xff]
    %v110 = vld [vmem:[#allocation4 + $0x10] sm:$0xff]
    %v111 = vld [vmem:[#allocation4 + $0x18] sm:$0xff]
    %v112 = vld [vmem:[#allocation7] sm:$0xff]
    %v113 = vld [vmem:[#allocation7 + $0x8] sm:$0xff]
    %v114 = vld [vmem:[#allocation7 + $0x10] sm:$0xff]
    %v115 = vld [vmem:[#allocation7 + $0x18] sm:$0xff]
    %v116 = vld [vmem:[%s3] sm:$0x1]
    %v118 = vlaneseq
    %v119 = vshrl.u32 %v118, 7
    %v120 = vsub.s32 0, %v119
    %v121 = vrot.slane %v116, %v120
    %v123 = vld [vmem:[#allocation2] sm:$0x3]
    %vm124 = vcmask 261120
    %v126 = vsel %vm124, %v123, 0
    %128 = vmatprep.subr.mxu0 0.0
    %129 = vmatpush1.msra.mxu0 %v108
    %130 = vmatprep.subr.mxu0 0.0
    %131 = vmatpush1.msra.mxu0 %v109
    %132 = vmatprep.subr.mxu0 0.0
    %133 = vmatpush1.msra.mxu0 %v110
    %134 = vmatprep.subr.mxu0 0.0
    %135 = vmatpush1.msra.mxu0 %v111
    %136 = vmatprep.subr.mxu0 0.0
    %137 = vmatpush1.msra.mxu0 0.0
    %138 = vmatprep.subr.mxu0 0.0
    %139 = vmatpush1.msra.mxu0 0.0
    %140 = vmatprep.subr.mxu0 0.0
    %141 = vmatpush1.msra.mxu0 0.0
    %142 = vmatprep.subr.mxu0 0.0
    %143 = vmatpush1.msra.mxu0 0.0
    %144 = vmatprep.subr.mxu0 0.0
    %145 = vmatpush1.msra.mxu0 0.0
    %146 = vmatprep.subr.mxu0 0.0
    %147 = vmatpush1.msra.mxu0 0.0
    %148 = vmatprep.subr.mxu0 0.0
    %149 = vmatpush1.msra.mxu0 0.0
    %150 = vmatprep.subr.mxu0 0.0
    %151 = vmatpush1.msra.mxu0 0.0
    %152 = vmatprep.subr.mxu0 0.0
    %153 = vmatpush1.msra.mxu0 0.0
    %154 = vmatprep.subr.mxu0 0.0
    %155 = vmatpush1.msra.mxu0 0.0
    %156 = vmatprep.subr.mxu0 0.0
    %157 = vmatpush1.msra.mxu0 0.0
    %158 = vmatprep.subr.mxu0 0.0
    %159 = vmatpush1.msra.mxu0 0.0
    %160 = vmatprep.subr.mxu0 0.0
    %161 = vmatpush1.msra.mxu0 0.0
    %162 = vmatprep.subr.mxu0 0.0
    %163 = vmatpush1.msra.mxu0 0.0
    %164 = vmatprep.subr.mxu0 0.0
    %165 = vmatpush1.msra.mxu0 0.0
    %166 = vmatprep.subr.mxu0 0.0
    %167 = vmatpush1.msra.mxu0 0.0
    %168 = vmatprep.subr.mxu0 0.0
    %169 = vmatpush1.msra.mxu0 0.0
    %170 = vmatprep.subr.mxu0 0.0
    %171 = vmatpush1.msra.mxu0 0.0
    %172 = vmatprep.subr.mxu0 0.0
    %173 = vmatpush1.msra.mxu0 0.0
    %174 = vmatprep.subr.mxu0 0.0
    %175 = vmatpush1.msra.mxu0 0.0
    %176 = vmatprep.subr.mxu0 0.0
    %177 = vmatpush1.msra.mxu0 0.0
    %178 = vmatprep.subr.mxu0 0.0
    %179 = vmatpush1.msra.mxu0 0.0
    %180 = vmatprep.subr.mxu0 0.0
    %181 = vmatpush1.msra.mxu0 0.0
    %182 = vmatprep.subr.mxu0 0.0
    %183 = vmatpush1.msra.mxu0 0.0
    %184 = vmatprep.subr.mxu0 0.0
    %185 = vmatpush1.msra.mxu0 0.0
    %186 = vmatprep.subr.mxu0 0.0
    %187 = vmatpush1.msra.mxu0 0.0
    %188 = vmatprep.subr.mxu0 0.0
    %189 = vmatpush1.msra.mxu0 0.0
    %190 = vmatprep.subr.mxu0 0.0
    %191 = vmatpush1.msra.mxu0 0.0
    %192 = vmatprep.mubr.f32.mxu0 0.0
    %193 = vmatmul.mubr.f32.gmra.mrb[0].mxu0 %v126
    %v194 = vpop.f32.mrb[0].mxu0
    %v195 = vadd.f32 %v121, %v194
    %v196 = vpop.f32.mrb[0].mxu0
    %197 = vdwg.mxu0
    %198 = vst [vmem:[#allocation3] sm:$0x3] %v195
    %v199 = vld [vmem:[%s68] sm:$0x3]
    %v201 = vsel %vm124, %v199, 0
    %203 = vmatprep.subr.mxu0 0.0
    %204 = vmatpush1.msra.mxu0 %v108
    %205 = vmatprep.subr.mxu0 0.0
    %206 = vmatpush1.msra.mxu0 %v109
    %207 = vmatprep.subr.mxu0 0.0
    %208 = vmatpush1.msra.mxu0 %v110
    %209 = vmatprep.subr.mxu0 0.0
    %210 = vmatpush1.msra.mxu0 %v111
    %211 = vmatprep.subr.mxu0 0.0
    %212 = vmatpush1.msra.mxu0 0.0
    %213 = vmatprep.subr.mxu0 0.0
    %214 = vmatpush1.msra.mxu0 0.0
    %215 = vmatprep.subr.mxu0 0.0
    %216 = vmatpush1.msra.mxu0 0.0
    %217 = vmatprep.subr.mxu0 0.0
    %218 = vmatpush1.msra.mxu0 0.0
    %219 = vmatprep.subr.mxu0 0.0
    %220 = vmatpush1.msra.mxu0 0.0
    %221 = vmatprep.subr.mxu0 0.0
    %222 = vmatpush1.msra.mxu0 0.0
    %223 = vmatprep.subr.mxu0 0.0
    %224 = vmatpush1.msra.mxu0 0.0
    %225 = vmatprep.subr.mxu0 0.0
    %226 = vmatpush1.msra.mxu0 0.0
    %227 = vmatprep.subr.mxu0 0.0
    %228 = vmatpush1.msra.mxu0 0.0
    %229 = vmatprep.subr.mxu0 0.0
    %230 = vmatpush1.msra.mxu0 0.0
    %231 = vmatprep.subr.mxu0 0.0
    %232 = vmatpush1.msra.mxu0 0.0
    %233 = vmatprep.subr.mxu0 0.0
    %234 = vmatpush1.msra.mxu0 0.0
    %235 = vmatprep.subr.mxu0 0.0
    %236 = vmatpush1.msra.mxu0 0.0
    %237 = vmatprep.subr.mxu0 0.0
    %238 = vmatpush1.msra.mxu0 0.0
    %239 = vmatprep.subr.mxu0 0.0
    %240 = vmatpush1.msra.mxu0 0.0
    %241 = vmatprep.subr.mxu0 0.0
    %242 = vmatpush1.msra.mxu0 0.0
    %243 = vmatprep.subr.mxu0 0.0
    %244 = vmatpush1.msra.mxu0 0.0
    %245 = vmatprep.subr.mxu0 0.0
    %246 = vmatpush1.msra.mxu0 0.0
    %247 = vmatprep.subr.mxu0 0.0
    %248 = vmatpush1.msra.mxu0 0.0
    %249 = vmatprep.subr.mxu0 0.0
    %250 = vmatpush1.msra.mxu0 0.0
    %251 = vmatprep.subr.mxu0 0.0
    %252 = vmatpush1.msra.mxu0 0.0
    %253 = vmatprep.subr.mxu0 0.0
    %254 = vmatpush1.msra.mxu0 0.0
    %255 = vmatprep.subr.mxu0 0.0
    %256 = vmatpush1.msra.mxu0 0.0
    %257 = vmatprep.subr.mxu0 0.0
    %258 = vmatpush1.msra.mxu0 0.0
    %259 = vmatprep.subr.mxu0 0.0
    %260 = vmatpush1.msra.mxu0 0.0
    %261 = vmatprep.subr.mxu0 0.0
    %262 = vmatpush1.msra.mxu0 0.0
    %263 = vmatprep.subr.mxu0 0.0
    %264 = vmatpush1.msra.mxu0 0.0
    %265 = vmatprep.subr.mxu0 0.0
    %266 = vmatpush1.msra.mxu0 0.0
    %267 = vmatprep.mubr.f32.mxu0 0.0
    %268 = vmatmul.mubr.f32.gmra.mrb[0].mxu0 %v201
    %v269 = vpop.f32.mrb[0].mxu0
    %v270 = vadd.f32 %v121, %v269
    %v271 = vpop.f32.mrb[0].mxu0
    %272 = vdwg.mxu0
    %s273 = scalar_lea.vmem [#allocation3], 2
    %274 = vst [vmem:[%s273] sm:$0x3] %v270
    %v275 = vld [vmem:[%s74] sm:$0x3]
    %v277 = vsel %vm124, %v275, 0
    %279 = vmatprep.subr.mxu0 0.0
    %280 = vmatpush1.msra.mxu0 %v108
    %281 = vmatprep.subr.mxu0 0.0
    %282 = vmatpush1.msra.mxu0 %v109
    %283 = vmatprep.subr.mxu0 0.0
    %284 = vmatpush1.msra.mxu0 %v110
    %285 = vmatprep.subr.mxu0 0.0
    %286 = vmatpush1.msra.mxu0 %v111
    %287 = vmatprep.subr.mxu0 0.0
    %288 = vmatpush1.msra.mxu0 0.0
    %289 = vmatprep.subr.mxu0 0.0
    %290 = vmatpush1.msra.mxu0 0.0
    %291 = vmatprep.subr.mxu0 0.0
    %292 = vmatpush1.msra.mxu0 0.0
    %293 = vmatprep.subr.mxu0 0.0
    %294 = vmatpush1.msra.mxu0 0.0
    %295 = vmatprep.subr.mxu0 0.0
    %296 = vmatpush1.msra.mxu0 0.0
    %297 = vmatprep.subr.mxu0 0.0
    %298 = vmatpush1.msra.mxu0 0.0
    %299 = vmatprep.subr.mxu0 0.0
    %300 = vmatpush1.msra.mxu0 0.0
    %301 = vmatprep.subr.mxu0 0.0
    %302 = vmatpush1.msra.mxu0 0.0
    %303 = vmatprep.subr.mxu0 0.0
    %304 = vmatpush1.msra.mxu0 0.0
    %305 = vmatprep.subr.mxu0 0.0
    %306 = vmatpush1.msra.mxu0 0.0
    %307 = vmatprep.subr.mxu0 0.0
    %308 = vmatpush1.msra.mxu0 0.0
    %309 = vmatprep.subr.mxu0 0.0
    %310 = vmatpush1.msra.mxu0 0.0
    %311 = vmatprep.subr.mxu0 0.0
    %312 = vmatpush1.msra.mxu0 0.0
    %313 = vmatprep.subr.mxu0 0.0
    %314 = vmatpush1.msra.mxu0 0.0
    %315 = vmatprep.subr.mxu0 0.0
    %316 = vmatpush1.msra.mxu0 0.0
    %317 = vmatprep.subr.mxu0 0.0
    %318 = vmatpush1.msra.mxu0 0.0
    %319 = vmatprep.subr.mxu0 0.0
    %320 = vmatpush1.msra.mxu0 0.0
    %321 = vmatprep.subr.mxu0 0.0
    %322 = vmatpush1.msra.mxu0 0.0
    %323 = vmatprep.subr.mxu0 0.0
    %324 = vmatpush1.msra.mxu0 0.0
    %325 = vmatprep.subr.mxu0 0.0
    %326 = vmatpush1.msra.mxu0 0.0
    %327 = vmatprep.subr.mxu0 0.0
    %328 = vmatpush1.msra.mxu0 0.0
    %329 = vmatprep.subr.mxu0 0.0
    %330 = vmatpush1.msra.mxu0 0.0
    %331 = vmatprep.subr.mxu0 0.0
    %332 = vmatpush1.msra.mxu0 0.0
    %333 = vmatprep.subr.mxu0 0.0
    %334 = vmatpush1.msra.mxu0 0.0
    %335 = vmatprep.subr.mxu0 0.0
    %336 = vmatpush1.msra.mxu0 0.0
    %337 = vmatprep.subr.mxu0 0.0
    %338 = vmatpush1.msra.mxu0 0.0
    %339 = vmatprep.subr.mxu0 0.0
    %340 = vmatpush1.msra.mxu0 0.0
    %341 = vmatprep.subr.mxu0 0.0
    %342 = vmatpush1.msra.mxu0 0.0
    %343 = vmatprep.mubr.f32.mxu0 0.0
    %344 = vmatmul.mubr.f32.gmra.mrb[0].mxu0 %v277
    %v345 = vpop.f32.mrb[0].mxu0
    %v346 = vadd.f32 %v121, %v345
    %v347 = vpop.f32.mrb[0].mxu0
    %348 = vdwg.mxu0
    %s349 = scalar_lea.vmem [#allocation3], 4
    %350 = vst [vmem:[%s349] sm:$0x3] %v346
    %v351 = vld [vmem:[%s80] sm:$0x3]
    %v353 = vsel %vm124, %v351, 0
    %355 = vmatprep.subr.mxu0 0.0
    %356 = vmatpush1.msra.mxu0 %v108
    %357 = vmatprep.subr.mxu0 0.0
    %358 = vmatpush1.msra.mxu0 %v109
    %359 = vmatprep.subr.mxu0 0.0
    %360 = vmatpush1.msra.mxu0 %v110
    %361 = vmatprep.subr.mxu0 0.0
    %362 = vmatpush1.msra.mxu0 %v111
    %363 = vmatprep.subr.mxu0 0.0
    %364 = vmatpush1.msra.mxu0 0.0
    %365 = vmatprep.subr.mxu0 0.0
    %366 = vmatpush1.msra.mxu0 0.0
    %367 = vmatprep.subr.mxu0 0.0
    %368 = vmatpush1.msra.mxu0 0.0
    %369 = vmatprep.subr.mxu0 0.0
    %370 = vmatpush1.msra.mxu0 0.0
    %371 = vmatprep.subr.mxu0 0.0
    %372 = vmatpush1.msra.mxu0 0.0
    %373 = vmatprep.subr.mxu0 0.0
    %374 = vmatpush1.msra.mxu0 0.0
    %375 = vmatprep.subr.mxu0 0.0
    %376 = vmatpush1.msra.mxu0 0.0
    %377 = vmatprep.subr.mxu0 0.0
    %378 = vmatpush1.msra.mxu0 0.0
    %379 = vmatprep.subr.mxu0 0.0
    %380 = vmatpush1.msra.mxu0 0.0
    %381 = vmatprep.subr.mxu0 0.0
    %382 = vmatpush1.msra.mxu0 0.0
    %383 = vmatprep.subr.mxu0 0.0
    %384 = vmatpush1.msra.mxu0 0.0
    %385 = vmatprep.subr.mxu0 0.0
    %386 = vmatpush1.msra.mxu0 0.0
    %387 = vmatprep.subr.mxu0 0.0
    %388 = vmatpush1.msra.mxu0 0.0
    %389 = vmatprep.subr.mxu0 0.0
    %390 = vmatpush1.msra.mxu0 0.0
    %391 = vmatprep.subr.mxu0 0.0
    %392 = vmatpush1.msra.mxu0 0.0
    %393 = vmatprep.subr.mxu0 0.0
    %394 = vmatpush1.msra.mxu0 0.0
    %395 = vmatprep.subr.mxu0 0.0
    %396 = vmatpush1.msra.mxu0 0.0
    %397 = vmatprep.subr.mxu0 0.0
    %398 = vmatpush1.msra.mxu0 0.0
    %399 = vmatprep.subr.mxu0 0.0
    %400 = vmatpush1.msra.mxu0 0.0
    %401 = vmatprep.subr.mxu0 0.0
    %402 = vmatpush1.msra.mxu0 0.0
    %403 = vmatprep.subr.mxu0 0.0
    %404 = vmatpush1.msra.mxu0 0.0
    %405 = vmatprep.subr.mxu0 0.0
    %406 = vmatpush1.msra.mxu0 0.0
    %407 = vmatprep.subr.mxu0 0.0
    %408 = vmatpush1.msra.mxu0 0.0
    %409 = vmatprep.subr.mxu0 0.0
    %410 = vmatpush1.msra.mxu0 0.0
    %411 = vmatprep.subr.mxu0 0.0
    %412 = vmatpush1.msra.mxu0 0.0
    %413 = vmatprep.subr.mxu0 0.0
    %414 = vmatpush1.msra.mxu0 0.0
    %415 = vmatprep.subr.mxu0 0.0
    %416 = vmatpush1.msra.mxu0 0.0
    %417 = vmatprep.subr.mxu0 0.0
    %418 = vmatpush1.msra.mxu0 0.0
    %419 = vmatprep.mubr.f32.mxu0 0.0
    %420 = vmatmul.mubr.f32.gmra.mrb[0].mxu0 %v353
    %v421 = vpop.f32.mrb[0].mxu0
    %v422 = vadd.f32 %v121, %v421
    %v423 = vpop.f32.mrb[0].mxu0
    %424 = vdwg.mxu0
    %s425 = scalar_lea.vmem [#allocation3], 6
    %426 = vst [vmem:[%s425] sm:$0x3] %v422
    %v427 = vld [vmem:[%s86] sm:$0x3]
    %v429 = vsel %vm124, %v427, 0
    %431 = vmatprep.subr.mxu0 0.0
    %432 = vmatpush1.msra.mxu0 %v108
    %433 = vmatprep.subr.mxu0 0.0
    %434 = vmatpush1.msra.mxu0 %v109
    %435 = vmatprep.subr.mxu0 0.0
    %436 = vmatpush1.msra.mxu0 %v110
    %437 = vmatprep.subr.mxu0 0.0
    %438 = vmatpush1.msra.mxu0 %v111
    %439 = vmatprep.subr.mxu0 0.0
    %440 = vmatpush1.msra.mxu0 0.0
    %441 = vmatprep.subr.mxu0 0.0
    %442 = vmatpush1.msra.mxu0 0.0
    %443 = vmatprep.subr.mxu0 0.0
    %444 = vmatpush1.msra.mxu0 0.0
    %445 = vmatprep.subr.mxu0 0.0
    %446 = vmatpush1.msra.mxu0 0.0
    %447 = vmatprep.subr.mxu0 0.0
    %448 = vmatpush1.msra.mxu0 0.0
    %449 = vmatprep.subr.mxu0 0.0
    %450 = vmatpush1.msra.mxu0 0.0
    %451 = vmatprep.subr.mxu0 0.0
    %452 = vmatpush1.msra.mxu0 0.0
    %453 = vmatprep.subr.mxu0 0.0
    %454 = vmatpush1.msra.mxu0 0.0
    %455 = vmatprep.subr.mxu0 0.0
    %456 = vmatpush1.msra.mxu0 0.0
    %457 = vmatprep.subr.mxu0 0.0
    %458 = vmatpush1.msra.mxu0 0.0
    %459 = vmatprep.subr.mxu0 0.0
    %460 = vmatpush1.msra.mxu0 0.0
    %461 = vmatprep.subr.mxu0 0.0
    %462 = vmatpush1.msra.mxu0 0.0
    %463 = vmatprep.subr.mxu0 0.0
    %464 = vmatpush1.msra.mxu0 0.0
    %465 = vmatprep.subr.mxu0 0.0
    %466 = vmatpush1.msra.mxu0 0.0
    %467 = vmatprep.subr.mxu0 0.0
    %468 = vmatpush1.msra.mxu0 0.0
    %469 = vmatprep.subr.mxu0 0.0
    %470 = vmatpush1.msra.mxu0 0.0
    %471 = vmatprep.subr.mxu0 0.0
    %472 = vmatpush1.msra.mxu0 0.0
    %473 = vmatprep.subr.mxu0 0.0
    %474 = vmatpush1.msra.mxu0 0.0
    %475 = vmatprep.subr.mxu0 0.0
    %476 = vmatpush1.msra.mxu0 0.0
    %477 = vmatprep.subr.mxu0 0.0
    %478 = vmatpush1.msra.mxu0 0.0
    %479 = vmatprep.subr.mxu0 0.0
    %480 = vmatpush1.msra.mxu0 0.0
    %481 = vmatprep.subr.mxu0 0.0
    %482 = vmatpush1.msra.mxu0 0.0
    %483 = vmatprep.subr.mxu0 0.0
    %484 = vmatpush1.msra.mxu0 0.0
    %485 = vmatprep.subr.mxu0 0.0
    %486 = vmatpush1.msra.mxu0 0.0
    %487 = vmatprep.subr.mxu0 0.0
    %488 = vmatpush1.msra.mxu0 0.0
    %489 = vmatprep.subr.mxu0 0.0
    %490 = vmatpush1.msra.mxu0 0.0
    %491 = vmatprep.subr.mxu0 0.0
    %492 = vmatpush1.msra.mxu0 0.0
    %493 = vmatprep.subr.mxu0 0.0
    %494 = vmatpush1.msra.mxu0 0.0
    %495 = vmatprep.mubr.f32.mxu0 0.0
    %496 = vmatmul.mubr.f32.gmra.mrb[0].mxu0 %v429
    %v497 = vpop.f32.mrb[0].mxu0
    %v498 = vadd.f32 %v121, %v497
    %v499 = vpop.f32.mrb[0].mxu0
    %500 = vdwg.mxu0
    %s501 = scalar_lea.vmem [#allocation3], 8
    %502 = vst [vmem:[%s501] sm:$0x3] %v498
    %v503 = vld [vmem:[%s92] sm:$0x3]
    %v505 = vsel %vm124, %v503, 0
    %507 = vmatprep.subr.mxu0 0.0
    %508 = vmatpush1.msra.mxu0 %v108
    %509 = vmatprep.subr.mxu0 0.0
    %510 = vmatpush1.msra.mxu0 %v109
    %511 = vmatprep.subr.mxu0 0.0
    %512 = vmatpush1.msra.mxu0 %v110
    %513 = vmatprep.subr.mxu0 0.0
    %514 = vmatpush1.msra.mxu0 %v111
    %515 = vmatprep.subr.mxu0 0.0
    %516 = vmatpush1.msra.mxu0 0.0
    %517 = vmatprep.subr.mxu0 0.0
    %518 = vmatpush1.msra.mxu0 0.0
    %519 = vmatprep.subr.mxu0 0.0
    %520 = vmatpush1.msra.mxu0 0.0
    %521 = vmatprep.subr.mxu0 0.0
    %522 = vmatpush1.msra.mxu0 0.0
    %523 = vmatprep.subr.mxu0 0.0
    %524 = vmatpush1.msra.mxu0 0.0
    %525 = vmatprep.subr.mxu0 0.0
    %526 = vmatpush1.msra.mxu0 0.0
    %527 = vmatprep.subr.mxu0 0.0
    %528 = vmatpush1.msra.mxu0 0.0
    %529 = vmatprep.subr.mxu0 0.0
    %530 = vmatpush1.msra.mxu0 0.0
    %531 = vmatprep.subr.mxu0 0.0
    %532 = vmatpush1.msra.mxu0 0.0
    %533 = vmatprep.subr.mxu0 0.0
    %534 = vmatpush1.msra.mxu0 0.0
    %535 = vmatprep.subr.mxu0 0.0
    %536 = vmatpush1.msra.mxu0 0.0
    %537 = vmatprep.subr.mxu0 0.0
    %538 = vmatpush1.msra.mxu0 0.0
    %539 = vmatprep.subr.mxu0 0.0
    %540 = vmatpush1.msra.mxu0 0.0
    %541 = vmatprep.subr.mxu0 0.0
    %542 = vmatpush1.msra.mxu0 0.0
    %543 = vmatprep.subr.mxu0 0.0
    %544 = vmatpush1.msra.mxu0 0.0
    %545 = vmatprep.subr.mxu0 0.0
    %546 = vmatpush1.msra.mxu0 0.0
    %547 = vmatprep.subr.mxu0 0.0
    %548 = vmatpush1.msra.mxu0 0.0
    %549 = vmatprep.subr.mxu0 0.0
    %550 = vmatpush1.msra.mxu0 0.0
    %551 = vmatprep.subr.mxu0 0.0
    %552 = vmatpush1.msra.mxu0 0.0
    %553 = vmatprep.subr.mxu0 0.0
    %554 = vmatpush1.msra.mxu0 0.0
    %555 = vmatprep.subr.mxu0 0.0
    %556 = vmatpush1.msra.mxu0 0.0
    %557 = vmatprep.subr.mxu0 0.0
    %558 = vmatpush1.msra.mxu0 0.0
    %559 = vmatprep.subr.mxu0 0.0
    %560 = vmatpush1.msra.mxu0 0.0
    %561 = vmatprep.subr.mxu0 0.0
    %562 = vmatpush1.msra.mxu0 0.0
    %563 = vmatprep.subr.mxu0 0.0
    %564 = vmatpush1.msra.mxu0 0.0
    %565 = vmatprep.subr.mxu0 0.0
    %566 = vmatpush1.msra.mxu0 0.0
    %567 = vmatprep.subr.mxu0 0.0
    %568 = vmatpush1.msra.mxu0 0.0
    %569 = vmatprep.subr.mxu0 0.0
    %570 = vmatpush1.msra.mxu0 0.0
    %571 = vmatprep.mubr.f32.mxu0 0.0
    %572 = vmatmul.mubr.f32.gmra.mrb[0].mxu0 %v505
    %v573 = vpop.f32.mrb[0].mxu0
    %v574 = vadd.f32 %v121, %v573
    %v575 = vpop.f32.mrb[0].mxu0
    %576 = vdwg.mxu0
    %s577 = scalar_lea.vmem [#allocation3], 10
    %578 = vst [vmem:[%s577] sm:$0x3] %v574
    %v579 = vld [vmem:[%s98] sm:$0x3]
    %v581 = vsel %vm124, %v579, 0
    %583 = vmatprep.subr.mxu0 0.0
    %584 = vmatpush1.msra.mxu0 %v108
    %585 = vmatprep.subr.mxu0 0.0
    %586 = vmatpush1.msra.mxu0 %v109
    %587 = vmatprep.subr.mxu0 0.0
    %588 = vmatpush1.msra.mxu0 %v110
    %589 = vmatprep.subr.mxu0 0.0
    %590 = vmatpush1.msra.mxu0 %v111
    %591 = vmatprep.subr.mxu0 0.0
    %592 = vmatpush1.msra.mxu0 0.0
    %593 = vmatprep.subr.mxu0 0.0
    %594 = vmatpush1.msra.mxu0 0.0
    %595 = vmatprep.subr.mxu0 0.0
    %596 = vmatpush1.msra.mxu0 0.0
    %597 = vmatprep.subr.mxu0 0.0
    %598 = vmatpush1.msra.mxu0 0.0
    %599 = vmatprep.subr.mxu0 0.0
    %600 = vmatpush1.msra.mxu0 0.0
    %601 = vmatprep.subr.mxu0 0.0
    %602 = vmatpush1.msra.mxu0 0.0
    %603 = vmatprep.subr.mxu0 0.0
    %604 = vmatpush1.msra.mxu0 0.0
    %605 = vmatprep.subr.mxu0 0.0
    %606 = vmatpush1.msra.mxu0 0.0
    %607 = vmatprep.subr.mxu0 0.0
    %608 = vmatpush1.msra.mxu0 0.0
    %609 = vmatprep.subr.mxu0 0.0
    %610 = vmatpush1.msra.mxu0 0.0
    %611 = vmatprep.subr.mxu0 0.0
    %612 = vmatpush1.msra.mxu0 0.0
    %613 = vmatprep.subr.mxu0 0.0
    %614 = vmatpush1.msra.mxu0 0.0
    %615 = vmatprep.subr.mxu0 0.0
    %616 = vmatpush1.msra.mxu0 0.0
    %617 = vmatprep.subr.mxu0 0.0
    %618 = vmatpush1.msra.mxu0 0.0
    %619 = vmatprep.subr.mxu0 0.0
    %620 = vmatpush1.msra.mxu0 0.0
    %621 = vmatprep.subr.mxu0 0.0
    %622 = vmatpush1.msra.mxu0 0.0
    %623 = vmatprep.subr.mxu0 0.0
    %624 = vmatpush1.msra.mxu0 0.0
    %625 = vmatprep.subr.mxu0 0.0
    %626 = vmatpush1.msra.mxu0 0.0
    %627 = vmatprep.subr.mxu0 0.0
    %628 = vmatpush1.msra.mxu0 0.0
    %629 = vmatprep.subr.mxu0 0.0
    %630 = vmatpush1.msra.mxu0 0.0
    %631 = vmatprep.subr.mxu0 0.0
    %632 = vmatpush1.msra.mxu0 0.0
    %633 = vmatprep.subr.mxu0 0.0
    %634 = vmatpush1.msra.mxu0 0.0
    %635 = vmatprep.subr.mxu0 0.0
    %636 = vmatpush1.msra.mxu0 0.0
    %637 = vmatprep.subr.mxu0 0.0
    %638 = vmatpush1.msra.mxu0 0.0
    %639 = vmatprep.subr.mxu0 0.0
    %640 = vmatpush1.msra.mxu0 0.0
    %641 = vmatprep.subr.mxu0 0.0
    %642 = vmatpush1.msra.mxu0 0.0
    %643 = vmatprep.subr.mxu0 0.0
    %644 = vmatpush1.msra.mxu0 0.0
    %645 = vmatprep.subr.mxu0 0.0
    %646 = vmatpush1.msra.mxu0 0.0
    %647 = vmatprep.mubr.f32.mxu0 0.0
    %648 = vmatmul.mubr.f32.gmra.mrb[0].mxu0 %v581
    %v649 = vpop.f32.mrb[0].mxu0
    %v650 = vadd.f32 %v121, %v649
    %v651 = vpop.f32.mrb[0].mxu0
    %652 = vdwg.mxu0
    %s653 = scalar_lea.vmem [#allocation3], 12
    %654 = vst [vmem:[%s653] sm:$0x3] %v650
    %v655 = vld [vmem:[%s103] sm:$0x3]
    %v657 = vsel %vm124, %v655, 0
    %659 = vmatprep.subr.mxu0 0.0
    %660 = vmatpush1.msra.mxu0 %v108
    %661 = vmatprep.subr.mxu0 0.0
    %662 = vmatpush1.msra.mxu0 %v109
    %663 = vmatprep.subr.mxu0 0.0
    %664 = vmatpush1.msra.mxu0 %v110
    %665 = vmatprep.subr.mxu0 0.0
    %666 = vmatpush1.msra.mxu0 %v111
    %667 = vmatprep.subr.mxu0 0.0
    %668 = vmatpush1.msra.mxu0 0.0
    %669 = vmatprep.subr.mxu0 0.0
    %670 = vmatpush1.msra.mxu0 0.0
    %671 = vmatprep.subr.mxu0 0.0
    %672 = vmatpush1.msra.mxu0 0.0
    %673 = vmatprep.subr.mxu0 0.0
    %674 = vmatpush1.msra.mxu0 0.0
    %675 = vmatprep.subr.mxu0 0.0
    %676 = vmatpush1.msra.mxu0 0.0
    %677 = vmatprep.subr.mxu0 0.0
    %678 = vmatpush1.msra.mxu0 0.0
    %679 = vmatprep.subr.mxu0 0.0
    %680 = vmatpush1.msra.mxu0 0.0
    %681 = vmatprep.subr.mxu0 0.0
    %682 = vmatpush1.msra.mxu0 0.0
    %683 = vmatprep.subr.mxu0 0.0
    %684 = vmatpush1.msra.mxu0 0.0
    %685 = vmatprep.subr.mxu0 0.0
    %686 = vmatpush1.msra.mxu0 0.0
    %687 = vmatprep.subr.mxu0 0.0
    %688 = vmatpush1.msra.mxu0 0.0
    %689 = vmatprep.subr.mxu0 0.0
    %690 = vmatpush1.msra.mxu0 0.0
    %691 = vmatprep.subr.mxu0 0.0
    %692 = vmatpush1.msra.mxu0 0.0
    %693 = vmatprep.subr.mxu0 0.0
    %694 = vmatpush1.msra.mxu0 0.0
    %695 = vmatprep.subr.mxu0 0.0
    %696 = vmatpush1.msra.mxu0 0.0
    %697 = vmatprep.subr.mxu0 0.0
    %698 = vmatpush1.msra.mxu0 0.0
    %699 = vmatprep.subr.mxu0 0.0
    %700 = vmatpush1.msra.mxu0 0.0
    %701 = vmatprep.subr.mxu0 0.0
    %702 = vmatpush1.msra.mxu0 0.0
    %703 = vmatprep.subr.mxu0 0.0
    %704 = vmatpush1.msra.mxu0 0.0
    %705 = vmatprep.subr.mxu0 0.0
    %706 = vmatpush1.msra.mxu0 0.0
    %707 = vmatprep.subr.mxu0 0.0
    %708 = vmatpush1.msra.mxu0 0.0
    %709 = vmatprep.subr.mxu0 0.0
    %710 = vmatpush1.msra.mxu0 0.0
    %711 = vmatprep.subr.mxu0 0.0
    %712 = vmatpush1.msra.mxu0 0.0
    %713 = vmatprep.subr.mxu0 0.0
    %714 = vmatpush1.msra.mxu0 0.0
    %715 = vmatprep.subr.mxu0 0.0
    %716 = vmatpush1.msra.mxu0 0.0
    %717 = vmatprep.subr.mxu0 0.0
    %718 = vmatpush1.msra.mxu0 0.0
    %719 = vmatprep.subr.mxu0 0.0
    %720 = vmatpush1.msra.mxu0 0.0
    %721 = vmatprep.subr.mxu0 0.0
    %722 = vmatpush1.msra.mxu0 0.0
    %723 = vmatprep.mubr.f32.mxu0 0.0
    %724 = vmatmul.mubr.f32.gmra.mrb[0].mxu0 %v657
    %v725 = vpop.f32.mrb[0].mxu0
    %v726 = vadd.f32 %v121, %v725
    %v727 = vpop.f32.mrb[0].mxu0
    %728 = vdwg.mxu0
    %s729 = scalar_lea.vmem [#allocation3], 14
    %730 = vst [vmem:[%s729] sm:$0x3] %v726
    %v731 = vld [vmem:[#allocation3] sm:$0x3]
    %v733 = vsel %vm124, 0.0, 0
    %735 = vmatprep.subr.mxu0 0.0
    %736 = vmatpush1.msra.mxu0 %v112
    %737 = vmatprep.subr.mxu0 0.0
    %738 = vmatpush1.msra.mxu0 %v113
    %739 = vmatprep.subr.mxu0 0.0
    %740 = vmatpush1.msra.mxu0 %v114
    %741 = vmatprep.subr.mxu0 0.0
    %742 = vmatpush1.msra.mxu0 %v115
    %743 = vmatprep.subr.mxu0 0.0
    %744 = vmatpush1.msra.mxu0 0.0
    %745 = vmatprep.subr.mxu0 0.0
    %746 = vmatpush1.msra.mxu0 0.0
    %747 = vmatprep.subr.mxu0 0.0
    %748 = vmatpush1.msra.mxu0 0.0
    %749 = vmatprep.subr.mxu0 0.0
    %750 = vmatpush1.msra.mxu0 0.0
    %751 = vmatprep.subr.mxu0 0.0
    %752 = vmatpush1.msra.mxu0 0.0
    %753 = vmatprep.subr.mxu0 0.0
    %754 = vmatpush1.msra.mxu0 0.0
    %755 = vmatprep.subr.mxu0 0.0
    %756 = vmatpush1.msra.mxu0 0.0
    %757 = vmatprep.subr.mxu0 0.0
    %758 = vmatpush1.msra.mxu0 0.0
    %759 = vmatprep.subr.mxu0 0.0
    %760 = vmatpush1.msra.mxu0 0.0
    %761 = vmatprep.subr.mxu0 0.0
    %762 = vmatpush1.msra.mxu0 0.0
    %763 = vmatprep.subr.mxu0 0.0
    %764 = vmatpush1.msra.mxu0 0.0
    %765 = vmatprep.subr.mxu0 0.0
    %766 = vmatpush1.msra.mxu0 0.0
    %767 = vmatprep.subr.mxu0 0.0
    %768 = vmatpush1.msra.mxu0 0.0
    %769 = vmatprep.subr.mxu0 0.0
    %770 = vmatpush1.msra.mxu0 0.0
    %771 = vmatprep.subr.mxu0 0.0
    %772 = vmatpush1.msra.mxu0 0.0
    %773 = vmatprep.subr.mxu0 0.0
    %774 = vmatpush1.msra.mxu0 0.0
    %775 = vmatprep.subr.mxu0 0.0
    %776 = vmatpush1.msra.mxu0 0.0
    %777 = vmatprep.subr.mxu0 0.0
    %778 = vmatpush1.msra.mxu0 0.0
    %779 = vmatprep.subr.mxu0 0.0
    %780 = vmatpush1.msra.mxu0 0.0
    %781 = vmatprep.subr.mxu0 0.0
    %782 = vmatpush1.msra.mxu0 0.0
    %783 = vmatprep.subr.mxu0 0.0
    %784 = vmatpush1.msra.mxu0 0.0
    %785 = vmatprep.subr.mxu0 0.0
    %786 = vmatpush1.msra.mxu0 0.0
    %787 = vmatprep.subr.mxu0 0.0
    %788 = vmatpush1.msra.mxu0 0.0
    %789 = vmatprep.subr.mxu0 0.0
    %790 = vmatpush1.msra.mxu0 0.0
    %791 = vmatprep.subr.mxu0 0.0
    %792 = vmatpush1.msra.mxu0 0.0
    %793 = vmatprep.subr.mxu0 0.0
    %794 = vmatpush1.msra.mxu0 0.0
    %795 = vmatprep.subr.mxu0 0.0
    %796 = vmatpush1.msra.mxu0 0.0
    %797 = vmatprep.subr.mxu0 0.0
    %798 = vmatpush1.msra.mxu0 0.0
    %799 = vmatprep.mubr.f32.mxu0 0.0
    %800 = vmatmul.mubr.f32.gmra.mrb[0].mxu0 %v733
    %v801 = vpop.f32.mrb[0].mxu0
    %v802 = vadd.f32 0.0, %v801
    %v803 = vpop.f32.mrb[0].mxu0
    %804 = vdwg.mxu0
    %v805 = vadd.f32 %v731, %v802
    %v806 = vxor.u32 %v805, 2147483648
    %v807 = vmul.f32 %v806, 1.442695
    %v808 = vpow.pop %v807
    %v809 = vadd.f32 %v808, 1.0
    %v810 = vrcp.pop %v809
    %v811 = vmul.f32 1.0, %v810
    %v812 = vtanh.pop %v805
    %v813 = vmul.f32 %v811, 0.0
    %815 = vrot.lane.b32.xlu0 %v812, 64
    %v816 = vpop.permute.xlu0 %815
    %v818 = vmul.f32 %v811, %v816
    %820 = vrot.lane.b32.xlu0 %v818, 32
    %v821 = vpop.permute.xlu0 %820
    %v823 = vadd.f32 %v813, %v821
    %v824 = vtanh.pop %v823
    %826 = vrot.lane.b32.xlu0 %v824, 64
    %v827 = vpop.permute.xlu0 %826
    %v829 = vmul.f32 %v811, %v827
    %831 = vrot.lane.b32.xlu0 %v829, 32
    %v832 = vpop.permute.xlu0 %831
    %834 = vst.msk [vmem:[#allocation2] sm:$0x3] %vm63, %v832
    %v835 = vld [vmem:[%s273] sm:$0x3]
    %v836 = vsel %vm124, %v832, 0
    %838 = vmatprep.subr.mxu0 0.0
    %839 = vmatpush1.msra.mxu0 %v112
    %840 = vmatprep.subr.mxu0 0.0
    %841 = vmatpush1.msra.mxu0 %v113
    %842 = vmatprep.subr.mxu0 0.0
    %843 = vmatpush1.msra.mxu0 %v114
    %844 = vmatprep.subr.mxu0 0.0
    %845 = vmatpush1.msra.mxu0 %v115
    %846 = vmatprep.subr.mxu0 0.0
    %847 = vmatpush1.msra.mxu0 0.0
    %848 = vmatprep.subr.mxu0 0.0
    %849 = vmatpush1.msra.mxu0 0.0
    %850 = vmatprep.subr.mxu0 0.0
    %851 = vmatpush1.msra.mxu0 0.0
    %852 = vmatprep.subr.mxu0 0.0
    %853 = vmatpush1.msra.mxu0 0.0
    %854 = vmatprep.subr.mxu0 0.0
    %855 = vmatpush1.msra.mxu0 0.0
    %856 = vmatprep.subr.mxu0 0.0
    %857 = vmatpush1.msra.mxu0 0.0
    %858 = vmatprep.subr.mxu0 0.0
    %859 = vmatpush1.msra.mxu0 0.0
    %860 = vmatprep.subr.mxu0 0.0
    %861 = vmatpush1.msra.mxu0 0.0
    %862 = vmatprep.subr.mxu0 0.0
    %863 = vmatpush1.msra.mxu0 0.0
    %864 = vmatprep.subr.mxu0 0.0
    %865 = vmatpush1.msra.mxu0 0.0
    %866 = vmatprep.subr.mxu0 0.0
    %867 = vmatpush1.msra.mxu0 0.0
    %868 = vmatprep.subr.mxu0 0.0
    %869 = vmatpush1.msra.mxu0 0.0
    %870 = vmatprep.subr.mxu0 0.0
    %871 = vmatpush1.msra.mxu0 0.0
    %872 = vmatprep.subr.mxu0 0.0
    %873 = vmatpush1.msra.mxu0 0.0
    %874 = vmatprep.subr.mxu0 0.0
    %875 = vmatpush1.msra.mxu0 0.0
    %876 = vmatprep.subr.mxu0 0.0
    %877 = vmatpush1.msra.mxu0 0.0
    %878 = vmatprep.subr.mxu0 0.0
    %879 = vmatpush1.msra.mxu0 0.0
    %880 = vmatprep.subr.mxu0 0.0
    %881 = vmatpush1.msra.mxu0 0.0
    %882 = vmatprep.subr.mxu0 0.0
    %883 = vmatpush1.msra.mxu0 0.0
    %884 = vmatprep.subr.mxu0 0.0
    %885 = vmatpush1.msra.mxu0 0.0
    %886 = vmatprep.subr.mxu0 0.0
    %887 = vmatpush1.msra.mxu0 0.0
    %888 = vmatprep.subr.mxu0 0.0
    %889 = vmatpush1.msra.mxu0 0.0
    %890 = vmatprep.subr.mxu0 0.0
    %891 = vmatpush1.msra.mxu0 0.0
    %892 = vmatprep.subr.mxu0 0.0
    %893 = vmatpush1.msra.mxu0 0.0
    %894 = vmatprep.subr.mxu0 0.0
    %895 = vmatpush1.msra.mxu0 0.0
    %896 = vmatprep.subr.mxu0 0.0
    %897 = vmatpush1.msra.mxu0 0.0
    %898 = vmatprep.subr.mxu0 0.0
    %899 = vmatpush1.msra.mxu0 0.0
    %900 = vmatprep.subr.mxu0 0.0
    %901 = vmatpush1.msra.mxu0 0.0
    %902 = vmatprep.mubr.f32.mxu0 0.0
    %903 = vmatmul.mubr.f32.gmra.mrb[0].mxu0 %v836
    %v904 = vpop.f32.mrb[0].mxu0
    %v905 = vadd.f32 0.0, %v904
    %v906 = vpop.f32.mrb[0].mxu0
    %907 = vdwg.mxu0
    %v908 = vadd.f32 %v835, %v905
    %v909 = vxor.u32 %v908, 2147483648
    %v910 = vmul.f32 %v909, 1.442695
    %v911 = vpow.pop %v910
    %v912 = vadd.f32 %v911, 1.0
    %v913 = vrcp.pop %v912
    %v914 = vmul.f32 1.0, %v913
    %v915 = vtanh.pop %v908
    %v916 = vmul.f32 %v914, %v823
    %918 = vrot.lane.b32.xlu0 %v915, 64
    %v919 = vpop.permute.xlu0 %918
    %v921 = vmul.f32 %v914, %v919
    %923 = vrot.lane.b32.xlu0 %v921, 32
    %v924 = vpop.permute.xlu0 %923
    %v926 = vadd.f32 %v916, %v924
    %v927 = vtanh.pop %v926
    %929 = vrot.lane.b32.xlu0 %v927, 64
    %v930 = vpop.permute.xlu0 %929
    %v932 = vmul.f32 %v914, %v930
    %934 = vrot.lane.b32.xlu0 %v932, 32
    %v935 = vpop.permute.xlu0 %934
    %937 = vst.msk [vmem:[%s68] sm:$0x3] %vm63, %v935
    %v938 = vld [vmem:[%s349] sm:$0x3]
    %v939 = vsel %vm124, %v935, 0
    %941 = vmatprep.subr.mxu0 0.0
    %942 = vmatpush1.msra.mxu0 %v112
    %943 = vmatprep.subr.mxu0 0.0
    %944 = vmatpush1.msra.mxu0 %v113
    %945 = vmatprep.subr.mxu0 0.0
    %946 = vmatpush1.msra.mxu0 %v114
    %947 = vmatprep.subr.mxu0 0.0
    %948 = vmatpush1.msra.mxu0 %v115
    %949 = vmatprep.subr.mxu0 0.0
    %950 = vmatpush1.msra.mxu0 0.0
    %951 = vmatprep.subr.mxu0 0.0
    %952 = vmatpush1.msra.mxu0 0.0
    %953 = vmatprep.subr.mxu0 0.0
    %954 = vmatpush1.msra.mxu0 0.0
    %955 = vmatprep.subr.mxu0 0.0
    %956 = vmatpush1.msra.mxu0 0.0
    %957 = vmatprep.subr.mxu0 0.0
    %958 = vmatpush1.msra.mxu0 0.0
    %959 = vmatprep.subr.mxu0 0.0
    %960 = vmatpush1.msra.mxu0 0.0
    %961 = vmatprep.subr.mxu0 0.0
    %962 = vmatpush1.msra.mxu0 0.0
    %963 = vmatprep.subr.mxu0 0.0
    %964 = vmatpush1.msra.mxu0 0.0
    %965 = vmatprep.subr.mxu0 0.0
    %966 = vmatpush1.msra.mxu0 0.0
    %967 = vmatprep.subr.mxu0 0.0
    %968 = vmatpush1.msra.mxu0 0.0
    %969 = vmatprep.subr.mxu0 0.0
    %970 = vmatpush1.msra.mxu0 0.0
    %971 = vmatprep.subr.mxu0 0.0
    %972 = vmatpush1.msra.mxu0 0.0
    %973 = vmatprep.subr.mxu0 0.0
    %974 = vmatpush1.msra.mxu0 0.0
    %975 = vmatprep.subr.mxu0 0.0
    %976 = vmatpush1.msra.mxu0 0.0
    %977 = vmatprep.subr.mxu0 0.0
    %978 = vmatpush1.msra.mxu0 0.0
    %979 = vmatprep.subr.mxu0 0.0
    %980 = vmatpush1.msra.mxu0 0.0
    %981 = vmatprep.subr.mxu0 0.0
    %982 = vmatpush1.msra.mxu0 0.0
    %983 = vmatprep.subr.mxu0 0.0
    %984 = vmatpush1.msra.mxu0 0.0
    %985 = vmatprep.subr.mxu0 0.0
    %986 = vmatpush1.msra.mxu0 0.0
    %987 = vmatprep.subr.mxu0 0.0
    %988 = vmatpush1.msra.mxu0 0.0
    %989 = vmatprep.subr.mxu0 0.0
    %990 = vmatpush1.msra.mxu0 0.0
    %991 = vmatprep.subr.mxu0 0.0
    %992 = vmatpush1.msra.mxu0 0.0
    %993 = vmatprep.subr.mxu0 0.0
    %994 = vmatpush1.msra.mxu0 0.0
    %995 = vmatprep.subr.mxu0 0.0
    %996 = vmatpush1.msra.mxu0 0.0
    %997 = vmatprep.subr.mxu0 0.0
    %998 = vmatpush1.msra.mxu0 0.0
    %999 = vmatprep.subr.mxu0 0.0
    %1000 = vmatpush1.msra.mxu0 0.0
    %1001 = vmatprep.subr.mxu0 0.0
    %1002 = vmatpush1.msra.mxu0 0.0
    %1003 = vmatprep.subr.mxu0 0.0
    %1004 = vmatpush1.msra.mxu0 0.0
    %1005 = vmatprep.mubr.f32.mxu0 0.0
    %1006 = vmatmul.mubr.f32.gmra.mrb[0].mxu0 %v939
    %v1007 = vpop.f32.mrb[0].mxu0
    %v1008 = vadd.f32 0.0, %v1007
    %v1009 = vpop.f32.mrb[0].mxu0
    %1010 = vdwg.mxu0
    %v1011 = vadd.f32 %v938, %v1008
    %v1012 = vxor.u32 %v1011, 2147483648
    %v1013 = vmul.f32 %v1012, 1.442695
    %v1014 = vpow.pop %v1013
    %v1015 = vadd.f32 %v1014, 1.0
    %v1016 = vrcp.pop %v1015
    %v1017 = vmul.f32 1.0, %v1016
    %v1018 = vtanh.pop %v1011
    %v1019 = vmul.f32 %v1017, %v926
    %1021 = vrot.lane.b32.xlu0 %v1018, 64
    %v1022 = vpop.permute.xlu0 %1021
    %v1024 = vmul.f32 %v1017, %v1022
    %1026 = vrot.lane.b32.xlu0 %v1024, 32
    %v1027 = vpop.permute.xlu0 %1026
    %v1029 = vadd.f32 %v1019, %v1027
    %v1030 = vtanh.pop %v1029
    %1032 = vrot.lane.b32.xlu0 %v1030, 64
    %v1033 = vpop.permute.xlu0 %1032
    %v1035 = vmul.f32 %v1017, %v1033
    %1037 = vrot.lane.b32.xlu0 %v1035, 32
    %v1038 = vpop.permute.xlu0 %1037
    %1040 = vst.msk [vmem:[%s74] sm:$0x3] %vm63, %v1038
    %v1041 = vld [vmem:[%s425] sm:$0x3]
    %v1042 = vsel %vm124, %v1038, 0
    %1044 = vmatprep.subr.mxu0 0.0
    %1045 = vmatpush1.msra.mxu0 %v112
    %1046 = vmatprep.subr.mxu0 0.0
    %1047 = vmatpush1.msra.mxu0 %v113
    %1048 = vmatprep.subr.mxu0 0.0
    %1049 = vmatpush1.msra.mxu0 %v114
    %1050 = vmatprep.subr.mxu0 0.0
    %1051 = vmatpush1.msra.mxu0 %v115
    %1052 = vmatprep.subr.mxu0 0.0
    %1053 = vmatpush1.msra.mxu0 0.0
    %1054 = vmatprep.subr.mxu0 0.0
    %1055 = vmatpush1.msra.mxu0 0.0
    %1056 = vmatprep.subr.mxu0 0.0
    %1057 = vmatpush1.msra.mxu0 0.0
    %1058 = vmatprep.subr.mxu0 0.0
    %1059 = vmatpush1.msra.mxu0 0.0
    %1060 = vmatprep.subr.mxu0 0.0
    %1061 = vmatpush1.msra.mxu0 0.0
    %1062 = vmatprep.subr.mxu0 0.0
    %1063 = vmatpush1.msra.mxu0 0.0
    %1064 = vmatprep.subr.mxu0 0.0
    %1065 = vmatpush1.msra.mxu0 0.0
    %1066 = vmatprep.subr.mxu0 0.0
    %1067 = vmatpush1.msra.mxu0 0.0
    %1068 = vmatprep.subr.mxu0 0.0
    %1069 = vmatpush1.msra.mxu0 0.0
    %1070 = vmatprep.subr.mxu0 0.0
    %1071 = vmatpush1.msra.mxu0 0.0
    %1072 = vmatprep.subr.mxu0 0.0
    %1073 = vmatpush1.msra.mxu0 0.0
    %1074 = vmatprep.subr.mxu0 0.0
    %1075 = vmatpush1.msra.mxu0 0.0
    %1076 = vmatprep.subr.mxu0 0.0
    %1077 = vmatpush1.msra.mxu0 0.0
    %1078 = vmatprep.subr.mxu0 0.0
    %1079 = vmatpush1.msra.mxu0 0.0
    %1080 = vmatprep.subr.mxu0 0.0
    %1081 = vmatpush1.msra.mxu0 0.0
    %1082 = vmatprep.subr.mxu0 0.0
    %1083 = vmatpush1.msra.mxu0 0.0
    %1084 = vmatprep.subr.mxu0 0.0
    %1085 = vmatpush1.msra.mxu0 0.0
    %1086 = vmatprep.subr.mxu0 0.0
    %1087 = vmatpush1.msra.mxu0 0.0
    %1088 = vmatprep.subr.mxu0 0.0
    %1089 = vmatpush1.msra.mxu0 0.0
    %1090 = vmatprep.subr.mxu0 0.0
    %1091 = vmatpush1.msra.mxu0 0.0
    %1092 = vmatprep.subr.mxu0 0.0
    %1093 = vmatpush1.msra.mxu0 0.0
    %1094 = vmatprep.subr.mxu0 0.0
    %1095 = vmatpush1.msra.mxu0 0.0
    %1096 = vmatprep.subr.mxu0 0.0
    %1097 = vmatpush1.msra.mxu0 0.0
    %1098 = vmatprep.subr.mxu0 0.0
    %1099 = vmatpush1.msra.mxu0 0.0
    %1100 = vmatprep.subr.mxu0 0.0
    %1101 = vmatpush1.msra.mxu0 0.0
    %1102 = vmatprep.subr.mxu0 0.0
    %1103 = vmatpush1.msra.mxu0 0.0
    %1104 = vmatprep.subr.mxu0 0.0
    %1105 = vmatpush1.msra.mxu0 0.0
    %1106 = vmatprep.subr.mxu0 0.0
    %1107 = vmatpush1.msra.mxu0 0.0
    %1108 = vmatprep.mubr.f32.mxu0 0.0
    %1109 = vmatmul.mubr.f32.gmra.mrb[0].mxu0 %v1042
    %v1110 = vpop.f32.mrb[0].mxu0
    %v1111 = vadd.f32 0.0, %v1110
    %v1112 = vpop.f32.mrb[0].mxu0
    %1113 = vdwg.mxu0
    %v1114 = vadd.f32 %v1041, %v1111
    %v1115 = vxor.u32 %v1114, 2147483648
    %v1116 = vmul.f32 %v1115, 1.442695
    %v1117 = vpow.pop %v1116
    %v1118 = vadd.f32 %v1117, 1.0
    %v1119 = vrcp.pop %v1118
    %v1120 = vmul.f32 1.0, %v1119
    %v1121 = vtanh.pop %v1114
    %v1122 = vmul.f32 %v1120, %v1029
    %1124 = vrot.lane.b32.xlu0 %v1121, 64
    %v1125 = vpop.permute.xlu0 %1124
    %v1127 = vmul.f32 %v1120, %v1125
    %1129 = vrot.lane.b32.xlu0 %v1127, 32
    %v1130 = vpop.permute.xlu0 %1129
    %v1132 = vadd.f32 %v1122, %v1130
    %v1133 = vtanh.pop %v1132
    %1135 = vrot.lane.b32.xlu0 %v1133, 64
    %v1136 = vpop.permute.xlu0 %1135
    %v1138 = vmul.f32 %v1120, %v1136
    %1140 = vrot.lane.b32.xlu0 %v1138, 32
    %v1141 = vpop.permute.xlu0 %1140
    %1143 = vst.msk [vmem:[%s80] sm:$0x3] %vm63, %v1141
    %v1144 = vld [vmem:[%s501] sm:$0x3]
    %v1145 = vsel %vm124, %v1141, 0
    %1147 = vmatprep.subr.mxu0 0.0
    %1148 = vmatpush1.msra.mxu0 %v112
    %1149 = vmatprep.subr.mxu0 0.0
    %1150 = vmatpush1.msra.mxu0 %v113
    %1151 = vmatprep.subr.mxu0 0.0
    %1152 = vmatpush1.msra.mxu0 %v114
    %1153 = vmatprep.subr.mxu0 0.0
    %1154 = vmatpush1.msra.mxu0 %v115
    %1155 = vmatprep.subr.mxu0 0.0
    %1156 = vmatpush1.msra.mxu0 0.0
    %1157 = vmatprep.subr.mxu0 0.0
    %1158 = vmatpush1.msra.mxu0 0.0
    %1159 = vmatprep.subr.mxu0 0.0
    %1160 = vmatpush1.msra.mxu0 0.0
    %1161 = vmatprep.subr.mxu0 0.0
    %1162 = vmatpush1.msra.mxu0 0.0
    %1163 = vmatprep.subr.mxu0 0.0
    %1164 = vmatpush1.msra.mxu0 0.0
    %1165 = vmatprep.subr.mxu0 0.0
    %1166 = vmatpush1.msra.mxu0 0.0
    %1167 = vmatprep.subr.mxu0 0.0
    %1168 = vmatpush1.msra.mxu0 0.0
    %1169 = vmatprep.subr.mxu0 0.0
    %1170 = vmatpush1.msra.mxu0 0.0
    %1171 = vmatprep.subr.mxu0 0.0
    %1172 = vmatpush1.msra.mxu0 0.0
    %1173 = vmatprep.subr.mxu0 0.0
    %1174 = vmatpush1.msra.mxu0 0.0
    %1175 = vmatprep.subr.mxu0 0.0
    %1176 = vmatpush1.msra.mxu0 0.0
    %1177 = vmatprep.subr.mxu0 0.0
    %1178 = vmatpush1.msra.mxu0 0.0
    %1179 = vmatprep.subr.mxu0 0.0
    %1180 = vmatpush1.msra.mxu0 0.0
    %1181 = vmatprep.subr.mxu0 0.0
    %1182 = vmatpush1.msra.mxu0 0.0
    %1183 = vmatprep.subr.mxu0 0.0
    %1184 = vmatpush1.msra.mxu0 0.0
    %1185 = vmatprep.subr.mxu0 0.0
    %1186 = vmatpush1.msra.mxu0 0.0
    %1187 = vmatprep.subr.mxu0 0.0
    %1188 = vmatpush1.msra.mxu0 0.0
    %1189 = vmatprep.subr.mxu0 0.0
    %1190 = vmatpush1.msra.mxu0 0.0
    %1191 = vmatprep.subr.mxu0 0.0
    %1192 = vmatpush1.msra.mxu0 0.0
    %1193 = vmatprep.subr.mxu0 0.0
    %1194 = vmatpush1.msra.mxu0 0.0
    %1195 = vmatprep.subr.mxu0 0.0
    %1196 = vmatpush1.msra.mxu0 0.0
    %1197 = vmatprep.subr.mxu0 0.0
    %1198 = vmatpush1.msra.mxu0 0.0
    %1199 = vmatprep.subr.mxu0 0.0
    %1200 = vmatpush1.msra.mxu0 0.0
    %1201 = vmatprep.subr.mxu0 0.0
    %1202 = vmatpush1.msra.mxu0 0.0
    %1203 = vmatprep.subr.mxu0 0.0
    %1204 = vmatpush1.msra.mxu0 0.0
    %1205 = vmatprep.subr.mxu0 0.0
    %1206 = vmatpush1.msra.mxu0 0.0
    %1207 = vmatprep.subr.mxu0 0.0
    %1208 = vmatpush1.msra.mxu0 0.0
    %1209 = vmatprep.subr.mxu0 0.0
    %1210 = vmatpush1.msra.mxu0 0.0
    %1211 = vmatprep.mubr.f32.mxu0 0.0
    %1212 = vmatmul.mubr.f32.gmra.mrb[0].mxu0 %v1145
    %v1213 = vpop.f32.mrb[0].mxu0
    %v1214 = vadd.f32 0.0, %v1213
    %v1215 = vpop.f32.mrb[0].mxu0
    %1216 = vdwg.mxu0
    %v1217 = vadd.f32 %v1144, %v1214
    %v1218 = vxor.u32 %v1217, 2147483648
    %v1219 = vmul.f32 %v1218, 1.442695
    %v1220 = vpow.pop %v1219
    %v1221 = vadd.f32 %v1220, 1.0
    %v1222 = vrcp.pop %v1221
    %v1223 = vmul.f32 1.0, %v1222
    %v1224 = vtanh.pop %v1217
    %v1225 = vmul.f32 %v1223, %v1132
    %1227 = vrot.lane.b32.xlu0 %v1224, 64
    %v1228 = vpop.permute.xlu0 %1227
    %v1230 = vmul.f32 %v1223, %v1228
    %1232 = vrot.lane.b32.xlu0 %v1230, 32
    %v1233 = vpop.permute.xlu0 %1232
    %v1235 = vadd.f32 %v1225, %v1233
    %v1236 = vtanh.pop %v1235
    %1238 = vrot.lane.b32.xlu0 %v1236, 64
    %v1239 = vpop.permute.xlu0 %1238
    %v1241 = vmul.f32 %v1223, %v1239
    %1243 = vrot.lane.b32.xlu0 %v1241, 32
    %v1244 = vpop.permute.xlu0 %1243
    %1246 = vst.msk [vmem:[%s86] sm:$0x3] %vm63, %v1244
    %v1247 = vld [vmem:[%s577] sm:$0x3]
    %v1248 = vsel %vm124, %v1244, 0
    %1250 = vmatprep.subr.mxu0 0.0
    %1251 = vmatpush1.msra.mxu0 %v112
    %1252 = vmatprep.subr.mxu0 0.0
    %1253 = vmatpush1.msra.mxu0 %v113
    %1254 = vmatprep.subr.mxu0 0.0
    %1255 = vmatpush1.msra.mxu0 %v114
    %1256 = vmatprep.subr.mxu0 0.0
    %1257 = vmatpush1.msra.mxu0 %v115
    %1258 = vmatprep.subr.mxu0 0.0
    %1259 = vmatpush1.msra.mxu0 0.0
    %1260 = vmatprep.subr.mxu0 0.0
    %1261 = vmatpush1.msra.mxu0 0.0
    %1262 = vmatprep.subr.mxu0 0.0
    %1263 = vmatpush1.msra.mxu0 0.0
    %1264 = vmatprep.subr.mxu0 0.0
    %1265 = vmatpush1.msra.mxu0 0.0
    %1266 = vmatprep.subr.mxu0 0.0
    %1267 = vmatpush1.msra.mxu0 0.0
    %1268 = vmatprep.subr.mxu0 0.0
    %1269 = vmatpush1.msra.mxu0 0.0
    %1270 = vmatprep.subr.mxu0 0.0
    %1271 = vmatpush1.msra.mxu0 0.0
    %1272 = vmatprep.subr.mxu0 0.0
    %1273 = vmatpush1.msra.mxu0 0.0
    %1274 = vmatprep.subr.mxu0 0.0
    %1275 = vmatpush1.msra.mxu0 0.0
    %1276 = vmatprep.subr.mxu0 0.0
    %1277 = vmatpush1.msra.mxu0 0.0
    %1278 = vmatprep.subr.mxu0 0.0
    %1279 = vmatpush1.msra.mxu0 0.0
    %1280 = vmatprep.subr.mxu0 0.0
    %1281 = vmatpush1.msra.mxu0 0.0
    %1282 = vmatprep.subr.mxu0 0.0
    %1283 = vmatpush1.msra.mxu0 0.0
    %1284 = vmatprep.subr.mxu0 0.0
    %1285 = vmatpush1.msra.mxu0 0.0
    %1286 = vmatprep.subr.mxu0 0.0
    %1287 = vmatpush1.msra.mxu0 0.0
    %1288 = vmatprep.subr.mxu0 0.0
    %1289 = vmatpush1.msra.mxu0 0.0
    %1290 = vmatprep.subr.mxu0 0.0
    %1291 = vmatpush1.msra.mxu0 0.0
    %1292 = vmatprep.subr.mxu0 0.0
    %1293 = vmatpush1.msra.mxu0 0.0
    %1294 = vmatprep.subr.mxu0 0.0
    %1295 = vmatpush1.msra.mxu0 0.0
    %1296 = vmatprep.subr.mxu0 0.0
    %1297 = vmatpush1.msra.mxu0 0.0
    %1298 = vmatprep.subr.mxu0 0.0
    %1299 = vmatpush1.msra.mxu0 0.0
    %1300 = vmatprep.subr.mxu0 0.0
    %1301 = vmatpush1.msra.mxu0 0.0
    %1302 = vmatprep.subr.mxu0 0.0
    %1303 = vmatpush1.msra.mxu0 0.0
    %1304 = vmatprep.subr.mxu0 0.0
    %1305 = vmatpush1.msra.mxu0 0.0
    %1306 = vmatprep.subr.mxu0 0.0
    %1307 = vmatpush1.msra.mxu0 0.0
    %1308 = vmatprep.subr.mxu0 0.0
    %1309 = vmatpush1.msra.mxu0 0.0
    %1310 = vmatprep.subr.mxu0 0.0
    %1311 = vmatpush1.msra.mxu0 0.0
    %1312 = vmatprep.subr.mxu0 0.0
    %1313 = vmatpush1.msra.mxu0 0.0
    %1314 = vmatprep.mubr.f32.mxu0 0.0
    %1315 = vmatmul.mubr.f32.gmra.mrb[0].mxu0 %v1248
    %v1316 = vpop.f32.mrb[0].mxu0
    %v1317 = vadd.f32 0.0, %v1316
    %v1318 = vpop.f32.mrb[0].mxu0
    %1319 = vdwg.mxu0
    %v1320 = vadd.f32 %v1247, %v1317
    %v1321 = vxor.u32 %v1320, 2147483648
    %v1322 = vmul.f32 %v1321, 1.442695
    %v1323 = vpow.pop %v1322
    %v1324 = vadd.f32 %v1323, 1.0
    %v1325 = vrcp.pop %v1324
    %v1326 = vmul.f32 1.0, %v1325
    %v1327 = vtanh.pop %v1320
    %v1328 = vmul.f32 %v1326, %v1235
    %1330 = vrot.lane.b32.xlu0 %v1327, 64
    %v1331 = vpop.permute.xlu0 %1330
    %v1333 = vmul.f32 %v1326, %v1331
    %1335 = vrot.lane.b32.xlu0 %v1333, 32
    %v1336 = vpop.permute.xlu0 %1335
    %v1338 = vadd.f32 %v1328, %v1336
    %v1339 = vtanh.pop %v1338
    %1341 = vrot.lane.b32.xlu0 %v1339, 64
    %v1342 = vpop.permute.xlu0 %1341
    %v1344 = vmul.f32 %v1326, %v1342
    %1346 = vrot.lane.b32.xlu0 %v1344, 32
    %v1347 = vpop.permute.xlu0 %1346
    %1349 = vst.msk [vmem:[%s92] sm:$0x3] %vm63, %v1347
    %v1350 = vld [vmem:[%s653] sm:$0x3]
    %v1351 = vsel %vm124, %v1347, 0
    %1353 = vmatprep.subr.mxu0 0.0
    %1354 = vmatpush1.msra.mxu0 %v112
    %1355 = vmatprep.subr.mxu0 0.0
    %1356 = vmatpush1.msra.mxu0 %v113
    %1357 = vmatprep.subr.mxu0 0.0
    %1358 = vmatpush1.msra.mxu0 %v114
    %1359 = vmatprep.subr.mxu0 0.0
    %1360 = vmatpush1.msra.mxu0 %v115
    %1361 = vmatprep.subr.mxu0 0.0
    %1362 = vmatpush1.msra.mxu0 0.0
    %1363 = vmatprep.subr.mxu0 0.0
    %1364 = vmatpush1.msra.mxu0 0.0
    %1365 = vmatprep.subr.mxu0 0.0
    %1366 = vmatpush1.msra.mxu0 0.0
    %1367 = vmatprep.subr.mxu0 0.0
    %1368 = vmatpush1.msra.mxu0 0.0
    %1369 = vmatprep.subr.mxu0 0.0
    %1370 = vmatpush1.msra.mxu0 0.0
    %1371 = vmatprep.subr.mxu0 0.0
    %1372 = vmatpush1.msra.mxu0 0.0
    %1373 = vmatprep.subr.mxu0 0.0
    %1374 = vmatpush1.msra.mxu0 0.0
    %1375 = vmatprep.subr.mxu0 0.0
    %1376 = vmatpush1.msra.mxu0 0.0
    %1377 = vmatprep.subr.mxu0 0.0
    %1378 = vmatpush1.msra.mxu0 0.0
    %1379 = vmatprep.subr.mxu0 0.0
    %1380 = vmatpush1.msra.mxu0 0.0
    %1381 = vmatprep.subr.mxu0 0.0
    %1382 = vmatpush1.msra.mxu0 0.0
    %1383 = vmatprep.subr.mxu0 0.0
    %1384 = vmatpush1.msra.mxu0 0.0
    %1385 = vmatprep.subr.mxu0 0.0
    %1386 = vmatpush1.msra.mxu0 0.0
    %1387 = vmatprep.subr.mxu0 0.0
    %1388 = vmatpush1.msra.mxu0 0.0
    %1389 = vmatprep.subr.mxu0 0.0
    %1390 = vmatpush1.msra.mxu0 0.0
    %1391 = vmatprep.subr.mxu0 0.0
    %1392 = vmatpush1.msra.mxu0 0.0
    %1393 = vmatprep.subr.mxu0 0.0
    %1394 = vmatpush1.msra.mxu0 0.0
    %1395 = vmatprep.subr.mxu0 0.0
    %1396 = vmatpush1.msra.mxu0 0.0
    %1397 = vmatprep.subr.mxu0 0.0
    %1398 = vmatpush1.msra.mxu0 0.0
    %1399 = vmatprep.subr.mxu0 0.0
    %1400 = vmatpush1.msra.mxu0 0.0
    %1401 = vmatprep.subr.mxu0 0.0
    %1402 = vmatpush1.msra.mxu0 0.0
    %1403 = vmatprep.subr.mxu0 0.0
    %1404 = vmatpush1.msra.mxu0 0.0
    %1405 = vmatprep.subr.mxu0 0.0
    %1406 = vmatpush1.msra.mxu0 0.0
    %1407 = vmatprep.subr.mxu0 0.0
    %1408 = vmatpush1.msra.mxu0 0.0
    %1409 = vmatprep.subr.mxu0 0.0
    %1410 = vmatpush1.msra.mxu0 0.0
    %1411 = vmatprep.subr.mxu0 0.0
    %1412 = vmatpush1.msra.mxu0 0.0
    %1413 = vmatprep.subr.mxu0 0.0
    %1414 = vmatpush1.msra.mxu0 0.0
    %1415 = vmatprep.subr.mxu0 0.0
    %1416 = vmatpush1.msra.mxu0 0.0
    %1417 = vmatprep.mubr.f32.mxu0 0.0
    %1418 = vmatmul.mubr.f32.gmra.mrb[0].mxu0 %v1351
    %v1419 = vpop.f32.mrb[0].mxu0
    %v1420 = vadd.f32 0.0, %v1419
    %v1421 = vpop.f32.mrb[0].mxu0
    %1422 = vdwg.mxu0
    %v1423 = vadd.f32 %v1350, %v1420
    %v1424 = vxor.u32 %v1423, 2147483648
    %v1425 = vmul.f32 %v1424, 1.442695
    %v1426 = vpow.pop %v1425
    %v1427 = vadd.f32 %v1426, 1.0
    %v1428 = vrcp.pop %v1427
    %v1429 = vmul.f32 1.0, %v1428
    %v1430 = vtanh.pop %v1423
    %v1431 = vmul.f32 %v1429, %v1338
    %1433 = vrot.lane.b32.xlu0 %v1430, 64
    %v1434 = vpop.permute.xlu0 %1433
    %v1436 = vmul.f32 %v1429, %v1434
    %1438 = vrot.lane.b32.xlu0 %v1436, 32
    %v1439 = vpop.permute.xlu0 %1438
    %v1441 = vadd.f32 %v1431, %v1439
    %v1442 = vtanh.pop %v1441
    %1444 = vrot.lane.b32.xlu0 %v1442, 64
    %v1445 = vpop.permute.xlu0 %1444
    %v1447 = vmul.f32 %v1429, %v1445
    %1449 = vrot.lane.b32.xlu0 %v1447, 32
    %v1450 = vpop.permute.xlu0 %1449
    %1452 = vst.msk [vmem:[%s98] sm:$0x3] %vm63, %v1450
    %v1453 = vld [vmem:[%s729] sm:$0x3]
    %v1454 = vsel %vm124, %v1450, 0
    %1456 = vmatprep.subr.mxu0 0.0
    %1457 = vmatpush1.msra.mxu0 %v112
    %1458 = vmatprep.subr.mxu0 0.0
    %1459 = vmatpush1.msra.mxu0 %v113
    %1460 = vmatprep.subr.mxu0 0.0
    %1461 = vmatpush1.msra.mxu0 %v114
    %1462 = vmatprep.subr.mxu0 0.0
    %1463 = vmatpush1.msra.mxu0 %v115
    %1464 = vmatprep.subr.mxu0 0.0
    %1465 = vmatpush1.msra.mxu0 0.0
    %1466 = vmatprep.subr.mxu0 0.0
    %1467 = vmatpush1.msra.mxu0 0.0
    %1468 = vmatprep.subr.mxu0 0.0
    %1469 = vmatpush1.msra.mxu0 0.0
    %1470 = vmatprep.subr.mxu0 0.0
    %1471 = vmatpush1.msra.mxu0 0.0
    %1472 = vmatprep.subr.mxu0 0.0
    %1473 = vmatpush1.msra.mxu0 0.0
    %1474 = vmatprep.subr.mxu0 0.0
    %1475 = vmatpush1.msra.mxu0 0.0
    %1476 = vmatprep.subr.mxu0 0.0
    %1477 = vmatpush1.msra.mxu0 0.0
    %1478 = vmatprep.subr.mxu0 0.0
    %1479 = vmatpush1.msra.mxu0 0.0
    %1480 = vmatprep.subr.mxu0 0.0
    %1481 = vmatpush1.msra.mxu0 0.0
    %1482 = vmatprep.subr.mxu0 0.0
    %1483 = vmatpush1.msra.mxu0 0.0
    %1484 = vmatprep.subr.mxu0 0.0
    %1485 = vmatpush1.msra.mxu0 0.0
    %1486 = vmatprep.subr.mxu0 0.0
    %1487 = vmatpush1.msra.mxu0 0.0
    %1488 = vmatprep.subr.mxu0 0.0
    %1489 = vmatpush1.msra.mxu0 0.0
    %1490 = vmatprep.subr.mxu0 0.0
    %1491 = vmatpush1.msra.mxu0 0.0
    %1492 = vmatprep.subr.mxu0 0.0
    %1493 = vmatpush1.msra.mxu0 0.0
    %1494 = vmatprep.subr.mxu0 0.0
    %1495 = vmatpush1.msra.mxu0 0.0
    %1496 = vmatprep.subr.mxu0 0.0
    %1497 = vmatpush1.msra.mxu0 0.0
    %1498 = vmatprep.subr.mxu0 0.0
    %1499 = vmatpush1.msra.mxu0 0.0
    %1500 = vmatprep.subr.mxu0 0.0
    %1501 = vmatpush1.msra.mxu0 0.0
    %1502 = vmatprep.subr.mxu0 0.0
    %1503 = vmatpush1.msra.mxu0 0.0
    %1504 = vmatprep.subr.mxu0 0.0
    %1505 = vmatpush1.msra.mxu0 0.0
    %1506 = vmatprep.subr.mxu0 0.0
    %1507 = vmatpush1.msra.mxu0 0.0
    %1508 = vmatprep.subr.mxu0 0.0
    %1509 = vmatpush1.msra.mxu0 0.0
    %1510 = vmatprep.subr.mxu0 0.0
    %1511 = vmatpush1.msra.mxu0 0.0
    %1512 = vmatprep.subr.mxu0 0.0
    %1513 = vmatpush1.msra.mxu0 0.0
    %1514 = vmatprep.subr.mxu0 0.0
    %1515 = vmatpush1.msra.mxu0 0.0
    %1516 = vmatprep.subr.mxu0 0.0
    %1517 = vmatpush1.msra.mxu0 0.0
    %1518 = vmatprep.subr.mxu0 0.0
    %1519 = vmatpush1.msra.mxu0 0.0
    %1520 = vmatprep.mubr.f32.mxu0 0.0
    %1521 = vmatmul.mubr.f32.gmra.mrb[0].mxu0 %v1454
    %v1522 = vpop.f32.mrb[0].mxu0
    %v1523 = vadd.f32 0.0, %v1522
    %v1524 = vpop.f32.mrb[0].mxu0
    %1525 = vdwg.mxu0
    %v1526 = vadd.f32 %v1453, %v1523
    %v1527 = vxor.u32 %v1526, 2147483648
    %v1528 = vmul.f32 %v1527, 1.442695
    %v1529 = vpow.pop %v1528
    %v1530 = vadd.f32 %v1529, 1.0
    %v1531 = vrcp.pop %v1530
    %v1532 = vmul.f32 1.0, %v1531
    %v1533 = vtanh.pop %v1526
    %v1534 = vmul.f32 %v1532, %v1441
    %1536 = vrot.lane.b32.xlu0 %v1533, 64
    %v1537 = vpop.permute.xlu0 %1536
    %v1539 = vmul.f32 %v1532, %v1537
    %1541 = vrot.lane.b32.xlu0 %v1539, 32
    %v1542 = vpop.permute.xlu0 %1541
    %v1544 = vadd.f32 %v1534, %v1542
    %v1545 = vtanh.pop %v1544
    %1547 = vrot.lane.b32.xlu0 %v1545, 64
    %v1548 = vpop.permute.xlu0 %1547
    %v1550 = vmul.f32 %v1532, %v1548
    %1552 = vrot.lane.b32.xlu0 %v1550, 32
    %v1553 = vpop.permute.xlu0 %1552
    %1555 = vst.msk [vmem:[%s103] sm:$0x3] %vm63, %v1553
    %s1556 = scalar_lea.vmem [#allocation4], 32
    %v1557 = vld [vmem:[%s1556] sm:$0xff]
    %v1558 = vld [vmem:[%s1556 + $0x8] sm:$0xff]
    %v1559 = vld [vmem:[%s1556 + $0x10] sm:$0xff]
    %v1560 = vld [vmem:[%s1556 + $0x18] sm:$0xff]
    %s1561 = scalar_lea.vmem [#allocation7], 32
    %v1562 = vld [vmem:[%s1561] sm:$0xff]
    %v1563 = vld [vmem:[%s1561 + $0x8] sm:$0xff]
    %v1564 = vld [vmem:[%s1561 + $0x10] sm:$0xff]
    %v1565 = vld [vmem:[%s1561 + $0x18] sm:$0xff]
    %s1566 = scalar_lea.vmem %s3, 1
    %v1567 = vld [vmem:[%s1566] sm:$0x1]
    %v1569 = vlaneseq
    %v1570 = vshrl.u32 %v1569, 7
    %v1571 = vsub.s32 0, %v1570
    %v1572 = vrot.slane %v1567, %v1571
    %v1574 = vld [vmem:[#allocation2] sm:$0x3]
    %v1576 = vsel %vm124, %v1574, 0
    %1578 = vmatprep.subr.mxu0 0.0
    %1579 = vmatpush1.msra.mxu0 %v1557
    %1580 = vmatprep.subr.mxu0 0.0
    %1581 = vmatpush1.msra.mxu0 %v1558
    %1582 = vmatprep.subr.mxu0 0.0
    %1583 = vmatpush1.msra.mxu0 %v1559
    %1584 = vmatprep.subr.mxu0 0.0
    %1585 = vmatpush1.msra.mxu0 %v1560
    %1586 = vmatprep.subr.mxu0 0.0
    %1587 = vmatpush1.msra.mxu0 0.0
    %1588 = vmatprep.subr.mxu0 0.0
    %1589 = vmatpush1.msra.mxu0 0.0
    %1590 = vmatprep.subr.mxu0 0.0
    %1591 = vmatpush1.msra.mxu0 0.0
    %1592 = vmatprep.subr.mxu0 0.0
    %1593 = vmatpush1.msra.mxu0 0.0
    %1594 = vmatprep.subr.mxu0 0.0
    %1595 = vmatpush1.msra.mxu0 0.0
    %1596 = vmatprep.subr.mxu0 0.0
    %1597 = vmatpush1.msra.mxu0 0.0
    %1598 = vmatprep.subr.mxu0 0.0
    %1599 = vmatpush1.msra.mxu0 0.0
    %1600 = vmatprep.subr.mxu0 0.0
    %1601 = vmatpush1.msra.mxu0 0.0
    %1602 = vmatprep.subr.mxu0 0.0
    %1603 = vmatpush1.msra.mxu0 0.0
    %1604 = vmatprep.subr.mxu0 0.0
    %1605 = vmatpush1.msra.mxu0 0.0
    %1606 = vmatprep.subr.mxu0 0.0
    %1607 = vmatpush1.msra.mxu0 0.0
    %1608 = vmatprep.subr.mxu0 0.0
    %1609 = vmatpush1.msra.mxu0 0.0
    %1610 = vmatprep.subr.mxu0 0.0
    %1611 = vmatpush1.msra.mxu0 0.0
    %1612 = vmatprep.subr.mxu0 0.0
    %1613 = vmatpush1.msra.mxu0 0.0
    %1614 = vmatprep.subr.mxu0 0.0
    %1615 = vmatpush1.msra.mxu0 0.0
    %1616 = vmatprep.subr.mxu0 0.0
    %1617 = vmatpush1.msra.mxu0 0.0
    %1618 = vmatprep.subr.mxu0 0.0
    %1619 = vmatpush1.msra.mxu0 0.0
    %1620 = vmatprep.subr.mxu0 0.0
    %1621 = vmatpush1.msra.mxu0 0.0
    %1622 = vmatprep.subr.mxu0 0.0
    %1623 = vmatpush1.msra.mxu0 0.0
    %1624 = vmatprep.subr.mxu0 0.0
    %1625 = vmatpush1.msra.mxu0 0.0
    %1626 = vmatprep.subr.mxu0 0.0
    %1627 = vmatpush1.msra.mxu0 0.0
    %1628 = vmatprep.subr.mxu0 0.0
    %1629 = vmatpush1.msra.mxu0 0.0
    %1630 = vmatprep.subr.mxu0 0.0
    %1631 = vmatpush1.msra.mxu0 0.0
    %1632 = vmatprep.subr.mxu0 0.0
    %1633 = vmatpush1.msra.mxu0 0.0
    %1634 = vmatprep.subr.mxu0 0.0
    %1635 = vmatpush1.msra.mxu0 0.0
    %1636 = vmatprep.subr.mxu0 0.0
    %1637 = vmatpush1.msra.mxu0 0.0
    %1638 = vmatprep.subr.mxu0 0.0
    %1639 = vmatpush1.msra.mxu0 0.0
    %1640 = vmatprep.subr.mxu0 0.0
    %1641 = vmatpush1.msra.mxu0 0.0
    %1642 = vmatprep.mubr.f32.mxu0 0.0
    %1643 = vmatmul.mubr.f32.gmra.mrb[0].mxu0 %v1576
    %v1644 = vpop.f32.mrb[0].mxu0
    %v1645 = vadd.f32 %v1572, %v1644
    %v1646 = vpop.f32.mrb[0].mxu0
    %1647 = vdwg.mxu0
    %1648 = vst [vmem:[#allocation3] sm:$0x3] %v1645
    %v1649 = vld [vmem:[%s68] sm:$0x3]
    %v1651 = vsel %vm124, %v1649, 0
    %1653 = vmatprep.subr.mxu0 0.0
    %1654 = vmatpush1.msra.mxu0 %v1557
    %1655 = vmatprep.subr.mxu0 0.0
    %1656 = vmatpush1.msra.mxu0 %v1558
    %1657 = vmatprep.subr.mxu0 0.0
    %1658 = vmatpush1.msra.mxu0 %v1559
    %1659 = vmatprep.subr.mxu0 0.0
    %1660 = vmatpush1.msra.mxu0 %v1560
    %1661 = vmatprep.subr.mxu0 0.0
    %1662 = vmatpush1.msra.mxu0 0.0
    %1663 = vmatprep.subr.mxu0 0.0
    %1664 = vmatpush1.msra.mxu0 0.0
    %1665 = vmatprep.subr.mxu0 0.0
    %1666 = vmatpush1.msra.mxu0 0.0
    %1667 = vmatprep.subr.mxu0 0.0
    %1668 = vmatpush1.msra.mxu0 0.0
    %1669 = vmatprep.subr.mxu0 0.0
    %1670 = vmatpush1.msra.mxu0 0.0
    %1671 = vmatprep.subr.mxu0 0.0
    %1672 = vmatpush1.msra.mxu0 0.0
    %1673 = vmatprep.subr.mxu0 0.0
    %1674 = vmatpush1.msra.mxu0 0.0
    %1675 = vmatprep.subr.mxu0 0.0
    %1676 = vmatpush1.msra.mxu0 0.0
    %1677 = vmatprep.subr.mxu0 0.0
    %1678 = vmatpush1.msra.mxu0 0.0
    %1679 = vmatprep.subr.mxu0 0.0
    %1680 = vmatpush1.msra.mxu0 0.0
    %1681 = vmatprep.subr.mxu0 0.0
    %1682 = vmatpush1.msra.mxu0 0.0
    %1683 = vmatprep.subr.mxu0 0.0
    %1684 = vmatpush1.msra.mxu0 0.0
    %1685 = vmatprep.subr.mxu0 0.0
    %1686 = vmatpush1.msra.mxu0 0.0
    %1687 = vmatprep.subr.mxu0 0.0
    %1688 = vmatpush1.msra.mxu0 0.0
    %1689 = vmatprep.subr.mxu0 0.0
    %1690 = vmatpush1.msra.mxu0 0.0
    %1691 = vmatprep.subr.mxu0 0.0
    %1692 = vmatpush1.msra.mxu0 0.0
    %1693 = vmatprep.subr.mxu0 0.0
    %1694 = vmatpush1.msra.mxu0 0.0
    %1695 = vmatprep.subr.mxu0 0.0
    %1696 = vmatpush1.msra.mxu0 0.0
    %1697 = vmatprep.subr.mxu0 0.0
    %1698 = vmatpush1.msra.mxu0 0.0
    %1699 = vmatprep.subr.mxu0 0.0
    %1700 = vmatpush1.msra.mxu0 0.0
    %1701 = vmatprep.subr.mxu0 0.0
    %1702 = vmatpush1.msra.mxu0 0.0
    %1703 = vmatprep.subr.mxu0 0.0
    %1704 = vmatpush1.msra.mxu0 0.0
    %1705 = vmatprep.subr.mxu0 0.0
    %1706 = vmatpush1.msra.mxu0 0.0
    %1707 = vmatprep.subr.mxu0 0.0
    %1708 = vmatpush1.msra.mxu0 0.0
    %1709 = vmatprep.subr.mxu0 0.0
    %1710 = vmatpush1.msra.mxu0 0.0
    %1711 = vmatprep.subr.mxu0 0.0
    %1712 = vmatpush1.msra.mxu0 0.0
    %1713 = vmatprep.subr.mxu0 0.0
    %1714 = vmatpush1.msra.mxu0 0.0
    %1715 = vmatprep.subr.mxu0 0.0
    %1716 = vmatpush1.msra.mxu0 0.0
    %1717 = vmatprep.mubr.f32.mxu0 0.0
    %1718 = vmatmul.mubr.f32.gmra.mrb[0].mxu0 %v1651
    %v1719 = vpop.f32.mrb[0].mxu0
    %v1720 = vadd.f32 %v1572, %v1719
    %v1721 = vpop.f32.mrb[0].mxu0
    %1722 = vdwg.mxu0
    %1723 = vst [vmem:[%s273] sm:$0x3] %v1720
    %v1724 = vld [vmem:[%s74] sm:$0x3]
    %v1726 = vsel %vm124, %v1724, 0
    %1728 = vmatprep.subr.mxu0 0.0
    %1729 = vmatpush1.msra.mxu0 %v1557
    %1730 = vmatprep.subr.mxu0 0.0
    %1731 = vmatpush1.msra.mxu0 %v1558
    %1732 = vmatprep.subr.mxu0 0.0
    %1733 = vmatpush1.msra.mxu0 %v1559
    %1734 = vmatprep.subr.mxu0 0.0
    %1735 = vmatpush1.msra.mxu0 %v1560
    %1736 = vmatprep.subr.mxu0 0.0
    %1737 = vmatpush1.msra.mxu0 0.0
    %1738 = vmatprep.subr.mxu0 0.0
    %1739 = vmatpush1.msra.mxu0 0.0
    %1740 = vmatprep.subr.mxu0 0.0
    %1741 = vmatpush1.msra.mxu0 0.0
    %1742 = vmatprep.subr.mxu0 0.0
    %1743 = vmatpush1.msra.mxu0 0.0
    %1744 = vmatprep.subr.mxu0 0.0
    %1745 = vmatpush1.msra.mxu0 0.0
    %1746 = vmatprep.subr.mxu0 0.0
    %1747 = vmatpush1.msra.mxu0 0.0
    %1748 = vmatprep.subr.mxu0 0.0
    %1749 = vmatpush1.msra.mxu0 0.0
    %1750 = vmatprep.subr.mxu0 0.0
    %1751 = vmatpush1.msra.mxu0 0.0
    %1752 = vmatprep.subr.mxu0 0.0
    %1753 = vmatpush1.msra.mxu0 0.0
    %1754 = vmatprep.subr.mxu0 0.0
    %1755 = vmatpush1.msra.mxu0 0.0
    %1756 = vmatprep.subr.mxu0 0.0
    %1757 = vmatpush1.msra.mxu0 0.0
    %1758 = vmatprep.subr.mxu0 0.0
    %1759 = vmatpush1.msra.mxu0 0.0
    %1760 = vmatprep.subr.mxu0 0.0
    %1761 = vmatpush1.msra.mxu0 0.0
    %1762 = vmatprep.subr.mxu0 0.0
    %1763 = vmatpush1.msra.mxu0 0.0
    %1764 = vmatprep.subr.mxu0 0.0
    %1765 = vmatpush1.msra.mxu0 0.0
    %1766 = vmatprep.subr.mxu0 0.0
    %1767 = vmatpush1.msra.mxu0 0.0
    %1768 = vmatprep.subr.mxu0 0.0
    %1769 = vmatpush1.msra.mxu0 0.0
    %1770 = vmatprep.subr.mxu0 0.0
    %1771 = vmatpush1.msra.mxu0 0.0
    %1772 = vmatprep.subr.mxu0 0.0
    %1773 = vmatpush1.msra.mxu0 0.0
    %1774 = vmatprep.subr.mxu0 0.0
    %1775 = vmatpush1.msra.mxu0 0.0
    %1776 = vmatprep.subr.mxu0 0.0
    %1777 = vmatpush1.msra.mxu0 0.0
    %1778 = vmatprep.subr.mxu0 0.0
    %1779 = vmatpush1.msra.mxu0 0.0
    %1780 = vmatprep.subr.mxu0 0.0
    %1781 = vmatpush1.msra.mxu0 0.0
    %1782 = vmatprep.subr.mxu0 0.0
    %1783 = vmatpush1.msra.mxu0 0.0
    %1784 = vmatprep.subr.mxu0 0.0
    %1785 = vmatpush1.msra.mxu0 0.0
    %1786 = vmatprep.subr.mxu0 0.0
    %1787 = vmatpush1.msra.mxu0 0.0
    %1788 = vmatprep.subr.mxu0 0.0
    %1789 = vmatpush1.msra.mxu0 0.0
    %1790 = vmatprep.subr.mxu0 0.0
    %1791 = vmatpush1.msra.mxu0 0.0
    %1792 = vmatprep.mubr.f32.mxu0 0.0
    %1793 = vmatmul.mubr.f32.gmra.mrb[0].mxu0 %v1726
    %v1794 = vpop.f32.mrb[0].mxu0
    %v1795 = vadd.f32 %v1572, %v1794
    %v1796 = vpop.f32.mrb[0].mxu0
    %1797 = vdwg.mxu0
    %1798 = vst [vmem:[%s349] sm:$0x3] %v1795
    %v1799 = vld [vmem:[%s80] sm:$0x3]
    %v1801 = vsel %vm124, %v1799, 0
    %1803 = vmatprep.subr.mxu0 0.0
    %1804 = vmatpush1.msra.mxu0 %v1557
    %1805 = vmatprep.subr.mxu0 0.0
    %1806 = vmatpush1.msra.mxu0 %v1558
    %1807 = vmatprep.subr.mxu0 0.0
    %1808 = vmatpush1.msra.mxu0 %v1559
    %1809 = vmatprep.subr.mxu0 0.0
    %1810 = vmatpush1.msra.mxu0 %v1560
    %1811 = vmatprep.subr.mxu0 0.0
    %1812 = vmatpush1.msra.mxu0 0.0
    %1813 = vmatprep.subr.mxu0 0.0
    %1814 = vmatpush1.msra.mxu0 0.0
    %1815 = vmatprep.subr.mxu0 0.0
    %1816 = vmatpush1.msra.mxu0 0.0
    %1817 = vmatprep.subr.mxu0 0.0
    %1818 = vmatpush1.msra.mxu0 0.0
    %1819 = vmatprep.subr.mxu0 0.0
    %1820 = vmatpush1.msra.mxu0 0.0
    %1821 = vmatprep.subr.mxu0 0.0
    %1822 = vmatpush1.msra.mxu0 0.0
    %1823 = vmatprep.subr.mxu0 0.0
    %1824 = vmatpush1.msra.mxu0 0.0
    %1825 = vmatprep.subr.mxu0 0.0
    %1826 = vmatpush1.msra.mxu0 0.0
    %1827 = vmatprep.subr.mxu0 0.0
    %1828 = vmatpush1.msra.mxu0 0.0
    %1829 = vmatprep.subr.mxu0 0.0
    %1830 = vmatpush1.msra.mxu0 0.0
    %1831 = vmatprep.subr.mxu0 0.0
    %1832 = vmatpush1.msra.mxu0 0.0
    %1833 = vmatprep.subr.mxu0 0.0
    %1834 = vmatpush1.msra.mxu0 0.0
    %1835 = vmatprep.subr.mxu0 0.0
    %1836 = vmatpush1.msra.mxu0 0.0
    %1837 = vmatprep.subr.mxu0 0.0
    %1838 = vmatpush1.msra.mxu0 0.0
    %1839 = vmatprep.subr.mxu0 0.0
    %1840 = vmatpush1.msra.mxu0 0.0
    %1841 = vmatprep.subr.mxu0 0.0
    %1842 = vmatpush1.msra.mxu0 0.0
    %1843 = vmatprep.subr.mxu0 0.0
    %1844 = vmatpush1.msra.mxu0 0.0
    %1845 = vmatprep.subr.mxu0 0.0
    %1846 = vmatpush1.msra.mxu0 0.0
    %1847 = vmatprep.subr.mxu0 0.0
    %1848 = vmatpush1.msra.mxu0 0.0
    %1849 = vmatprep.subr.mxu0 0.0
    %1850 = vmatpush1.msra.mxu0 0.0
    %1851 = vmatprep.subr.mxu0 0.0
    %1852 = vmatpush1.msra.mxu0 0.0
    %1853 = vmatprep.subr.mxu0 0.0
    %1854 = vmatpush1.msra.mxu0 0.0
    %1855 = vmatprep.subr.mxu0 0.0
    %1856 = vmatpush1.msra.mxu0 0.0
    %1857 = vmatprep.subr.mxu0 0.0
    %1858 = vmatpush1.msra.mxu0 0.0
    %1859 = vmatprep.subr.mxu0 0.0
    %1860 = vmatpush1.msra.mxu0 0.0
    %1861 = vmatprep.subr.mxu0 0.0
    %1862 = vmatpush1.msra.mxu0 0.0
    %1863 = vmatprep.subr.mxu0 0.0
    %1864 = vmatpush1.msra.mxu0 0.0
    %1865 = vmatprep.subr.mxu0 0.0
    %1866 = vmatpush1.msra.mxu0 0.0
    %1867 = vmatprep.mubr.f32.mxu0 0.0
    %1868 = vmatmul.mubr.f32.gmra.mrb[0].mxu0 %v1801
    %v1869 = vpop.f32.mrb[0].mxu0
    %v1870 = vadd.f32 %v1572, %v1869
    %v1871 = vpop.f32.mrb[0].mxu0
    %1872 = vdwg.mxu0
    %1873 = vst [vmem:[%s425] sm:$0x3] %v1870
    %v1874 = vld [vmem:[%s86] sm:$0x3]
    %v1876 = vsel %vm124, %v1874, 0
    %1878 = vmatprep.subr.mxu0 0.0
    %1879 = vmatpush1.msra.mxu0 %v1557
    %1880 = vmatprep.subr.mxu0 0.0
    %1881 = vmatpush1.msra.mxu0 %v1558
    %1882 = vmatprep.subr.mxu0 0.0
    %1883 = vmatpush1.msra.mxu0 %v1559
    %1884 = vmatprep.subr.mxu0 0.0
    %1885 = vmatpush1.msra.mxu0 %v1560
    %1886 = vmatprep.subr.mxu0 0.0
    %1887 = vmatpush1.msra.mxu0 0.0
    %1888 = vmatprep.subr.mxu0 0.0
    %1889 = vmatpush1.msra.mxu0 0.0
    %1890 = vmatprep.subr.mxu0 0.0
    %1891 = vmatpush1.msra.mxu0 0.0
    %1892 = vmatprep.subr.mxu0 0.0
    %1893 = vmatpush1.msra.mxu0 0.0
    %1894 = vmatprep.subr.mxu0 0.0
    %1895 = vmatpush1.msra.mxu0 0.0
    %1896 = vmatprep.subr.mxu0 0.0
    %1897 = vmatpush1.msra.mxu0 0.0
    %1898 = vmatprep.subr.mxu0 0.0
    %1899 = vmatpush1.msra.mxu0 0.0
    %1900 = vmatprep.subr.mxu0 0.0
    %1901 = vmatpush1.msra.mxu0 0.0
    %1902 = vmatprep.subr.mxu0 0.0
    %1903 = vmatpush1.msra.mxu0 0.0
    %1904 = vmatprep.subr.mxu0 0.0
    %1905 = vmatpush1.msra.mxu0 0.0
    %1906 = vmatprep.subr.mxu0 0.0
    %1907 = vmatpush1.msra.mxu0 0.0
    %1908 = vmatprep.subr.mxu0 0.0
    %1909 = vmatpush1.msra.mxu0 0.0
    %1910 = vmatprep.subr.mxu0 0.0
    %1911 = vmatpush1.msra.mxu0 0.0
    %1912 = vmatprep.subr.mxu0 0.0
    %1913 = vmatpush1.msra.mxu0 0.0
    %1914 = vmatprep.subr.mxu0 0.0
    %1915 = vmatpush1.msra.mxu0 0.0
    %1916 = vmatprep.subr.mxu0 0.0
    %1917 = vmatpush1.msra.mxu0 0.0
    %1918 = vmatprep.subr.mxu0 0.0
    %1919 = vmatpush1.msra.mxu0 0.0
    %1920 = vmatprep.subr.mxu0 0.0
    %1921 = vmatpush1.msra.mxu0 0.0
    %1922 = vmatprep.subr.mxu0 0.0
    %1923 = vmatpush1.msra.mxu0 0.0
    %1924 = vmatprep.subr.mxu0 0.0
    %1925 = vmatpush1.msra.mxu0 0.0
    %1926 = vmatprep.subr.mxu0 0.0
    %1927 = vmatpush1.msra.mxu0 0.0
    %1928 = vmatprep.subr.mxu0 0.0
    %1929 = vmatpush1.msra.mxu0 0.0
    %1930 = vmatprep.subr.mxu0 0.0
    %1931 = vmatpush1.msra.mxu0 0.0
    %1932 = vmatprep.subr.mxu0 0.0
    %1933 = vmatpush1.msra.mxu0 0.0
    %1934 = vmatprep.subr.mxu0 0.0
    %1935 = vmatpush1.msra.mxu0 0.0
    %1936 = vmatprep.subr.mxu0 0.0
    %1937 = vmatpush1.msra.mxu0 0.0
    %1938 = vmatprep.subr.mxu0 0.0
    %1939 = vmatpush1.msra.mxu0 0.0
    %1940 = vmatprep.subr.mxu0 0.0
    %1941 = vmatpush1.msra.mxu0 0.0
    %1942 = vmatprep.mubr.f32.mxu0 0.0
    %1943 = vmatmul.mubr.f32.gmra.mrb[0].mxu0 %v1876
    %v1944 = vpop.f32.mrb[0].mxu0
    %v1945 = vadd.f32 %v1572, %v1944
    %v1946 = vpop.f32.mrb[0].mxu0
    %1947 = vdwg.mxu0
    %1948 = vst [vmem:[%s501] sm:$0x3] %v1945
    %v1949 = vld [vmem:[%s92] sm:$0x3]
    %v1951 = vsel %vm124, %v1949, 0
    %1953 = vmatprep.subr.mxu0 0.0
    %1954 = vmatpush1.msra.mxu0 %v1557
    %1955 = vmatprep.subr.mxu0 0.0
    %1956 = vmatpush1.msra.mxu0 %v1558
    %1957 = vmatprep.subr.mxu0 0.0
    %1958 = vmatpush1.msra.mxu0 %v1559
    %1959 = vmatprep.subr.mxu0 0.0
    %1960 = vmatpush1.msra.mxu0 %v1560
    %1961 = vmatprep.subr.mxu0 0.0
    %1962 = vmatpush1.msra.mxu0 0.0
    %1963 = vmatprep.subr.mxu0 0.0
    %1964 = vmatpush1.msra.mxu0 0.0
    %1965 = vmatprep.subr.mxu0 0.0
    %1966 = vmatpush1.msra.mxu0 0.0
    %1967 = vmatprep.subr.mxu0 0.0
    %1968 = vmatpush1.msra.mxu0 0.0
    %1969 = vmatprep.subr.mxu0 0.0
    %1970 = vmatpush1.msra.mxu0 0.0
    %1971 = vmatprep.subr.mxu0 0.0
    %1972 = vmatpush1.msra.mxu0 0.0
    %1973 = vmatprep.subr.mxu0 0.0
    %1974 = vmatpush1.msra.mxu0 0.0
    %1975 = vmatprep.subr.mxu0 0.0
    %1976 = vmatpush1.msra.mxu0 0.0
    %1977 = vmatprep.subr.mxu0 0.0
    %1978 = vmatpush1.msra.mxu0 0.0
    %1979 = vmatprep.subr.mxu0 0.0
    %1980 = vmatpush1.msra.mxu0 0.0
    %1981 = vmatprep.subr.mxu0 0.0
    %1982 = vmatpush1.msra.mxu0 0.0
    %1983 = vmatprep.subr.mxu0 0.0
    %1984 = vmatpush1.msra.mxu0 0.0
    %1985 = vmatprep.subr.mxu0 0.0
    %1986 = vmatpush1.msra.mxu0 0.0
    %1987 = vmatprep.subr.mxu0 0.0
    %1988 = vmatpush1.msra.mxu0 0.0
    %1989 = vmatprep.subr.mxu0 0.0
    %1990 = vmatpush1.msra.mxu0 0.0
    %1991 = vmatprep.subr.mxu0 0.0
    %1992 = vmatpush1.msra.mxu0 0.0
    %1993 = vmatprep.subr.mxu0 0.0
    %1994 = vmatpush1.msra.mxu0 0.0
    %1995 = vmatprep.subr.mxu0 0.0
    %1996 = vmatpush1.msra.mxu0 0.0
    %1997 = vmatprep.subr.mxu0 0.0
    %1998 = vmatpush1.msra.mxu0 0.0
    %1999 = vmatprep.subr.mxu0 0.0
    %2000 = vmatpush1.msra.mxu0 0.0
    %2001 = vmatprep.subr.mxu0 0.0
    %2002 = vmatpush1.msra.mxu0 0.0
    %2003 = vmatprep.subr.mxu0 0.0
    %2004 = vmatpush1.msra.mxu0 0.0
    %2005 = vmatprep.subr.mxu0 0.0
    %2006 = vmatpush1.msra.mxu0 0.0
    %2007 = vmatprep.subr.mxu0 0.0
    %2008 = vmatpush1.msra.mxu0 0.0
    %2009 = vmatprep.subr.mxu0 0.0
    %2010 = vmatpush1.msra.mxu0 0.0
    %2011 = vmatprep.subr.mxu0 0.0
    %2012 = vmatpush1.msra.mxu0 0.0
    %2013 = vmatprep.subr.mxu0 0.0
    %2014 = vmatpush1.msra.mxu0 0.0
    %2015 = vmatprep.subr.mxu0 0.0
    %2016 = vmatpush1.msra.mxu0 0.0
    %2017 = vmatprep.mubr.f32.mxu0 0.0
    %2018 = vmatmul.mubr.f32.gmra.mrb[0].mxu0 %v1951
    %v2019 = vpop.f32.mrb[0].mxu0
    %v2020 = vadd.f32 %v1572, %v2019
    %v2021 = vpop.f32.mrb[0].mxu0
    %2022 = vdwg.mxu0
    %2023 = vst [vmem:[%s577] sm:$0x3] %v2020
    %v2024 = vld [vmem:[%s98] sm:$0x3]
    %v2026 = vsel %vm124, %v2024, 0
    %2028 = vmatprep.subr.mxu0 0.0
    %2029 = vmatpush1.msra.mxu0 %v1557
    %2030 = vmatprep.subr.mxu0 0.0
    %2031 = vmatpush1.msra.mxu0 %v1558
    %2032 = vmatprep.subr.mxu0 0.0
    %2033 = vmatpush1.msra.mxu0 %v1559
    %2034 = vmatprep.subr.mxu0 0.0
    %2035 = vmatpush1.msra.mxu0 %v1560
    %2036 = vmatprep.subr.mxu0 0.0
    %2037 = vmatpush1.msra.mxu0 0.0
    %2038 = vmatprep.subr.mxu0 0.0
    %2039 = vmatpush1.msra.mxu0 0.0
    %2040 = vmatprep.subr.mxu0 0.0
    %2041 = vmatpush1.msra.mxu0 0.0
    %2042 = vmatprep.subr.mxu0 0.0
    %2043 = vmatpush1.msra.mxu0 0.0
    %2044 = vmatprep.subr.mxu0 0.0
    %2045 = vmatpush1.msra.mxu0 0.0
    %2046 = vmatprep.subr.mxu0 0.0
    %2047 = vmatpush1.msra.mxu0 0.0
    %2048 = vmatprep.subr.mxu0 0.0
    %2049 = vmatpush1.msra.mxu0 0.0
    %2050 = vmatprep.subr.mxu0 0.0
    %2051 = vmatpush1.msra.mxu0 0.0
    %2052 = vmatprep.subr.mxu0 0.0
    %2053 = vmatpush1.msra.mxu0 0.0
    %2054 = vmatprep.subr.mxu0 0.0
    %2055 = vmatpush1.msra.mxu0 0.0
    %2056 = vmatprep.subr.mxu0 0.0
    %2057 = vmatpush1.msra.mxu0 0.0
    %2058 = vmatprep.subr.mxu0 0.0
    %2059 = vmatpush1.msra.mxu0 0.0
    %2060 = vmatprep.subr.mxu0 0.0
    %2061 = vmatpush1.msra.mxu0 0.0
    %2062 = vmatprep.subr.mxu0 0.0
    %2063 = vmatpush1.msra.mxu0 0.0
    %2064 = vmatprep.subr.mxu0 0.0
    %2065 = vmatpush1.msra.mxu0 0.0
    %2066 = vmatprep.subr.mxu0 0.0
    %2067 = vmatpush1.msra.mxu0 0.0
    %2068 = vmatprep.subr.mxu0 0.0
    %2069 = vmatpush1.msra.mxu0 0.0
    %2070 = vmatprep.subr.mxu0 0.0
    %2071 = vmatpush1.msra.mxu0 0.0
    %2072 = vmatprep.subr.mxu0 0.0
    %2073 = vmatpush1.msra.mxu0 0.0
    %2074 = vmatprep.subr.mxu0 0.0
    %2075 = vmatpush1.msra.mxu0 0.0
    %2076 = vmatprep.subr.mxu0 0.0
    %2077 = vmatpush1.msra.mxu0 0.0
    %2078 = vmatprep.subr.mxu0 0.0
    %2079 = vmatpush1.msra.mxu0 0.0
    %2080 = vmatprep.subr.mxu0 0.0
    %2081 = vmatpush1.msra.mxu0 0.0
    %2082 = vmatprep.subr.mxu0 0.0
    %2083 = vmatpush1.msra.mxu0 0.0
    %2084 = vmatprep.subr.mxu0 0.0
    %2085 = vmatpush1.msra.mxu0 0.0
    %2086 = vmatprep.subr.mxu0 0.0
    %2087 = vmatpush1.msra.mxu0 0.0
    %2088 = vmatprep.subr.mxu0 0.0
    %2089 = vmatpush1.msra.mxu0 0.0
    %2090 = vmatprep.subr.mxu0 0.0
    %2091 = vmatpush1.msra.mxu0 0.0
    %2092 = vmatprep.mubr.f32.mxu0 0.0
    %2093 = vmatmul.mubr.f32.gmra.mrb[0].mxu0 %v2026
    %v2094 = vpop.f32.mrb[0].mxu0
    %v2095 = vadd.f32 %v1572, %v2094
    %v2096 = vpop.f32.mrb[0].mxu0
    %2097 = vdwg.mxu0
    %2098 = vst [vmem:[%s653] sm:$0x3] %v2095
    %v2099 = vld [vmem:[%s103] sm:$0x3]
    %v2101 = vsel %vm124, %v2099, 0
    %2103 = vmatprep.subr.mxu0 0.0
    %2104 = vmatpush1.msra.mxu0 %v1557
    %2105 = vmatprep.subr.mxu0 0.0
    %2106 = vmatpush1.msra.mxu0 %v1558
    %2107 = vmatprep.subr.mxu0 0.0
    %2108 = vmatpush1.msra.mxu0 %v1559
    %2109 = vmatprep.subr.mxu0 0.0
    %2110 = vmatpush1.msra.mxu0 %v1560
    %2111 = vmatprep.subr.mxu0 0.0
    %2112 = vmatpush1.msra.mxu0 0.0
    %2113 = vmatprep.subr.mxu0 0.0
    %2114 = vmatpush1.msra.mxu0 0.0
    %2115 = vmatprep.subr.mxu0 0.0
    %2116 = vmatpush1.msra.mxu0 0.0
    %2117 = vmatprep.subr.mxu0 0.0
    %2118 = vmatpush1.msra.mxu0 0.0
    %2119 = vmatprep.subr.mxu0 0.0
    %2120 = vmatpush1.msra.mxu0 0.0
    %2121 = vmatprep.subr.mxu0 0.0
    %2122 = vmatpush1.msra.mxu0 0.0
    %2123 = vmatprep.subr.mxu0 0.0
    %2124 = vmatpush1.msra.mxu0 0.0
    %2125 = vmatprep.subr.mxu0 0.0
    %2126 = vmatpush1.msra.mxu0 0.0
    %2127 = vmatprep.subr.mxu0 0.0
    %2128 = vmatpush1.msra.mxu0 0.0
    %2129 = vmatprep.subr.mxu0 0.0
    %2130 = vmatpush1.msra.mxu0 0.0
    %2131 = vmatprep.subr.mxu0 0.0
    %2132 = vmatpush1.msra.mxu0 0.0
    %2133 = vmatprep.subr.mxu0 0.0
    %2134 = vmatpush1.msra.mxu0 0.0
    %2135 = vmatprep.subr.mxu0 0.0
    %2136 = vmatpush1.msra.mxu0 0.0
    %2137 = vmatprep.subr.mxu0 0.0
    %2138 = vmatpush1.msra.mxu0 0.0
    %2139 = vmatprep.subr.mxu0 0.0
    %2140 = vmatpush1.msra.mxu0 0.0
    %2141 = vmatprep.subr.mxu0 0.0
    %2142 = vmatpush1.msra.mxu0 0.0
    %2143 = vmatprep.subr.mxu0 0.0
    %2144 = vmatpush1.msra.mxu0 0.0
    %2145 = vmatprep.subr.mxu0 0.0
    %2146 = vmatpush1.msra.mxu0 0.0
    %2147 = vmatprep.subr.mxu0 0.0
    %2148 = vmatpush1.msra.mxu0 0.0
    %2149 = vmatprep.subr.mxu0 0.0
    %2150 = vmatpush1.msra.mxu0 0.0
    %2151 = vmatprep.subr.mxu0 0.0
    %2152 = vmatpush1.msra.mxu0 0.0
    %2153 = vmatprep.subr.mxu0 0.0
    %2154 = vmatpush1.msra.mxu0 0.0
    %2155 = vmatprep.subr.mxu0 0.0
    %2156 = vmatpush1.msra.mxu0 0.0
    %2157 = vmatprep.subr.mxu0 0.0
    %2158 = vmatpush1.msra.mxu0 0.0
    %2159 = vmatprep.subr.mxu0 0.0
    %2160 = vmatpush1.msra.mxu0 0.0
    %2161 = vmatprep.subr.mxu0 0.0
    %2162 = vmatpush1.msra.mxu0 0.0
    %2163 = vmatprep.subr.mxu0 0.0
    %2164 = vmatpush1.msra.mxu0 0.0
    %2165 = vmatprep.subr.mxu0 0.0
    %2166 = vmatpush1.msra.mxu0 0.0
    %2167 = vmatprep.mubr.f32.mxu0 0.0
    %2168 = vmatmul.mubr.f32.gmra.mrb[0].mxu0 %v2101
    %v2169 = vpop.f32.mrb[0].mxu0
    %v2170 = vadd.f32 %v1572, %v2169
    %v2171 = vpop.f32.mrb[0].mxu0
    %2172 = vdwg.mxu0
    %2173 = vst [vmem:[%s729] sm:$0x3] %v2170
    %v2174 = vld [vmem:[#allocation3] sm:$0x3]
    %2175 = vmatprep.subr.mxu0 0.0
    %2176 = vmatpush1.msra.mxu0 %v1562
    %2177 = vmatprep.subr.mxu0 0.0
    %2178 = vmatpush1.msra.mxu0 %v1563
    %2179 = vmatprep.subr.mxu0 0.0
    %2180 = vmatpush1.msra.mxu0 %v1564
    %2181 = vmatprep.subr.mxu0 0.0
    %2182 = vmatpush1.msra.mxu0 %v1565
    %2183 = vmatprep.subr.mxu0 0.0
    %2184 = vmatpush1.msra.mxu0 0.0
    %2185 = vmatprep.subr.mxu0 0.0
    %2186 = vmatpush1.msra.mxu0 0.0
    %2187 = vmatprep.subr.mxu0 0.0
    %2188 = vmatpush1.msra.mxu0 0.0
    %2189 = vmatprep.subr.mxu0 0.0
    %2190 = vmatpush1.msra.mxu0 0.0
    %2191 = vmatprep.subr.mxu0 0.0
    %2192 = vmatpush1.msra.mxu0 0.0
    %2193 = vmatprep.subr.mxu0 0.0
    %2194 = vmatpush1.msra.mxu0 0.0
    %2195 = vmatprep.subr.mxu0 0.0
    %2196 = vmatpush1.msra.mxu0 0.0
    %2197 = vmatprep.subr.mxu0 0.0
    %2198 = vmatpush1.msra.mxu0 0.0
    %2199 = vmatprep.subr.mxu0 0.0
    %2200 = vmatpush1.msra.mxu0 0.0
    %2201 = vmatprep.subr.mxu0 0.0
    %2202 = vmatpush1.msra.mxu0 0.0
    %2203 = vmatprep.subr.mxu0 0.0
    %2204 = vmatpush1.msra.mxu0 0.0
    %2205 = vmatprep.subr.mxu0 0.0
    %2206 = vmatpush1.msra.mxu0 0.0
    %2207 = vmatprep.subr.mxu0 0.0
    %2208 = vmatpush1.msra.mxu0 0.0
    %2209 = vmatprep.subr.mxu0 0.0
    %2210 = vmatpush1.msra.mxu0 0.0
    %2211 = vmatprep.subr.mxu0 0.0
    %2212 = vmatpush1.msra.mxu0 0.0
    %2213 = vmatprep.subr.mxu0 0.0
    %2214 = vmatpush1.msra.mxu0 0.0
    %2215 = vmatprep.subr.mxu0 0.0
    %2216 = vmatpush1.msra.mxu0 0.0
    %2217 = vmatprep.subr.mxu0 0.0
    %2218 = vmatpush1.msra.mxu0 0.0
    %2219 = vmatprep.subr.mxu0 0.0
    %2220 = vmatpush1.msra.mxu0 0.0
    %2221 = vmatprep.subr.mxu0 0.0
    %2222 = vmatpush1.msra.mxu0 0.0
    %2223 = vmatprep.subr.mxu0 0.0
    %2224 = vmatpush1.msra.mxu0 0.0
    %2225 = vmatprep.subr.mxu0 0.0
    %2226 = vmatpush1.msra.mxu0 0.0
    %2227 = vmatprep.subr.mxu0 0.0
    %2228 = vmatpush1.msra.mxu0 0.0
    %2229 = vmatprep.subr.mxu0 0.0
    %2230 = vmatpush1.msra.mxu0 0.0
    %2231 = vmatprep.subr.mxu0 0.0
    %2232 = vmatpush1.msra.mxu0 0.0
    %2233 = vmatprep.subr.mxu0 0.0
    %2234 = vmatpush1.msra.mxu0 0.0
    %2235 = vmatprep.subr.mxu0 0.0
    %2236 = vmatpush1.msra.mxu0 0.0
    %2237 = vmatprep.subr.mxu0 0.0
    %2238 = vmatpush1.msra.mxu0 0.0
    %2239 = vmatprep.mubr.f32.mxu0 0.0
    %2240 = vmatmul.mubr.f32.gmra.mrb[0].mxu0 %v733
    %v2241 = vpop.f32.mrb[0].mxu0
    %v2242 = vadd.f32 0.0, %v2241
    %v2243 = vpop.f32.mrb[0].mxu0
    %2244 = vdwg.mxu0
    %v2245 = vadd.f32 %v2174, %v2242
    %v2246 = vxor.u32 %v2245, 2147483648
    %v2247 = vmul.f32 %v2246, 1.442695
    %v2248 = vpow.pop %v2247
    %v2249 = vadd.f32 %v2248, 1.0
    %v2250 = vrcp.pop %v2249
    %v2251 = vmul.f32 1.0, %v2250
    %v2252 = vtanh.pop %v2245
    %v2253 = vmul.f32 %v2251, 0.0
    %2255 = vrot.lane.b32.xlu0 %v2252, 64
    %v2256 = vpop.permute.xlu0 %2255
    %v2258 = vmul.f32 %v2251, %v2256
    %2260 = vrot.lane.b32.xlu0 %v2258, 32
    %v2261 = vpop.permute.xlu0 %2260
    %v2263 = vadd.f32 %v2253, %v2261
    %v2264 = vtanh.pop %v2263
    %2266 = vrot.lane.b32.xlu0 %v2264, 64
    %v2267 = vpop.permute.xlu0 %2266
    %v2269 = vmul.f32 %v2251, %v2267
    %2271 = vrot.lane.b32.xlu0 %v2269, 32
    %v2272 = vpop.permute.xlu0 %2271
    %2274 = vst.msk [vmem:[#allocation2] sm:$0x3] %vm63, %v2272
    %v2275 = vld [vmem:[%s273] sm:$0x3]
    %v2276 = vsel %vm124, %v2272, 0
    %2278 = vmatprep.subr.mxu0 0.0
    %2279 = vmatpush1.msra.mxu0 %v1562
    %2280 = vmatprep.subr.mxu0 0.0
    %2281 = vmatpush1.msra.mxu0 %v1563
    %2282 = vmatprep.subr.mxu0 0.0
    %2283 = vmatpush1.msra.mxu0 %v1564
    %2284 = vmatprep.subr.mxu0 0.0
    %2285 = vmatpush1.msra.mxu0 %v1565
    %2286 = vmatprep.subr.mxu0 0.0
    %2287 = vmatpush1.msra.mxu0 0.0
    %2288 = vmatprep.subr.mxu0 0.0
    %2289 = vmatpush1.msra.mxu0 0.0
    %2290 = vmatprep.subr.mxu0 0.0
    %2291 = vmatpush1.msra.mxu0 0.0
    %2292 = vmatprep.subr.mxu0 0.0
    %2293 = vmatpush1.msra.mxu0 0.0
    %2294 = vmatprep.subr.mxu0 0.0
    %2295 = vmatpush1.msra.mxu0 0.0
    %2296 = vmatprep.subr.mxu0 0.0
    %2297 = vmatpush1.msra.mxu0 0.0
    %2298 = vmatprep.subr.mxu0 0.0
    %2299 = vmatpush1.msra.mxu0 0.0
    %2300 = vmatprep.subr.mxu0 0.0
    %2301 = vmatpush1.msra.mxu0 0.0
    %2302 = vmatprep.subr.mxu0 0.0
    %2303 = vmatpush1.msra.mxu0 0.0
    %2304 = vmatprep.subr.mxu0 0.0
    %2305 = vmatpush1.msra.mxu0 0.0
    %2306 = vmatprep.subr.mxu0 0.0
    %2307 = vmatpush1.msra.mxu0 0.0
    %2308 = vmatprep.subr.mxu0 0.0
    %2309 = vmatpush1.msra.mxu0 0.0
    %2310 = vmatprep.subr.mxu0 0.0
    %2311 = vmatpush1.msra.mxu0 0.0
    %2312 = vmatprep.subr.mxu0 0.0
    %2313 = vmatpush1.msra.mxu0 0.0
    %2314 = vmatprep.subr.mxu0 0.0
    %2315 = vmatpush1.msra.mxu0 0.0
    %2316 = vmatprep.subr.mxu0 0.0
    %2317 = vmatpush1.msra.mxu0 0.0
    %2318 = vmatprep.subr.mxu0 0.0
    %2319 = vmatpush1.msra.mxu0 0.0
    %2320 = vmatprep.subr.mxu0 0.0
    %2321 = vmatpush1.msra.mxu0 0.0
    %2322 = vmatprep.subr.mxu0 0.0
    %2323 = vmatpush1.msra.mxu0 0.0
    %2324 = vmatprep.subr.mxu0 0.0
    %2325 = vmatpush1.msra.mxu0 0.0
    %2326 = vmatprep.subr.mxu0 0.0
    %2327 = vmatpush1.msra.mxu0 0.0
    %2328 = vmatprep.subr.mxu0 0.0
    %2329 = vmatpush1.msra.mxu0 0.0
    %2330 = vmatprep.subr.mxu0 0.0
    %2331 = vmatpush1.msra.mxu0 0.0
    %2332 = vmatprep.subr.mxu0 0.0
    %2333 = vmatpush1.msra.mxu0 0.0
    %2334 = vmatprep.subr.mxu0 0.0
    %2335 = vmatpush1.msra.mxu0 0.0
    %2336 = vmatprep.subr.mxu0 0.0
    %2337 = vmatpush1.msra.mxu0 0.0
    %2338 = vmatprep.subr.mxu0 0.0
    %2339 = vmatpush1.msra.mxu0 0.0
    %2340 = vmatprep.subr.mxu0 0.0
    %2341 = vmatpush1.msra.mxu0 0.0
    %2342 = vmatprep.mubr.f32.mxu0 0.0
    %2343 = vmatmul.mubr.f32.gmra.mrb[0].mxu0 %v2276
    %v2344 = vpop.f32.mrb[0].mxu0
    %v2345 = vadd.f32 0.0, %v2344
    %v2346 = vpop.f32.mrb[0].mxu0
    %2347 = vdwg.mxu0
    %v2348 = vadd.f32 %v2275, %v2345
    %v2349 = vxor.u32 %v2348, 2147483648
    %v2350 = vmul.f32 %v2349, 1.442695
    %v2351 = vpow.pop %v2350
    %v2352 = vadd.f32 %v2351, 1.0
    %v2353 = vrcp.pop %v2352
    %v2354 = vmul.f32 1.0, %v2353
    %v2355 = vtanh.pop %v2348
    %v2356 = vmul.f32 %v2354, %v2263
    %2358 = vrot.lane.b32.xlu0 %v2355, 64
    %v2359 = vpop.permute.xlu0 %2358
    %v2361 = vmul.f32 %v2354, %v2359
    %2363 = vrot.lane.b32.xlu0 %v2361, 32
    %v2364 = vpop.permute.xlu0 %2363
    %v2366 = vadd.f32 %v2356, %v2364
    %v2367 = vtanh.pop %v2366
    %2369 = vrot.lane.b32.xlu0 %v2367, 64
    %v2370 = vpop.permute.xlu0 %2369
    %v2372 = vmul.f32 %v2354, %v2370
    %2374 = vrot.lane.b32.xlu0 %v2372, 32
    %v2375 = vpop.permute.xlu0 %2374
    %2377 = vst.msk [vmem:[%s68] sm:$0x3] %vm63, %v2375
    %v2378 = vld [vmem:[%s349] sm:$0x3]
    %v2379 = vsel %vm124, %v2375, 0
    %2381 = vmatprep.subr.mxu0 0.0
    %2382 = vmatpush1.msra.mxu0 %v1562
    %2383 = vmatprep.subr.mxu0 0.0
    %2384 = vmatpush1.msra.mxu0 %v1563
    %2385 = vmatprep.subr.mxu0 0.0
    %2386 = vmatpush1.msra.mxu0 %v1564
    %2387 = vmatprep.subr.mxu0 0.0
    %2388 = vmatpush1.msra.mxu0 %v1565
    %2389 = vmatprep.subr.mxu0 0.0
    %2390 = vmatpush1.msra.mxu0 0.0
    %2391 = vmatprep.subr.mxu0 0.0
    %2392 = vmatpush1.msra.mxu0 0.0
    %2393 = vmatprep.subr.mxu0 0.0
    %2394 = vmatpush1.msra.mxu0 0.0
    %2395 = vmatprep.subr.mxu0 0.0
    %2396 = vmatpush1.msra.mxu0 0.0
    %2397 = vmatprep.subr.mxu0 0.0
    %2398 = vmatpush1.msra.mxu0 0.0
    %2399 = vmatprep.subr.mxu0 0.0
    %2400 = vmatpush1.msra.mxu0 0.0
    %2401 = vmatprep.subr.mxu0 0.0
    %2402 = vmatpush1.msra.mxu0 0.0
    %2403 = vmatprep.subr.mxu0 0.0
    %2404 = vmatpush1.msra.mxu0 0.0
    %2405 = vmatprep.subr.mxu0 0.0
    %2406 = vmatpush1.msra.mxu0 0.0
    %2407 = vmatprep.subr.mxu0 0.0
    %2408 = vmatpush1.msra.mxu0 0.0
    %2409 = vmatprep.subr.mxu0 0.0
    %2410 = vmatpush1.msra.mxu0 0.0
    %2411 = vmatprep.subr.mxu0 0.0
    %2412 = vmatpush1.msra.mxu0 0.0
    %2413 = vmatprep.subr.mxu0 0.0
    %2414 = vmatpush1.msra.mxu0 0.0
    %2415 = vmatprep.subr.mxu0 0.0
    %2416 = vmatpush1.msra.mxu0 0.0
    %2417 = vmatprep.subr.mxu0 0.0
    %2418 = vmatpush1.msra.mxu0 0.0
    %2419 = vmatprep.subr.mxu0 0.0
    %2420 = vmatpush1.msra.mxu0 0.0
    %2421 = vmatprep.subr.mxu0 0.0
    %2422 = vmatpush1.msra.mxu0 0.0
    %2423 = vmatprep.subr.mxu0 0.0
    %2424 = vmatpush1.msra.mxu0 0.0
    %2425 = vmatprep.subr.mxu0 0.0
    %2426 = vmatpush1.msra.mxu0 0.0
    %2427 = vmatprep.subr.mxu0 0.0
    %2428 = vmatpush1.msra.mxu0 0.0
    %2429 = vmatprep.subr.mxu0 0.0
    %2430 = vmatpush1.msra.mxu0 0.0
    %2431 = vmatprep.subr.mxu0 0.0
    %2432 = vmatpush1.msra.mxu0 0.0
    %2433 = vmatprep.subr.mxu0 0.0
    %2434 = vmatpush1.msra.mxu0 0.0
    %2435 = vmatprep.subr.mxu0 0.0
    %2436 = vmatpush1.msra.mxu0 0.0
    %2437 = vmatprep.subr.mxu0 0.0
    %2438 = vmatpush1.msra.mxu0 0.0
    %2439 = vmatprep.subr.mxu0 0.0
    %2440 = vmatpush1.msra.mxu0 0.0
    %2441 = vmatprep.subr.mxu0 0.0
    %2442 = vmatpush1.msra.mxu0 0.0
    %2443 = vmatprep.subr.mxu0 0.0
    %2444 = vmatpush1.msra.mxu0 0.0
    %2445 = vmatprep.mubr.f32.mxu0 0.0
    %2446 = vmatmul.mubr.f32.gmra.mrb[0].mxu0 %v2379
    %v2447 = vpop.f32.mrb[0].mxu0
    %v2448 = vadd.f32 0.0, %v2447
    %v2449 = vpop.f32.mrb[0].mxu0
    %2450 = vdwg.mxu0
    %v2451 = vadd.f32 %v2378, %v2448
    %v2452 = vxor.u32 %v2451, 2147483648
    %v2453 = vmul.f32 %v2452, 1.442695
    %v2454 = vpow.pop %v2453
    %v2455 = vadd.f32 %v2454, 1.0
    %v2456 = vrcp.pop %v2455
    %v2457 = vmul.f32 1.0, %v2456
    %v2458 = vtanh.pop %v2451
    %v2459 = vmul.f32 %v2457, %v2366
    %2461 = vrot.lane.b32.xlu0 %v2458, 64
    %v2462 = vpop.permute.xlu0 %2461
    %v2464 = vmul.f32 %v2457, %v2462
    %2466 = vrot.lane.b32.xlu0 %v2464, 32
    %v2467 = vpop.permute.xlu0 %2466
    %v2469 = vadd.f32 %v2459, %v2467
    %v2470 = vtanh.pop %v2469
    %2472 = vrot.lane.b32.xlu0 %v2470, 64
    %v2473 = vpop.permute.xlu0 %2472
    %v2475 = vmul.f32 %v2457, %v2473
    %2477 = vrot.lane.b32.xlu0 %v2475, 32
    %v2478 = vpop.permute.xlu0 %2477
    %2480 = vst.msk [vmem:[%s74] sm:$0x3] %vm63, %v2478
    %v2481 = vld [vmem:[%s425] sm:$0x3]
    %v2482 = vsel %vm124, %v2478, 0
    %2484 = vmatprep.subr.mxu0 0.0
    %2485 = vmatpush1.msra.mxu0 %v1562
    %2486 = vmatprep.subr.mxu0 0.0
    %2487 = vmatpush1.msra.mxu0 %v1563
    %2488 = vmatprep.subr.mxu0 0.0
    %2489 = vmatpush1.msra.mxu0 %v1564
    %2490 = vmatprep.subr.mxu0 0.0
    %2491 = vmatpush1.msra.mxu0 %v1565
    %2492 = vmatprep.subr.mxu0 0.0
    %2493 = vmatpush1.msra.mxu0 0.0
    %2494 = vmatprep.subr.mxu0 0.0
    %2495 = vmatpush1.msra.mxu0 0.0
    %2496 = vmatprep.subr.mxu0 0.0
    %2497 = vmatpush1.msra.mxu0 0.0
    %2498 = vmatprep.subr.mxu0 0.0
    %2499 = vmatpush1.msra.mxu0 0.0
    %2500 = vmatprep.subr.mxu0 0.0
    %2501 = vmatpush1.msra.mxu0 0.0
    %2502 = vmatprep.subr.mxu0 0.0
    %2503 = vmatpush1.msra.mxu0 0.0
    %2504 = vmatprep.subr.mxu0 0.0
    %2505 = vmatpush1.msra.mxu0 0.0
    %2506 = vmatprep.subr.mxu0 0.0
    %2507 = vmatpush1.msra.mxu0 0.0
    %2508 = vmatprep.subr.mxu0 0.0
    %2509 = vmatpush1.msra.mxu0 0.0
    %2510 = vmatprep.subr.mxu0 0.0
    %2511 = vmatpush1.msra.mxu0 0.0
    %2512 = vmatprep.subr.mxu0 0.0
    %2513 = vmatpush1.msra.mxu0 0.0
    %2514 = vmatprep.subr.mxu0 0.0
    %2515 = vmatpush1.msra.mxu0 0.0
    %2516 = vmatprep.subr.mxu0 0.0
    %2517 = vmatpush1.msra.mxu0 0.0
    %2518 = vmatprep.subr.mxu0 0.0
    %2519 = vmatpush1.msra.mxu0 0.0
    %2520 = vmatprep.subr.mxu0 0.0
    %2521 = vmatpush1.msra.mxu0 0.0
    %2522 = vmatprep.subr.mxu0 0.0
    %2523 = vmatpush1.msra.mxu0 0.0
    %2524 = vmatprep.subr.mxu0 0.0
    %2525 = vmatpush1.msra.mxu0 0.0
    %2526 = vmatprep.subr.mxu0 0.0
    %2527 = vmatpush1.msra.mxu0 0.0
    %2528 = vmatprep.subr.mxu0 0.0
    %2529 = vmatpush1.msra.mxu0 0.0
    %2530 = vmatprep.subr.mxu0 0.0
    %2531 = vmatpush1.msra.mxu0 0.0
    %2532 = vmatprep.subr.mxu0 0.0
    %2533 = vmatpush1.msra.mxu0 0.0
    %2534 = vmatprep.subr.mxu0 0.0
    %2535 = vmatpush1.msra.mxu0 0.0
    %2536 = vmatprep.subr.mxu0 0.0
    %2537 = vmatpush1.msra.mxu0 0.0
    %2538 = vmatprep.subr.mxu0 0.0
    %2539 = vmatpush1.msra.mxu0 0.0
    %2540 = vmatprep.subr.mxu0 0.0
    %2541 = vmatpush1.msra.mxu0 0.0
    %2542 = vmatprep.subr.mxu0 0.0
    %2543 = vmatpush1.msra.mxu0 0.0
    %2544 = vmatprep.subr.mxu0 0.0
    %2545 = vmatpush1.msra.mxu0 0.0
    %2546 = vmatprep.subr.mxu0 0.0
    %2547 = vmatpush1.msra.mxu0 0.0
    %2548 = vmatprep.mubr.f32.mxu0 0.0
    %2549 = vmatmul.mubr.f32.gmra.mrb[0].mxu0 %v2482
    %v2550 = vpop.f32.mrb[0].mxu0
    %v2551 = vadd.f32 0.0, %v2550
    %v2552 = vpop.f32.mrb[0].mxu0
    %2553 = vdwg.mxu0
    %v2554 = vadd.f32 %v2481, %v2551
    %v2555 = vxor.u32 %v2554, 2147483648
    %v2556 = vmul.f32 %v2555, 1.442695
    %v2557 = vpow.pop %v2556
    %v2558 = vadd.f32 %v2557, 1.0
    %v2559 = vrcp.pop %v2558
    %v2560 = vmul.f32 1.0, %v2559
    %v2561 = vtanh.pop %v2554
    %v2562 = vmul.f32 %v2560, %v2469
    %2564 = vrot.lane.b32.xlu0 %v2561, 64
    %v2565 = vpop.permute.xlu0 %2564
    %v2567 = vmul.f32 %v2560, %v2565
    %2569 = vrot.lane.b32.xlu0 %v2567, 32
    %v2570 = vpop.permute.xlu0 %2569
    %v2572 = vadd.f32 %v2562, %v2570
    %v2573 = vtanh.pop %v2572
    %2575 = vrot.lane.b32.xlu0 %v2573, 64
    %v2576 = vpop.permute.xlu0 %2575
    %v2578 = vmul.f32 %v2560, %v2576
    %2580 = vrot.lane.b32.xlu0 %v2578, 32
    %v2581 = vpop.permute.xlu0 %2580
    %2583 = vst.msk [vmem:[%s80] sm:$0x3] %vm63, %v2581
    %v2584 = vld [vmem:[%s501] sm:$0x3]
    %v2585 = vsel %vm124, %v2581, 0
    %2587 = vmatprep.subr.mxu0 0.0
    %2588 = vmatpush1.msra.mxu0 %v1562
    %2589 = vmatprep.subr.mxu0 0.0
    %2590 = vmatpush1.msra.mxu0 %v1563
    %2591 = vmatprep.subr.mxu0 0.0
    %2592 = vmatpush1.msra.mxu0 %v1564
    %2593 = vmatprep.subr.mxu0 0.0
    %2594 = vmatpush1.msra.mxu0 %v1565
    %2595 = vmatprep.subr.mxu0 0.0
    %2596 = vmatpush1.msra.mxu0 0.0
    %2597 = vmatprep.subr.mxu0 0.0
    %2598 = vmatpush1.msra.mxu0 0.0
    %2599 = vmatprep.subr.mxu0 0.0
    %2600 = vmatpush1.msra.mxu0 0.0
    %2601 = vmatprep.subr.mxu0 0.0
    %2602 = vmatpush1.msra.mxu0 0.0
    %2603 = vmatprep.subr.mxu0 0.0
    %2604 = vmatpush1.msra.mxu0 0.0
    %2605 = vmatprep.subr.mxu0 0.0
    %2606 = vmatpush1.msra.mxu0 0.0
    %2607 = vmatprep.subr.mxu0 0.0
    %2608 = vmatpush1.msra.mxu0 0.0
    %2609 = vmatprep.subr.mxu0 0.0
    %2610 = vmatpush1.msra.mxu0 0.0
    %2611 = vmatprep.subr.mxu0 0.0
    %2612 = vmatpush1.msra.mxu0 0.0
    %2613 = vmatprep.subr.mxu0 0.0
    %2614 = vmatpush1.msra.mxu0 0.0
    %2615 = vmatprep.subr.mxu0 0.0
    %2616 = vmatpush1.msra.mxu0 0.0
    %2617 = vmatprep.subr.mxu0 0.0
    %2618 = vmatpush1.msra.mxu0 0.0
    %2619 = vmatprep.subr.mxu0 0.0
    %2620 = vmatpush1.msra.mxu0 0.0
    %2621 = vmatprep.subr.mxu0 0.0
    %2622 = vmatpush1.msra.mxu0 0.0
    %2623 = vmatprep.subr.mxu0 0.0
    %2624 = vmatpush1.msra.mxu0 0.0
    %2625 = vmatprep.subr.mxu0 0.0
    %2626 = vmatpush1.msra.mxu0 0.0
    %2627 = vmatprep.subr.mxu0 0.0
    %2628 = vmatpush1.msra.mxu0 0.0
    %2629 = vmatprep.subr.mxu0 0.0
    %2630 = vmatpush1.msra.mxu0 0.0
    %2631 = vmatprep.subr.mxu0 0.0
    %2632 = vmatpush1.msra.mxu0 0.0
    %2633 = vmatprep.subr.mxu0 0.0
    %2634 = vmatpush1.msra.mxu0 0.0
    %2635 = vmatprep.subr.mxu0 0.0
    %2636 = vmatpush1.msra.mxu0 0.0
    %2637 = vmatprep.subr.mxu0 0.0
    %2638 = vmatpush1.msra.mxu0 0.0
    %2639 = vmatprep.subr.mxu0 0.0
    %2640 = vmatpush1.msra.mxu0 0.0
    %2641 = vmatprep.subr.mxu0 0.0
    %2642 = vmatpush1.msra.mxu0 0.0
    %2643 = vmatprep.subr.mxu0 0.0
    %2644 = vmatpush1.msra.mxu0 0.0
    %2645 = vmatprep.subr.mxu0 0.0
    %2646 = vmatpush1.msra.mxu0 0.0
    %2647 = vmatprep.subr.mxu0 0.0
    %2648 = vmatpush1.msra.mxu0 0.0
    %2649 = vmatprep.subr.mxu0 0.0
    %2650 = vmatpush1.msra.mxu0 0.0
    %2651 = vmatprep.mubr.f32.mxu0 0.0
    %2652 = vmatmul.mubr.f32.gmra.mrb[0].mxu0 %v2585
    %v2653 = vpop.f32.mrb[0].mxu0
    %v2654 = vadd.f32 0.0, %v2653
    %v2655 = vpop.f32.mrb[0].mxu0
    %2656 = vdwg.mxu0
    %v2657 = vadd.f32 %v2584, %v2654
    %v2658 = vxor.u32 %v2657, 2147483648
    %v2659 = vmul.f32 %v2658, 1.442695
    %v2660 = vpow.pop %v2659
    %v2661 = vadd.f32 %v2660, 1.0
    %v2662 = vrcp.pop %v2661
    %v2663 = vmul.f32 1.0, %v2662
    %v2664 = vtanh.pop %v2657
    %v2665 = vmul.f32 %v2663, %v2572
    %2667 = vrot.lane.b32.xlu0 %v2664, 64
    %v2668 = vpop.permute.xlu0 %2667
    %v2670 = vmul.f32 %v2663, %v2668
    %2672 = vrot.lane.b32.xlu0 %v2670, 32
    %v2673 = vpop.permute.xlu0 %2672
    %v2675 = vadd.f32 %v2665, %v2673
    %v2676 = vtanh.pop %v2675
    %2678 = vrot.lane.b32.xlu0 %v2676, 64
    %v2679 = vpop.permute.xlu0 %2678
    %v2681 = vmul.f32 %v2663, %v2679
    %2683 = vrot.lane.b32.xlu0 %v2681, 32
    %v2684 = vpop.permute.xlu0 %2683
    %2686 = vst.msk [vmem:[%s86] sm:$0x3] %vm63, %v2684
    %v2687 = vld [vmem:[%s577] sm:$0x3]
    %v2688 = vsel %vm124, %v2684, 0
    %2690 = vmatprep.subr.mxu0 0.0
    %2691 = vmatpush1.msra.mxu0 %v1562
    %2692 = vmatprep.subr.mxu0 0.0
    %2693 = vmatpush1.msra.mxu0 %v1563
    %2694 = vmatprep.subr.mxu0 0.0
    %2695 = vmatpush1.msra.mxu0 %v1564
    %2696 = vmatprep.subr.mxu0 0.0
    %2697 = vmatpush1.msra.mxu0 %v1565
    %2698 = vmatprep.subr.mxu0 0.0
    %2699 = vmatpush1.msra.mxu0 0.0
    %2700 = vmatprep.subr.mxu0 0.0
    %2701 = vmatpush1.msra.mxu0 0.0
    %2702 = vmatprep.subr.mxu0 0.0
    %2703 = vmatpush1.msra.mxu0 0.0
    %2704 = vmatprep.subr.mxu0 0.0
    %2705 = vmatpush1.msra.mxu0 0.0
    %2706 = vmatprep.subr.mxu0 0.0
    %2707 = vmatpush1.msra.mxu0 0.0
    %2708 = vmatprep.subr.mxu0 0.0
    %2709 = vmatpush1.msra.mxu0 0.0
    %2710 = vmatprep.subr.mxu0 0.0
    %2711 = vmatpush1.msra.mxu0 0.0
    %2712 = vmatprep.subr.mxu0 0.0
    %2713 = vmatpush1.msra.mxu0 0.0
    %2714 = vmatprep.subr.mxu0 0.0
    %2715 = vmatpush1.msra.mxu0 0.0
    %2716 = vmatprep.subr.mxu0 0.0
    %2717 = vmatpush1.msra.mxu0 0.0
    %2718 = vmatprep.subr.mxu0 0.0
    %2719 = vmatpush1.msra.mxu0 0.0
    %2720 = vmatprep.subr.mxu0 0.0
    %2721 = vmatpush1.msra.mxu0 0.0
    %2722 = vmatprep.subr.mxu0 0.0
    %2723 = vmatpush1.msra.mxu0 0.0
    %2724 = vmatprep.subr.mxu0 0.0
    %2725 = vmatpush1.msra.mxu0 0.0
    %2726 = vmatprep.subr.mxu0 0.0
    %2727 = vmatpush1.msra.mxu0 0.0
    %2728 = vmatprep.subr.mxu0 0.0
    %2729 = vmatpush1.msra.mxu0 0.0
    %2730 = vmatprep.subr.mxu0 0.0
    %2731 = vmatpush1.msra.mxu0 0.0
    %2732 = vmatprep.subr.mxu0 0.0
    %2733 = vmatpush1.msra.mxu0 0.0
    %2734 = vmatprep.subr.mxu0 0.0
    %2735 = vmatpush1.msra.mxu0 0.0
    %2736 = vmatprep.subr.mxu0 0.0
    %2737 = vmatpush1.msra.mxu0 0.0
    %2738 = vmatprep.subr.mxu0 0.0
    %2739 = vmatpush1.msra.mxu0 0.0
    %2740 = vmatprep.subr.mxu0 0.0
    %2741 = vmatpush1.msra.mxu0 0.0
    %2742 = vmatprep.subr.mxu0 0.0
    %2743 = vmatpush1.msra.mxu0 0.0
    %2744 = vmatprep.subr.mxu0 0.0
    %2745 = vmatpush1.msra.mxu0 0.0
    %2746 = vmatprep.subr.mxu0 0.0
    %2747 = vmatpush1.msra.mxu0 0.0
    %2748 = vmatprep.subr.mxu0 0.0
    %2749 = vmatpush1.msra.mxu0 0.0
    %2750 = vmatprep.subr.mxu0 0.0
    %2751 = vmatpush1.msra.mxu0 0.0
    %2752 = vmatprep.subr.mxu0 0.0
    %2753 = vmatpush1.msra.mxu0 0.0
    %2754 = vmatprep.mubr.f32.mxu0 0.0
    %2755 = vmatmul.mubr.f32.gmra.mrb[0].mxu0 %v2688
    %v2756 = vpop.f32.mrb[0].mxu0
    %v2757 = vadd.f32 0.0, %v2756
    %v2758 = vpop.f32.mrb[0].mxu0
    %2759 = vdwg.mxu0
    %v2760 = vadd.f32 %v2687, %v2757
    %v2761 = vxor.u32 %v2760, 2147483648
    %v2762 = vmul.f32 %v2761, 1.442695
    %v2763 = vpow.pop %v2762
    %v2764 = vadd.f32 %v2763, 1.0
    %v2765 = vrcp.pop %v2764
    %v2766 = vmul.f32 1.0, %v2765
    %v2767 = vtanh.pop %v2760
    %v2768 = vmul.f32 %v2766, %v2675
    %2770 = vrot.lane.b32.xlu0 %v2767, 64
    %v2771 = vpop.permute.xlu0 %2770
    %v2773 = vmul.f32 %v2766, %v2771
    %2775 = vrot.lane.b32.xlu0 %v2773, 32
    %v2776 = vpop.permute.xlu0 %2775
    %v2778 = vadd.f32 %v2768, %v2776
    %v2779 = vtanh.pop %v2778
    %2781 = vrot.lane.b32.xlu0 %v2779, 64
    %v2782 = vpop.permute.xlu0 %2781
    %v2784 = vmul.f32 %v2766, %v2782
    %2786 = vrot.lane.b32.xlu0 %v2784, 32
    %v2787 = vpop.permute.xlu0 %2786
    %2789 = vst.msk [vmem:[%s92] sm:$0x3] %vm63, %v2787
    %v2790 = vld [vmem:[%s653] sm:$0x3]
    %v2791 = vsel %vm124, %v2787, 0
    %2793 = vmatprep.subr.mxu0 0.0
    %2794 = vmatpush1.msra.mxu0 %v1562
    %2795 = vmatprep.subr.mxu0 0.0
    %2796 = vmatpush1.msra.mxu0 %v1563
    %2797 = vmatprep.subr.mxu0 0.0
    %2798 = vmatpush1.msra.mxu0 %v1564
    %2799 = vmatprep.subr.mxu0 0.0
    %2800 = vmatpush1.msra.mxu0 %v1565
    %2801 = vmatprep.subr.mxu0 0.0
    %2802 = vmatpush1.msra.mxu0 0.0
    %2803 = vmatprep.subr.mxu0 0.0
    %2804 = vmatpush1.msra.mxu0 0.0
    %2805 = vmatprep.subr.mxu0 0.0
    %2806 = vmatpush1.msra.mxu0 0.0
    %2807 = vmatprep.subr.mxu0 0.0
    %2808 = vmatpush1.msra.mxu0 0.0
    %2809 = vmatprep.subr.mxu0 0.0
    %2810 = vmatpush1.msra.mxu0 0.0
    %2811 = vmatprep.subr.mxu0 0.0
    %2812 = vmatpush1.msra.mxu0 0.0
    %2813 = vmatprep.subr.mxu0 0.0
    %2814 = vmatpush1.msra.mxu0 0.0
    %2815 = vmatprep.subr.mxu0 0.0
    %2816 = vmatpush1.msra.mxu0 0.0
    %2817 = vmatprep.subr.mxu0 0.0
    %2818 = vmatpush1.msra.mxu0 0.0
    %2819 = vmatprep.subr.mxu0 0.0
    %2820 = vmatpush1.msra.mxu0 0.0
    %2821 = vmatprep.subr.mxu0 0.0
    %2822 = vmatpush1.msra.mxu0 0.0
    %2823 = vmatprep.subr.mxu0 0.0
    %2824 = vmatpush1.msra.mxu0 0.0
    %2825 = vmatprep.subr.mxu0 0.0
    %2826 = vmatpush1.msra.mxu0 0.0
    %2827 = vmatprep.subr.mxu0 0.0
    %2828 = vmatpush1.msra.mxu0 0.0
    %2829 = vmatprep.subr.mxu0 0.0
    %2830 = vmatpush1.msra.mxu0 0.0
    %2831 = vmatprep.subr.mxu0 0.0
    %2832 = vmatpush1.msra.mxu0 0.0
    %2833 = vmatprep.subr.mxu0 0.0
    %2834 = vmatpush1.msra.mxu0 0.0
    %2835 = vmatprep.subr.mxu0 0.0
    %2836 = vmatpush1.msra.mxu0 0.0
    %2837 = vmatprep.subr.mxu0 0.0
    %2838 = vmatpush1.msra.mxu0 0.0
    %2839 = vmatprep.subr.mxu0 0.0
    %2840 = vmatpush1.msra.mxu0 0.0
    %2841 = vmatprep.subr.mxu0 0.0
    %2842 = vmatpush1.msra.mxu0 0.0
    %2843 = vmatprep.subr.mxu0 0.0
    %2844 = vmatpush1.msra.mxu0 0.0
    %2845 = vmatprep.subr.mxu0 0.0
    %2846 = vmatpush1.msra.mxu0 0.0
    %2847 = vmatprep.subr.mxu0 0.0
    %2848 = vmatpush1.msra.mxu0 0.0
    %2849 = vmatprep.subr.mxu0 0.0
    %2850 = vmatpush1.msra.mxu0 0.0
    %2851 = vmatprep.subr.mxu0 0.0
    %2852 = vmatpush1.msra.mxu0 0.0
    %2853 = vmatprep.subr.mxu0 0.0
    %2854 = vmatpush1.msra.mxu0 0.0
    %2855 = vmatprep.subr.mxu0 0.0
    %2856 = vmatpush1.msra.mxu0 0.0
    %2857 = vmatprep.mubr.f32.mxu0 0.0
    %2858 = vmatmul.mubr.f32.gmra.mrb[0].mxu0 %v2791
    %v2859 = vpop.f32.mrb[0].mxu0
    %v2860 = vadd.f32 0.0, %v2859
    %v2861 = vpop.f32.mrb[0].mxu0
    %2862 = vdwg.mxu0
    %v2863 = vadd.f32 %v2790, %v2860
    %v2864 = vxor.u32 %v2863, 2147483648
    %v2865 = vmul.f32 %v2864, 1.442695
    %v2866 = vpow.pop %v2865
    %v2867 = vadd.f32 %v2866, 1.0
    %v2868 = vrcp.pop %v2867
    %v2869 = vmul.f32 1.0, %v2868
    %v2870 = vtanh.pop %v2863
    %v2871 = vmul.f32 %v2869, %v2778
    %2873 = vrot.lane.b32.xlu0 %v2870, 64
    %v2874 = vpop.permute.xlu0 %2873
    %v2876 = vmul.f32 %v2869, %v2874
    %2878 = vrot.lane.b32.xlu0 %v2876, 32
    %v2879 = vpop.permute.xlu0 %2878
    %v2881 = vadd.f32 %v2871, %v2879
    %v2882 = vtanh.pop %v2881
    %2884 = vrot.lane.b32.xlu0 %v2882, 64
    %v2885 = vpop.permute.xlu0 %2884
    %v2887 = vmul.f32 %v2869, %v2885
    %2889 = vrot.lane.b32.xlu0 %v2887, 32
    %v2890 = vpop.permute.xlu0 %2889
    %2892 = vst.msk [vmem:[%s98] sm:$0x3] %vm63, %v2890
    %v2893 = vld [vmem:[%s729] sm:$0x3]
    %v2894 = vsel %vm124, %v2890, 0
    %2896 = vmatprep.subr.mxu0 0.0
    %2897 = vmatpush1.msra.mxu0 %v1562
    %2898 = vmatprep.subr.mxu0 0.0
    %2899 = vmatpush1.msra.mxu0 %v1563
    %2900 = vmatprep.subr.mxu0 0.0
    %2901 = vmatpush1.msra.mxu0 %v1564
    %2902 = vmatprep.subr.mxu0 0.0
    %2903 = vmatpush1.msra.mxu0 %v1565
    %2904 = vmatprep.subr.mxu0 0.0
    %2905 = vmatpush1.msra.mxu0 0.0
    %2906 = vmatprep.subr.mxu0 0.0
    %2907 = vmatpush1.msra.mxu0 0.0
    %2908 = vmatprep.subr.mxu0 0.0
    %2909 = vmatpush1.msra.mxu0 0.0
    %2910 = vmatprep.subr.mxu0 0.0
    %2911 = vmatpush1.msra.mxu0 0.0
    %2912 = vmatprep.subr.mxu0 0.0
    %2913 = vmatpush1.msra.mxu0 0.0
    %2914 = vmatprep.subr.mxu0 0.0
    %2915 = vmatpush1.msra.mxu0 0.0
    %2916 = vmatprep.subr.mxu0 0.0
    %2917 = vmatpush1.msra.mxu0 0.0
    %2918 = vmatprep.subr.mxu0 0.0
    %2919 = vmatpush1.msra.mxu0 0.0
    %2920 = vmatprep.subr.mxu0 0.0
    %2921 = vmatpush1.msra.mxu0 0.0
    %2922 = vmatprep.subr.mxu0 0.0
    %2923 = vmatpush1.msra.mxu0 0.0
    %2924 = vmatprep.subr.mxu0 0.0
    %2925 = vmatpush1.msra.mxu0 0.0
    %2926 = vmatprep.subr.mxu0 0.0
    %2927 = vmatpush1.msra.mxu0 0.0
    %2928 = vmatprep.subr.mxu0 0.0
    %2929 = vmatpush1.msra.mxu0 0.0
    %2930 = vmatprep.subr.mxu0 0.0
    %2931 = vmatpush1.msra.mxu0 0.0
    %2932 = vmatprep.subr.mxu0 0.0
    %2933 = vmatpush1.msra.mxu0 0.0
    %2934 = vmatprep.subr.mxu0 0.0
    %2935 = vmatpush1.msra.mxu0 0.0
    %2936 = vmatprep.subr.mxu0 0.0
    %2937 = vmatpush1.msra.mxu0 0.0
    %2938 = vmatprep.subr.mxu0 0.0
    %2939 = vmatpush1.msra.mxu0 0.0
    %2940 = vmatprep.subr.mxu0 0.0
    %2941 = vmatpush1.msra.mxu0 0.0
    %2942 = vmatprep.subr.mxu0 0.0
    %2943 = vmatpush1.msra.mxu0 0.0
    %2944 = vmatprep.subr.mxu0 0.0
    %2945 = vmatpush1.msra.mxu0 0.0
    %2946 = vmatprep.subr.mxu0 0.0
    %2947 = vmatpush1.msra.mxu0 0.0
    %2948 = vmatprep.subr.mxu0 0.0
    %2949 = vmatpush1.msra.mxu0 0.0
    %2950 = vmatprep.subr.mxu0 0.0
    %2951 = vmatpush1.msra.mxu0 0.0
    %2952 = vmatprep.subr.mxu0 0.0
    %2953 = vmatpush1.msra.mxu0 0.0
    %2954 = vmatprep.subr.mxu0 0.0
    %2955 = vmatpush1.msra.mxu0 0.0
    %2956 = vmatprep.subr.mxu0 0.0
    %2957 = vmatpush1.msra.mxu0 0.0
    %2958 = vmatprep.subr.mxu0 0.0
    %2959 = vmatpush1.msra.mxu0 0.0
    %2960 = vmatprep.mubr.f32.mxu0 0.0
    %2961 = vmatmul.mubr.f32.gmra.mrb[0].mxu0 %v2894
    %v2962 = vpop.f32.mrb[0].mxu0
    %v2963 = vadd.f32 0.0, %v2962
    %v2964 = vpop.f32.mrb[0].mxu0
    %2965 = vdwg.mxu0
    %v2966 = vadd.f32 %v2893, %v2963
    %v2967 = vxor.u32 %v2966, 2147483648
    %v2968 = vmul.f32 %v2967, 1.442695
    %v2969 = vpow.pop %v2968
    %v2970 = vadd.f32 %v2969, 1.0
    %v2971 = vrcp.pop %v2970
    %v2972 = vmul.f32 1.0, %v2971
    %v2973 = vtanh.pop %v2966
    %v2974 = vmul.f32 %v2972, %v2881
    %2976 = vrot.lane.b32.xlu0 %v2973, 64
    %v2977 = vpop.permute.xlu0 %2976
    %v2979 = vmul.f32 %v2972, %v2977
    %2981 = vrot.lane.b32.xlu0 %v2979, 32
    %v2982 = vpop.permute.xlu0 %2981
    %v2984 = vadd.f32 %v2974, %v2982
    %v2985 = vtanh.pop %v2984
    %2987 = vrot.lane.b32.xlu0 %v2985, 64
    %v2988 = vpop.permute.xlu0 %2987
    %v2990 = vmul.f32 %v2972, %v2988
    %2992 = vrot.lane.b32.xlu0 %v2990, 32
    %v2993 = vpop.permute.xlu0 %2992
    %2995 = vst.msk [vmem:[%s103] sm:$0x3] %vm63, %v2993
    %v2996 = vld [vmem:[%s4] sm:$0xff]
    %v2997 = vld [vmem:[%s4 + $0x8] sm:$0xff]
    %v2998 = vld [vmem:[%s4 + $0x10] sm:$0xff]
    %v2999 = vld [vmem:[%s4 + $0x18] sm:$0xff]
    %v3000 = vld [vmem:[%s5] sm:$0x1]
    %v3002 = vlaneseq
    %v3003 = vshrl.u32 %v3002, 7
    %v3004 = vsub.s32 0, %v3003
    %v3005 = vrot.slane %v3000, %v3004
    %v3007 = vld [vmem:[%s6] sm:$0xff]
    %v3008 = vld [vmem:[%s6 + $0x8] sm:$0xff]
    %v3009 = vld [vmem:[#allocation2] sm:$0x3]
    %v3010 = vmax.f32 %v3009, 0.0
    %v3012 = vsel %vm124, %v3010, 0
    %3014 = vmatprep.subr.mxu0 0.0
    %3015 = vmatpush1.msra.mxu0 %v2996
    %3016 = vmatprep.subr.mxu0 0.0
    %3017 = vmatpush1.msra.mxu0 %v2997
    %3018 = vmatprep.subr.mxu0 0.0
    %3019 = vmatpush1.msra.mxu0 %v2998
    %3020 = vmatprep.subr.mxu0 0.0
    %3021 = vmatpush1.msra.mxu0 %v2999
    %3022 = vmatprep.subr.mxu0 0.0
    %3023 = vmatpush1.msra.mxu0 0.0
    %3024 = vmatprep.subr.mxu0 0.0
    %3025 = vmatpush1.msra.mxu0 0.0
    %3026 = vmatprep.subr.mxu0 0.0
    %3027 = vmatpush1.msra.mxu0 0.0
    %3028 = vmatprep.subr.mxu0 0.0
    %3029 = vmatpush1.msra.mxu0 0.0
    %3030 = vmatprep.subr.mxu0 0.0
    %3031 = vmatpush1.msra.mxu0 0.0
    %3032 = vmatprep.subr.mxu0 0.0
    %3033 = vmatpush1.msra.mxu0 0.0
    %3034 = vmatprep.subr.mxu0 0.0
    %3035 = vmatpush1.msra.mxu0 0.0
    %3036 = vmatprep.subr.mxu0 0.0
    %3037 = vmatpush1.msra.mxu0 0.0
    %3038 = vmatprep.subr.mxu0 0.0
    %3039 = vmatpush1.msra.mxu0 0.0
    %3040 = vmatprep.subr.mxu0 0.0
    %3041 = vmatpush1.msra.mxu0 0.0
    %3042 = vmatprep.subr.mxu0 0.0
    %3043 = vmatpush1.msra.mxu0 0.0
    %3044 = vmatprep.subr.mxu0 0.0
    %3045 = vmatpush1.msra.mxu0 0.0
    %3046 = vmatprep.subr.mxu0 0.0
    %3047 = vmatpush1.msra.mxu0 0.0
    %3048 = vmatprep.subr.mxu0 0.0
    %3049 = vmatpush1.msra.mxu0 0.0
    %3050 = vmatprep.subr.mxu0 0.0
    %3051 = vmatpush1.msra.mxu0 0.0
    %3052 = vmatprep.subr.mxu0 0.0
    %3053 = vmatpush1.msra.mxu0 0.0
    %3054 = vmatprep.subr.mxu0 0.0
    %3055 = vmatpush1.msra.mxu0 0.0
    %3056 = vmatprep.subr.mxu0 0.0
    %3057 = vmatpush1.msra.mxu0 0.0
    %3058 = vmatprep.subr.mxu0 0.0
    %3059 = vmatpush1.msra.mxu0 0.0
    %3060 = vmatprep.subr.mxu0 0.0
    %3061 = vmatpush1.msra.mxu0 0.0
    %3062 = vmatprep.subr.mxu0 0.0
    %3063 = vmatpush1.msra.mxu0 0.0
    %3064 = vmatprep.subr.mxu0 0.0
    %3065 = vmatpush1.msra.mxu0 0.0
    %3066 = vmatprep.subr.mxu0 0.0
    %3067 = vmatpush1.msra.mxu0 0.0
    %3068 = vmatprep.subr.mxu0 0.0
    %3069 = vmatpush1.msra.mxu0 0.0
    %3070 = vmatprep.subr.mxu0 0.0
    %3071 = vmatpush1.msra.mxu0 0.0
    %3072 = vmatprep.subr.mxu0 0.0
    %3073 = vmatpush1.msra.mxu0 0.0
    %3074 = vmatprep.subr.mxu0 0.0
    %3075 = vmatpush1.msra.mxu0 0.0
    %3076 = vmatprep.subr.mxu0 0.0
    %3077 = vmatpush1.msra.mxu0 0.0
    %3078 = vmatprep.mubr.f32.mxu0 0.0
    %3079 = vmatmul.mubr.f32.gmra.mrb[0].mxu0 %v3012
    %v3080 = vpop.f32.mrb[0].mxu0
    %v3081 = vadd.f32 %v3005, %v3080
    %v3082 = vpop.f32.mrb[0].mxu0
    %3083 = vdwg.mxu0
    %v3086 = vrot.slane %v3008, 7
    %v3087 = vsel %vm60, %v3086, %v3007
    %v3089 = vadd.f32 %v3081, %v3087
    %v3092 = vunpack.c.l.s4 1966171168
    %v3093 = vunpack.c.0.s8 %v3092
    %v3094 = vlaneseq
    %v3095 = vshrl.u32 %v3094, 7
    %v3096 = vsub.s32 %v3093, %v3095
    %v3097 = vrot.slane %v3089, %v3096
    %v3098 = vcombine.high %v3097, %v3097
    %v3100 = vunpack.c.l.s4 1966171168
    %v3101 = vunpack.c.0.s8 %v3100
    %v3102 = vlaneseq
    %v3103 = vshrl.u32 %v3102, 7
    %v3104 = vsub.s32 %v3101, %v3103
    %v3105 = vrot.slane %v3097, %v3104
    %v3107 = vunpack.c.l.s4 1966171168
    %v3108 = vunpack.c.0.s8 %v3107
    %v3109 = vlaneseq
    %v3110 = vshrl.u32 %v3109, 7
    %v3111 = vsub.s32 %v3108, %v3110
    %v3112 = vrot.slane %v3098, %v3111
    %vm3115 = vcmask 155648
    %3116 = vst.msk [vmem:[#allocation9] sm:$0x1] %vm3115, %v3105
    %3117 = vst.msk [vmem:[#allocation9 + $0x8] sm:$0x1] %vm3115, %v3112
    %v3118 = vld [vmem:[%s68] sm:$0x3]
    %v3119 = vmax.f32 %v3118, 0.0
    %v3121 = vsel %vm124, %v3119, 0
    %3123 = vmatprep.subr.mxu0 0.0
    %3124 = vmatpush1.msra.mxu0 %v2996
    %3125 = vmatprep.subr.mxu0 0.0
    %3126 = vmatpush1.msra.mxu0 %v2997
    %3127 = vmatprep.subr.mxu0 0.0
    %3128 = vmatpush1.msra.mxu0 %v2998
    %3129 = vmatprep.subr.mxu0 0.0
    %3130 = vmatpush1.msra.mxu0 %v2999
    %3131 = vmatprep.subr.mxu0 0.0
    %3132 = vmatpush1.msra.mxu0 0.0
    %3133 = vmatprep.subr.mxu0 0.0
    %3134 = vmatpush1.msra.mxu0 0.0
    %3135 = vmatprep.subr.mxu0 0.0
    %3136 = vmatpush1.msra.mxu0 0.0
    %3137 = vmatprep.subr.mxu0 0.0
    %3138 = vmatpush1.msra.mxu0 0.0
    %3139 = vmatprep.subr.mxu0 0.0
    %3140 = vmatpush1.msra.mxu0 0.0
    %3141 = vmatprep.subr.mxu0 0.0
    %3142 = vmatpush1.msra.mxu0 0.0
    %3143 = vmatprep.subr.mxu0 0.0
    %3144 = vmatpush1.msra.mxu0 0.0
    %3145 = vmatprep.subr.mxu0 0.0
    %3146 = vmatpush1.msra.mxu0 0.0
    %3147 = vmatprep.subr.mxu0 0.0
    %3148 = vmatpush1.msra.mxu0 0.0
    %3149 = vmatprep.subr.mxu0 0.0
    %3150 = vmatpush1.msra.mxu0 0.0
    %3151 = vmatprep.subr.mxu0 0.0
    %3152 = vmatpush1.msra.mxu0 0.0
    %3153 = vmatprep.subr.mxu0 0.0
    %3154 = vmatpush1.msra.mxu0 0.0
    %3155 = vmatprep.subr.mxu0 0.0
    %3156 = vmatpush1.msra.mxu0 0.0
    %3157 = vmatprep.subr.mxu0 0.0
    %3158 = vmatpush1.msra.mxu0 0.0
    %3159 = vmatprep.subr.mxu0 0.0
    %3160 = vmatpush1.msra.mxu0 0.0
    %3161 = vmatprep.subr.mxu0 0.0
    %3162 = vmatpush1.msra.mxu0 0.0
    %3163 = vmatprep.subr.mxu0 0.0
    %3164 = vmatpush1.msra.mxu0 0.0
    %3165 = vmatprep.subr.mxu0 0.0
    %3166 = vmatpush1.msra.mxu0 0.0
    %3167 = vmatprep.subr.mxu0 0.0
    %3168 = vmatpush1.msra.mxu0 0.0
    %3169 = vmatprep.subr.mxu0 0.0
    %3170 = vmatpush1.msra.mxu0 0.0
    %3171 = vmatprep.subr.mxu0 0.0
    %3172 = vmatpush1.msra.mxu0 0.0
    %3173 = vmatprep.subr.mxu0 0.0
    %3174 = vmatpush1.msra.mxu0 0.0
    %3175 = vmatprep.subr.mxu0 0.0
    %3176 = vmatpush1.msra.mxu0 0.0
    %3177 = vmatprep.subr.mxu0 0.0
    %3178 = vmatpush1.msra.mxu0 0.0
    %3179 = vmatprep.subr.mxu0 0.0
    %3180 = vmatpush1.msra.mxu0 0.0
    %3181 = vmatprep.subr.mxu0 0.0
    %3182 = vmatpush1.msra.mxu0 0.0
    %3183 = vmatprep.subr.mxu0 0.0
    %3184 = vmatpush1.msra.mxu0 0.0
    %3185 = vmatprep.subr.mxu0 0.0
    %3186 = vmatpush1.msra.mxu0 0.0
    %3187 = vmatprep.mubr.f32.mxu0 0.0
    %3188 = vmatmul.mubr.f32.gmra.mrb[0].mxu0 %v3121
    %v3189 = vpop.f32.mrb[0].mxu0
    %v3190 = vadd.f32 %v3005, %v3189
    %v3191 = vpop.f32.mrb[0].mxu0
    %3192 = vdwg.mxu0
    %v3193 = vrot.slane %v3007, 1
    %v3194 = vsel %vm60, %v3008, %v3193
    %v3196 = vadd.f32 %v3190, %v3194
    %v3199 = vunpack.c.l.s4 1966171168
    %v3200 = vunpack.c.0.s8 %v3199
    %v3201 = vlaneseq
    %v3202 = vshrl.u32 %v3201, 7
    %v3203 = vsub.s32 %v3200, %v3202
    %v3204 = vrot.slane %v3196, %v3203
    %v3205 = vcombine.high %v3204, %v3204
    %v3207 = vunpack.c.l.s4 1966171168
    %v3208 = vunpack.c.0.s8 %v3207
    %v3209 = vlaneseq
    %v3210 = vshrl.u32 %v3209, 7
    %v3211 = vsub.s32 %v3208, %v3210
    %v3212 = vrot.slane %v3204, %v3211
    %v3214 = vunpack.c.l.s4 1966171168
    %v3215 = vunpack.c.0.s8 %v3214
    %v3216 = vlaneseq
    %v3217 = vshrl.u32 %v3216, 7
    %v3218 = vsub.s32 %v3215, %v3217
    %v3219 = vrot.slane %v3205, %v3218
    %3222 = vst.msk [vmem:[#allocation9 + $0x1] sm:$0x1] %vm3115, %v3212
    %3223 = vst.msk [vmem:[#allocation9 + $0x9] sm:$0x1] %vm3115, %v3219
    %v3224 = vld [vmem:[%s74] sm:$0x3]
    %v3225 = vmax.f32 %v3224, 0.0
    %v3227 = vsel %vm124, %v3225, 0
    %3229 = vmatprep.subr.mxu0 0.0
    %3230 = vmatpush1.msra.mxu0 %v2996
    %3231 = vmatprep.subr.mxu0 0.0
    %3232 = vmatpush1.msra.mxu0 %v2997
    %3233 = vmatprep.subr.mxu0 0.0
    %3234 = vmatpush1.msra.mxu0 %v2998
    %3235 = vmatprep.subr.mxu0 0.0
    %3236 = vmatpush1.msra.mxu0 %v2999
    %3237 = vmatprep.subr.mxu0 0.0
    %3238 = vmatpush1.msra.mxu0 0.0
    %3239 = vmatprep.subr.mxu0 0.0
    %3240 = vmatpush1.msra.mxu0 0.0
    %3241 = vmatprep.subr.mxu0 0.0
    %3242 = vmatpush1.msra.mxu0 0.0
    %3243 = vmatprep.subr.mxu0 0.0
    %3244 = vmatpush1.msra.mxu0 0.0
    %3245 = vmatprep.subr.mxu0 0.0
    %3246 = vmatpush1.msra.mxu0 0.0
    %3247 = vmatprep.subr.mxu0 0.0
    %3248 = vmatpush1.msra.mxu0 0.0
    %3249 = vmatprep.subr.mxu0 0.0
    %3250 = vmatpush1.msra.mxu0 0.0
    %3251 = vmatprep.subr.mxu0 0.0
    %3252 = vmatpush1.msra.mxu0 0.0
    %3253 = vmatprep.subr.mxu0 0.0
    %3254 = vmatpush1.msra.mxu0 0.0
    %3255 = vmatprep.subr.mxu0 0.0
    %3256 = vmatpush1.msra.mxu0 0.0
    %3257 = vmatprep.subr.mxu0 0.0
    %3258 = vmatpush1.msra.mxu0 0.0
    %3259 = vmatprep.subr.mxu0 0.0
    %3260 = vmatpush1.msra.mxu0 0.0
    %3261 = vmatprep.subr.mxu0 0.0
    %3262 = vmatpush1.msra.mxu0 0.0
    %3263 = vmatprep.subr.mxu0 0.0
    %3264 = vmatpush1.msra.mxu0 0.0
    %3265 = vmatprep.subr.mxu0 0.0
    %3266 = vmatpush1.msra.mxu0 0.0
    %3267 = vmatprep.subr.mxu0 0.0
    %3268 = vmatpush1.msra.mxu0 0.0
    %3269 = vmatprep.subr.mxu0 0.0
    %3270 = vmatpush1.msra.mxu0 0.0
    %3271 = vmatprep.subr.mxu0 0.0
    %3272 = vmatpush1.msra.mxu0 0.0
    %3273 = vmatprep.subr.mxu0 0.0
    %3274 = vmatpush1.msra.mxu0 0.0
    %3275 = vmatprep.subr.mxu0 0.0
    %3276 = vmatpush1.msra.mxu0 0.0
    %3277 = vmatprep.subr.mxu0 0.0
    %3278 = vmatpush1.msra.mxu0 0.0
    %3279 = vmatprep.subr.mxu0 0.0
    %3280 = vmatpush1.msra.mxu0 0.0
    %3281 = vmatprep.subr.mxu0 0.0
    %3282 = vmatpush1.msra.mxu0 0.0
    %3283 = vmatprep.subr.mxu0 0.0
    %3284 = vmatpush1.msra.mxu0 0.0
    %3285 = vmatprep.subr.mxu0 0.0
    %3286 = vmatpush1.msra.mxu0 0.0
    %3287 = vmatprep.subr.mxu0 0.0
    %3288 = vmatpush1.msra.mxu0 0.0
    %3289 = vmatprep.subr.mxu0 0.0
    %3290 = vmatpush1.msra.mxu0 0.0
    %3291 = vmatprep.subr.mxu0 0.0
    %3292 = vmatpush1.msra.mxu0 0.0
    %3293 = vmatprep.mubr.f32.mxu0 0.0
    %3294 = vmatmul.mubr.f32.gmra.mrb[0].mxu0 %v3227
    %v3295 = vpop.f32.mrb[0].mxu0
    %v3296 = vadd.f32 %v3005, %v3295
    %v3297 = vpop.f32.mrb[0].mxu0
    %3298 = vdwg.mxu0
    %v3299 = vrot.slane %v3007, 2
    %v3300 = vrot.slane %v3008, 1
    %v3301 = vsel %vm60, %v3300, %v3299
    %v3303 = vadd.f32 %v3296, %v3301
    %v3306 = vunpack.c.l.s4 1966171168
    %v3307 = vunpack.c.0.s8 %v3306
    %v3308 = vlaneseq
    %v3309 = vshrl.u32 %v3308, 7
    %v3310 = vsub.s32 %v3307, %v3309
    %v3311 = vrot.slane %v3303, %v3310
    %v3312 = vcombine.high %v3311, %v3311
    %v3314 = vunpack.c.l.s4 1966171168
    %v3315 = vunpack.c.0.s8 %v3314
    %v3316 = vlaneseq
    %v3317 = vshrl.u32 %v3316, 7
    %v3318 = vsub.s32 %v3315, %v3317
    %v3319 = vrot.slane %v3311, %v3318
    %v3321 = vunpack.c.l.s4 1966171168
    %v3322 = vunpack.c.0.s8 %v3321
    %v3323 = vlaneseq
    %v3324 = vshrl.u32 %v3323, 7
    %v3325 = vsub.s32 %v3322, %v3324
    %v3326 = vrot.slane %v3312, %v3325
    %3329 = vst.msk [vmem:[#allocation9 + $0x2] sm:$0x1] %vm3115, %v3319
    %3330 = vst.msk [vmem:[#allocation9 + $0xa] sm:$0x1] %vm3115, %v3326
    %v3331 = vld [vmem:[%s80] sm:$0x3]
    %v3332 = vmax.f32 %v3331, 0.0
    %v3334 = vsel %vm124, %v3332, 0
    %3336 = vmatprep.subr.mxu0 0.0
    %3337 = vmatpush1.msra.mxu0 %v2996
    %3338 = vmatprep.subr.mxu0 0.0
    %3339 = vmatpush1.msra.mxu0 %v2997
    %3340 = vmatprep.subr.mxu0 0.0
    %3341 = vmatpush1.msra.mxu0 %v2998
    %3342 = vmatprep.subr.mxu0 0.0
    %3343 = vmatpush1.msra.mxu0 %v2999
    %3344 = vmatprep.subr.mxu0 0.0
    %3345 = vmatpush1.msra.mxu0 0.0
    %3346 = vmatprep.subr.mxu0 0.0
    %3347 = vmatpush1.msra.mxu0 0.0
    %3348 = vmatprep.subr.mxu0 0.0
    %3349 = vmatpush1.msra.mxu0 0.0
    %3350 = vmatprep.subr.mxu0 0.0
    %3351 = vmatpush1.msra.mxu0 0.0
    %3352 = vmatprep.subr.mxu0 0.0
    %3353 = vmatpush1.msra.mxu0 0.0
    %3354 = vmatprep.subr.mxu0 0.0
    %3355 = vmatpush1.msra.mxu0 0.0
    %3356 = vmatprep.subr.mxu0 0.0
    %3357 = vmatpush1.msra.mxu0 0.0
    %3358 = vmatprep.subr.mxu0 0.0
    %3359 = vmatpush1.msra.mxu0 0.0
    %3360 = vmatprep.subr.mxu0 0.0
    %3361 = vmatpush1.msra.mxu0 0.0
    %3362 = vmatprep.subr.mxu0 0.0
    %3363 = vmatpush1.msra.mxu0 0.0
    %3364 = vmatprep.subr.mxu0 0.0
    %3365 = vmatpush1.msra.mxu0 0.0
    %3366 = vmatprep.subr.mxu0 0.0
    %3367 = vmatpush1.msra.mxu0 0.0
    %3368 = vmatprep.subr.mxu0 0.0
    %3369 = vmatpush1.msra.mxu0 0.0
    %3370 = vmatprep.subr.mxu0 0.0
    %3371 = vmatpush1.msra.mxu0 0.0
    %3372 = vmatprep.subr.mxu0 0.0
    %3373 = vmatpush1.msra.mxu0 0.0
    %3374 = vmatprep.subr.mxu0 0.0
    %3375 = vmatpush1.msra.mxu0 0.0
    %3376 = vmatprep.subr.mxu0 0.0
    %3377 = vmatpush1.msra.mxu0 0.0
    %3378 = vmatprep.subr.mxu0 0.0
    %3379 = vmatpush1.msra.mxu0 0.0
    %3380 = vmatprep.subr.mxu0 0.0
    %3381 = vmatpush1.msra.mxu0 0.0
    %3382 = vmatprep.subr.mxu0 0.0
    %3383 = vmatpush1.msra.mxu0 0.0
    %3384 = vmatprep.subr.mxu0 0.0
    %3385 = vmatpush1.msra.mxu0 0.0
    %3386 = vmatprep.subr.mxu0 0.0
    %3387 = vmatpush1.msra.mxu0 0.0
    %3388 = vmatprep.subr.mxu0 0.0
    %3389 = vmatpush1.msra.mxu0 0.0
    %3390 = vmatprep.subr.mxu0 0.0
    %3391 = vmatpush1.msra.mxu0 0.0
    %3392 = vmatprep.subr.mxu0 0.0
    %3393 = vmatpush1.msra.mxu0 0.0
    %3394 = vmatprep.subr.mxu0 0.0
    %3395 = vmatpush1.msra.mxu0 0.0
    %3396 = vmatprep.subr.mxu0 0.0
    %3397 = vmatpush1.msra.mxu0 0.0
    %3398 = vmatprep.subr.mxu0 0.0
    %3399 = vmatpush1.msra.mxu0 0.0
    %3400 = vmatprep.mubr.f32.mxu0 0.0
    %3401 = vmatmul.mubr.f32.gmra.mrb[0].mxu0 %v3334
    %v3402 = vpop.f32.mrb[0].mxu0
    %v3403 = vadd.f32 %v3005, %v3402
    %v3404 = vpop.f32.mrb[0].mxu0
    %3405 = vdwg.mxu0
    %v3406 = vrot.slane %v3007, 3
    %v3407 = vrot.slane %v3008, 2
    %v3408 = vsel %vm60, %v3407, %v3406
    %v3410 = vadd.f32 %v3403, %v3408
    %v3413 = vunpack.c.l.s4 1966171168
    %v3414 = vunpack.c.0.s8 %v3413
    %v3415 = vlaneseq
    %v3416 = vshrl.u32 %v3415, 7
    %v3417 = vsub.s32 %v3414, %v3416
    %v3418 = vrot.slane %v3410, %v3417
    %v3419 = vcombine.high %v3418, %v3418
    %v3421 = vunpack.c.l.s4 1966171168
    %v3422 = vunpack.c.0.s8 %v3421
    %v3423 = vlaneseq
    %v3424 = vshrl.u32 %v3423, 7
    %v3425 = vsub.s32 %v3422, %v3424
    %v3426 = vrot.slane %v3418, %v3425
    %v3428 = vunpack.c.l.s4 1966171168
    %v3429 = vunpack.c.0.s8 %v3428
    %v3430 = vlaneseq
    %v3431 = vshrl.u32 %v3430, 7
    %v3432 = vsub.s32 %v3429, %v3431
    %v3433 = vrot.slane %v3419, %v3432
    %3436 = vst.msk [vmem:[#allocation9 + $0x3] sm:$0x1] %vm3115, %v3426
    %3437 = vst.msk [vmem:[#allocation9 + $0xb] sm:$0x1] %vm3115, %v3433
    %v3438 = vld [vmem:[%s86] sm:$0x3]
    %v3439 = vmax.f32 %v3438, 0.0
    %v3441 = vsel %vm124, %v3439, 0
    %3443 = vmatprep.subr.mxu0 0.0
    %3444 = vmatpush1.msra.mxu0 %v2996
    %3445 = vmatprep.subr.mxu0 0.0
    %3446 = vmatpush1.msra.mxu0 %v2997
    %3447 = vmatprep.subr.mxu0 0.0
    %3448 = vmatpush1.msra.mxu0 %v2998
    %3449 = vmatprep.subr.mxu0 0.0
    %3450 = vmatpush1.msra.mxu0 %v2999
    %3451 = vmatprep.subr.mxu0 0.0
    %3452 = vmatpush1.msra.mxu0 0.0
    %3453 = vmatprep.subr.mxu0 0.0
    %3454 = vmatpush1.msra.mxu0 0.0
    %3455 = vmatprep.subr.mxu0 0.0
    %3456 = vmatpush1.msra.mxu0 0.0
    %3457 = vmatprep.subr.mxu0 0.0
    %3458 = vmatpush1.msra.mxu0 0.0
    %3459 = vmatprep.subr.mxu0 0.0
    %3460 = vmatpush1.msra.mxu0 0.0
    %3461 = vmatprep.subr.mxu0 0.0
    %3462 = vmatpush1.msra.mxu0 0.0
    %3463 = vmatprep.subr.mxu0 0.0
    %3464 = vmatpush1.msra.mxu0 0.0
    %3465 = vmatprep.subr.mxu0 0.0
    %3466 = vmatpush1.msra.mxu0 0.0
    %3467 = vmatprep.subr.mxu0 0.0
    %3468 = vmatpush1.msra.mxu0 0.0
    %3469 = vmatprep.subr.mxu0 0.0
    %3470 = vmatpush1.msra.mxu0 0.0
    %3471 = vmatprep.subr.mxu0 0.0
    %3472 = vmatpush1.msra.mxu0 0.0
    %3473 = vmatprep.subr.mxu0 0.0
    %3474 = vmatpush1.msra.mxu0 0.0
    %3475 = vmatprep.subr.mxu0 0.0
    %3476 = vmatpush1.msra.mxu0 0.0
    %3477 = vmatprep.subr.mxu0 0.0
    %3478 = vmatpush1.msra.mxu0 0.0
    %3479 = vmatprep.subr.mxu0 0.0
    %3480 = vmatpush1.msra.mxu0 0.0
    %3481 = vmatprep.subr.mxu0 0.0
    %3482 = vmatpush1.msra.mxu0 0.0
    %3483 = vmatprep.subr.mxu0 0.0
    %3484 = vmatpush1.msra.mxu0 0.0
    %3485 = vmatprep.subr.mxu0 0.0
    %3486 = vmatpush1.msra.mxu0 0.0
    %3487 = vmatprep.subr.mxu0 0.0
    %3488 = vmatpush1.msra.mxu0 0.0
    %3489 = vmatprep.subr.mxu0 0.0
    %3490 = vmatpush1.msra.mxu0 0.0
    %3491 = vmatprep.subr.mxu0 0.0
    %3492 = vmatpush1.msra.mxu0 0.0
    %3493 = vmatprep.subr.mxu0 0.0
    %3494 = vmatpush1.msra.mxu0 0.0
    %3495 = vmatprep.subr.mxu0 0.0
    %3496 = vmatpush1.msra.mxu0 0.0
    %3497 = vmatprep.subr.mxu0 0.0
    %3498 = vmatpush1.msra.mxu0 0.0
    %3499 = vmatprep.subr.mxu0 0.0
    %3500 = vmatpush1.msra.mxu0 0.0
    %3501 = vmatprep.subr.mxu0 0.0
    %3502 = vmatpush1.msra.mxu0 0.0
    %3503 = vmatprep.subr.mxu0 0.0
    %3504 = vmatpush1.msra.mxu0 0.0
    %3505 = vmatprep.subr.mxu0 0.0
    %3506 = vmatpush1.msra.mxu0 0.0
    %3507 = vmatprep.mubr.f32.mxu0 0.0
    %3508 = vmatmul.mubr.f32.gmra.mrb[0].mxu0 %v3441
    %v3509 = vpop.f32.mrb[0].mxu0
    %v3510 = vadd.f32 %v3005, %v3509
    %v3511 = vpop.f32.mrb[0].mxu0
    %3512 = vdwg.mxu0
    %v3513 = vrot.slane %v3007, 4
    %v3514 = vrot.slane %v3008, 3
    %v3515 = vsel %vm60, %v3514, %v3513
    %v3517 = vadd.f32 %v3510, %v3515
    %v3520 = vunpack.c.l.s4 1966171168
    %v3521 = vunpack.c.0.s8 %v3520
    %v3522 = vlaneseq
    %v3523 = vshrl.u32 %v3522, 7
    %v3524 = vsub.s32 %v3521, %v3523
    %v3525 = vrot.slane %v3517, %v3524
    %v3526 = vcombine.high %v3525, %v3525
    %v3528 = vunpack.c.l.s4 1966171168
    %v3529 = vunpack.c.0.s8 %v3528
    %v3530 = vlaneseq
    %v3531 = vshrl.u32 %v3530, 7
    %v3532 = vsub.s32 %v3529, %v3531
    %v3533 = vrot.slane %v3525, %v3532
    %v3535 = vunpack.c.l.s4 1966171168
    %v3536 = vunpack.c.0.s8 %v3535
    %v3537 = vlaneseq
    %v3538 = vshrl.u32 %v3537, 7
    %v3539 = vsub.s32 %v3536, %v3538
    %v3540 = vrot.slane %v3526, %v3539
    %3543 = vst.msk [vmem:[#allocation9 + $0x4] sm:$0x1] %vm3115, %v3533
    %3544 = vst.msk [vmem:[#allocation9 + $0xc] sm:$0x1] %vm3115, %v3540
    %v3545 = vld [vmem:[%s92] sm:$0x3]
    %v3546 = vmax.f32 %v3545, 0.0
    %v3548 = vsel %vm124, %v3546, 0
    %3550 = vmatprep.subr.mxu0 0.0
    %3551 = vmatpush1.msra.mxu0 %v2996
    %3552 = vmatprep.subr.mxu0 0.0
    %3553 = vmatpush1.msra.mxu0 %v2997
    %3554 = vmatprep.subr.mxu0 0.0
    %3555 = vmatpush1.msra.mxu0 %v2998
    %3556 = vmatprep.subr.mxu0 0.0
    %3557 = vmatpush1.msra.mxu0 %v2999
    %3558 = vmatprep.subr.mxu0 0.0
    %3559 = vmatpush1.msra.mxu0 0.0
    %3560 = vmatprep.subr.mxu0 0.0
    %3561 = vmatpush1.msra.mxu0 0.0
    %3562 = vmatprep.subr.mxu0 0.0
    %3563 = vmatpush1.msra.mxu0 0.0
    %3564 = vmatprep.subr.mxu0 0.0
    %3565 = vmatpush1.msra.mxu0 0.0
    %3566 = vmatprep.subr.mxu0 0.0
    %3567 = vmatpush1.msra.mxu0 0.0
    %3568 = vmatprep.subr.mxu0 0.0
    %3569 = vmatpush1.msra.mxu0 0.0
    %3570 = vmatprep.subr.mxu0 0.0
    %3571 = vmatpush1.msra.mxu0 0.0
    %3572 = vmatprep.subr.mxu0 0.0
    %3573 = vmatpush1.msra.mxu0 0.0
    %3574 = vmatprep.subr.mxu0 0.0
    %3575 = vmatpush1.msra.mxu0 0.0
    %3576 = vmatprep.subr.mxu0 0.0
    %3577 = vmatpush1.msra.mxu0 0.0
    %3578 = vmatprep.subr.mxu0 0.0
    %3579 = vmatpush1.msra.mxu0 0.0
    %3580 = vmatprep.subr.mxu0 0.0
    %3581 = vmatpush1.msra.mxu0 0.0
    %3582 = vmatprep.subr.mxu0 0.0
    %3583 = vmatpush1.msra.mxu0 0.0
    %3584 = vmatprep.subr.mxu0 0.0
    %3585 = vmatpush1.msra.mxu0 0.0
    %3586 = vmatprep.subr.mxu0 0.0
    %3587 = vmatpush1.msra.mxu0 0.0
    %3588 = vmatprep.subr.mxu0 0.0
    %3589 = vmatpush1.msra.mxu0 0.0
    %3590 = vmatprep.subr.mxu0 0.0
    %3591 = vmatpush1.msra.mxu0 0.0
    %3592 = vmatprep.subr.mxu0 0.0
    %3593 = vmatpush1.msra.mxu0 0.0
    %3594 = vmatprep.subr.mxu0 0.0
    %3595 = vmatpush1.msra.mxu0 0.0
    %3596 = vmatprep.subr.mxu0 0.0
    %3597 = vmatpush1.msra.mxu0 0.0
    %3598 = vmatprep.subr.mxu0 0.0
    %3599 = vmatpush1.msra.mxu0 0.0
    %3600 = vmatprep.subr.mxu0 0.0
    %3601 = vmatpush1.msra.mxu0 0.0
    %3602 = vmatprep.subr.mxu0 0.0
    %3603 = vmatpush1.msra.mxu0 0.0
    %3604 = vmatprep.subr.mxu0 0.0
    %3605 = vmatpush1.msra.mxu0 0.0
    %3606 = vmatprep.subr.mxu0 0.0
    %3607 = vmatpush1.msra.mxu0 0.0
    %3608 = vmatprep.subr.mxu0 0.0
    %3609 = vmatpush1.msra.mxu0 0.0
    %3610 = vmatprep.subr.mxu0 0.0
    %3611 = vmatpush1.msra.mxu0 0.0
    %3612 = vmatprep.subr.mxu0 0.0
    %3613 = vmatpush1.msra.mxu0 0.0
    %3614 = vmatprep.mubr.f32.mxu0 0.0
    %3615 = vmatmul.mubr.f32.gmra.mrb[0].mxu0 %v3548
    %v3616 = vpop.f32.mrb[0].mxu0
    %v3617 = vadd.f32 %v3005, %v3616
    %v3618 = vpop.f32.mrb[0].mxu0
    %3619 = vdwg.mxu0
    %v3620 = vrot.slane %v3007, 5
    %v3621 = vrot.slane %v3008, 4
    %v3622 = vsel %vm60, %v3621, %v3620
    %v3624 = vadd.f32 %v3617, %v3622
    %v3627 = vunpack.c.l.s4 1966171168
    %v3628 = vunpack.c.0.s8 %v3627
    %v3629 = vlaneseq
    %v3630 = vshrl.u32 %v3629, 7
    %v3631 = vsub.s32 %v3628, %v3630
    %v3632 = vrot.slane %v3624, %v3631
    %v3633 = vcombine.high %v3632, %v3632
    %v3635 = vunpack.c.l.s4 1966171168
    %v3636 = vunpack.c.0.s8 %v3635
    %v3637 = vlaneseq
    %v3638 = vshrl.u32 %v3637, 7
    %v3639 = vsub.s32 %v3636, %v3638
    %v3640 = vrot.slane %v3632, %v3639
    %v3642 = vunpack.c.l.s4 1966171168
    %v3643 = vunpack.c.0.s8 %v3642
    %v3644 = vlaneseq
    %v3645 = vshrl.u32 %v3644, 7
    %v3646 = vsub.s32 %v3643, %v3645
    %v3647 = vrot.slane %v3633, %v3646
    %3650 = vst.msk [vmem:[#allocation9 + $0x5] sm:$0x1] %vm3115, %v3640
    %3651 = vst.msk [vmem:[#allocation9 + $0xd] sm:$0x1] %vm3115, %v3647
    %v3652 = vld [vmem:[%s98] sm:$0x3]
    %v3653 = vmax.f32 %v3652, 0.0
    %v3655 = vsel %vm124, %v3653, 0
    %3657 = vmatprep.subr.mxu0 0.0
    %3658 = vmatpush1.msra.mxu0 %v2996
    %3659 = vmatprep.subr.mxu0 0.0
    %3660 = vmatpush1.msra.mxu0 %v2997
    %3661 = vmatprep.subr.mxu0 0.0
    %3662 = vmatpush1.msra.mxu0 %v2998
    %3663 = vmatprep.subr.mxu0 0.0
    %3664 = vmatpush1.msra.mxu0 %v2999
    %3665 = vmatprep.subr.mxu0 0.0
    %3666 = vmatpush1.msra.mxu0 0.0
    %3667 = vmatprep.subr.mxu0 0.0
    %3668 = vmatpush1.msra.mxu0 0.0
    %3669 = vmatprep.subr.mxu0 0.0
    %3670 = vmatpush1.msra.mxu0 0.0
    %3671 = vmatprep.subr.mxu0 0.0
    %3672 = vmatpush1.msra.mxu0 0.0
    %3673 = vmatprep.subr.mxu0 0.0
    %3674 = vmatpush1.msra.mxu0 0.0
    %3675 = vmatprep.subr.mxu0 0.0
    %3676 = vmatpush1.msra.mxu0 0.0
    %3677 = vmatprep.subr.mxu0 0.0
    %3678 = vmatpush1.msra.mxu0 0.0
    %3679 = vmatprep.subr.mxu0 0.0
    %3680 = vmatpush1.msra.mxu0 0.0
    %3681 = vmatprep.subr.mxu0 0.0
    %3682 = vmatpush1.msra.mxu0 0.0
    %3683 = vmatprep.subr.mxu0 0.0
    %3684 = vmatpush1.msra.mxu0 0.0
    %3685 = vmatprep.subr.mxu0 0.0
    %3686 = vmatpush1.msra.mxu0 0.0
    %3687 = vmatprep.subr.mxu0 0.0
    %3688 = vmatpush1.msra.mxu0 0.0
    %3689 = vmatprep.subr.mxu0 0.0
    %3690 = vmatpush1.msra.mxu0 0.0
    %3691 = vmatprep.subr.mxu0 0.0
    %3692 = vmatpush1.msra.mxu0 0.0
    %3693 = vmatprep.subr.mxu0 0.0
    %3694 = vmatpush1.msra.mxu0 0.0
    %3695 = vmatprep.subr.mxu0 0.0
    %3696 = vmatpush1.msra.mxu0 0.0
    %3697 = vmatprep.subr.mxu0 0.0
    %3698 = vmatpush1.msra.mxu0 0.0
    %3699 = vmatprep.subr.mxu0 0.0
    %3700 = vmatpush1.msra.mxu0 0.0
    %3701 = vmatprep.subr.mxu0 0.0
    %3702 = vmatpush1.msra.mxu0 0.0
    %3703 = vmatprep.subr.mxu0 0.0
    %3704 = vmatpush1.msra.mxu0 0.0
    %3705 = vmatprep.subr.mxu0 0.0
    %3706 = vmatpush1.msra.mxu0 0.0
    %3707 = vmatprep.subr.mxu0 0.0
    %3708 = vmatpush1.msra.mxu0 0.0
    %3709 = vmatprep.subr.mxu0 0.0
    %3710 = vmatpush1.msra.mxu0 0.0
    %3711 = vmatprep.subr.mxu0 0.0
    %3712 = vmatpush1.msra.mxu0 0.0
    %3713 = vmatprep.subr.mxu0 0.0
    %3714 = vmatpush1.msra.mxu0 0.0
    %3715 = vmatprep.subr.mxu0 0.0
    %3716 = vmatpush1.msra.mxu0 0.0
    %3717 = vmatprep.subr.mxu0 0.0
    %3718 = vmatpush1.msra.mxu0 0.0
    %3719 = vmatprep.subr.mxu0 0.0
    %3720 = vmatpush1.msra.mxu0 0.0
    %3721 = vmatprep.mubr.f32.mxu0 0.0
    %3722 = vmatmul.mubr.f32.gmra.mrb[0].mxu0 %v3655
    %v3723 = vpop.f32.mrb[0].mxu0
    %v3724 = vadd.f32 %v3005, %v3723
    %v3725 = vpop.f32.mrb[0].mxu0
    %3726 = vdwg.mxu0
    %v3727 = vrot.slane %v3007, 6
    %v3728 = vrot.slane %v3008, 5
    %v3729 = vsel %vm60, %v3728, %v3727
    %v3731 = vadd.f32 %v3724, %v3729
    %v3734 = vunpack.c.l.s4 1966171168
    %v3735 = vunpack.c.0.s8 %v3734
    %v3736 = vlaneseq
    %v3737 = vshrl.u32 %v3736, 7
    %v3738 = vsub.s32 %v3735, %v3737
    %v3739 = vrot.slane %v3731, %v3738
    %v3740 = vcombine.high %v3739, %v3739
    %v3742 = vunpack.c.l.s4 1966171168
    %v3743 = vunpack.c.0.s8 %v3742
    %v3744 = vlaneseq
    %v3745 = vshrl.u32 %v3744, 7
    %v3746 = vsub.s32 %v3743, %v3745
    %v3747 = vrot.slane %v3739, %v3746
    %v3749 = vunpack.c.l.s4 1966171168
    %v3750 = vunpack.c.0.s8 %v3749
    %v3751 = vlaneseq
    %v3752 = vshrl.u32 %v3751, 7
    %v3753 = vsub.s32 %v3750, %v3752
    %v3754 = vrot.slane %v3740, %v3753
    %3757 = vst.msk [vmem:[#allocation9 + $0x6] sm:$0x1] %vm3115, %v3747
    %3758 = vst.msk [vmem:[#allocation9 + $0xe] sm:$0x1] %vm3115, %v3754
    %v3759 = vld [vmem:[%s103] sm:$0x3]
    %v3760 = vmax.f32 %v3759, 0.0
    %v3762 = vsel %vm124, %v3760, 0
    %3764 = vmatprep.subr.mxu0 0.0
    %3765 = vmatpush1.msra.mxu0 %v2996
    %3766 = vmatprep.subr.mxu0 0.0
    %3767 = vmatpush1.msra.mxu0 %v2997
    %3768 = vmatprep.subr.mxu0 0.0
    %3769 = vmatpush1.msra.mxu0 %v2998
    %3770 = vmatprep.subr.mxu0 0.0
    %3771 = vmatpush1.msra.mxu0 %v2999
    %3772 = vmatprep.subr.mxu0 0.0
    %3773 = vmatpush1.msra.mxu0 0.0
    %3774 = vmatprep.subr.mxu0 0.0
    %3775 = vmatpush1.msra.mxu0 0.0
    %3776 = vmatprep.subr.mxu0 0.0
    %3777 = vmatpush1.msra.mxu0 0.0
    %3778 = vmatprep.subr.mxu0 0.0
    %3779 = vmatpush1.msra.mxu0 0.0
    %3780 = vmatprep.subr.mxu0 0.0
    %3781 = vmatpush1.msra.mxu0 0.0
    %3782 = vmatprep.subr.mxu0 0.0
    %3783 = vmatpush1.msra.mxu0 0.0
    %3784 = vmatprep.subr.mxu0 0.0
    %3785 = vmatpush1.msra.mxu0 0.0
    %3786 = vmatprep.subr.mxu0 0.0
    %3787 = vmatpush1.msra.mxu0 0.0
    %3788 = vmatprep.subr.mxu0 0.0
    %3789 = vmatpush1.msra.mxu0 0.0
    %3790 = vmatprep.subr.mxu0 0.0
    %3791 = vmatpush1.msra.mxu0 0.0
    %3792 = vmatprep.subr.mxu0 0.0
    %3793 = vmatpush1.msra.mxu0 0.0
    %3794 = vmatprep.subr.mxu0 0.0
    %3795 = vmatpush1.msra.mxu0 0.0
    %3796 = vmatprep.subr.mxu0 0.0
    %3797 = vmatpush1.msra.mxu0 0.0
    %3798 = vmatprep.subr.mxu0 0.0
    %3799 = vmatpush1.msra.mxu0 0.0
    %3800 = vmatprep.subr.mxu0 0.0
    %3801 = vmatpush1.msra.mxu0 0.0
    %3802 = vmatprep.subr.mxu0 0.0
    %3803 = vmatpush1.msra.mxu0 0.0
    %3804 = vmatprep.subr.mxu0 0.0
    %3805 = vmatpush1.msra.mxu0 0.0
    %3806 = vmatprep.subr.mxu0 0.0
    %3807 = vmatpush1.msra.mxu0 0.0
    %3808 = vmatprep.subr.mxu0 0.0
    %3809 = vmatpush1.msra.mxu0 0.0
    %3810 = vmatprep.subr.mxu0 0.0
    %3811 = vmatpush1.msra.mxu0 0.0
    %3812 = vmatprep.subr.mxu0 0.0
    %3813 = vmatpush1.msra.mxu0 0.0
    %3814 = vmatprep.subr.mxu0 0.0
    %3815 = vmatpush1.msra.mxu0 0.0
    %3816 = vmatprep.subr.mxu0 0.0
    %3817 = vmatpush1.msra.mxu0 0.0
    %3818 = vmatprep.subr.mxu0 0.0
    %3819 = vmatpush1.msra.mxu0 0.0
    %3820 = vmatprep.subr.mxu0 0.0
    %3821 = vmatpush1.msra.mxu0 0.0
    %3822 = vmatprep.subr.mxu0 0.0
    %3823 = vmatpush1.msra.mxu0 0.0
    %3824 = vmatprep.subr.mxu0 0.0
    %3825 = vmatpush1.msra.mxu0 0.0
    %3826 = vmatprep.subr.mxu0 0.0
    %3827 = vmatpush1.msra.mxu0 0.0
    %3828 = vmatprep.mubr.f32.mxu0 0.0
    %3829 = vmatmul.mubr.f32.gmra.mrb[0].mxu0 %v3762
    %v3830 = vpop.f32.mrb[0].mxu0
    %v3831 = vadd.f32 %v3005, %v3830
    %v3832 = vpop.f32.mrb[0].mxu0
    %3833 = vdwg.mxu0
    %v3834 = vrot.slane %v3007, 7
    %v3835 = vrot.slane %v3008, 6
    %v3836 = vsel %vm60, %v3835, %v3834
    %v3838 = vadd.f32 %v3831, %v3836
    %v3841 = vunpack.c.l.s4 1966171168
    %v3842 = vunpack.c.0.s8 %v3841
    %v3843 = vlaneseq
    %v3844 = vshrl.u32 %v3843, 7
    %v3845 = vsub.s32 %v3842, %v3844
    %v3846 = vrot.slane %v3838, %v3845
    %v3847 = vcombine.high %v3846, %v3846
    %v3849 = vunpack.c.l.s4 1966171168
    %v3850 = vunpack.c.0.s8 %v3849
    %v3851 = vlaneseq
    %v3852 = vshrl.u32 %v3851, 7
    %v3853 = vsub.s32 %v3850, %v3852
    %v3854 = vrot.slane %v3846, %v3853
    %v3856 = vunpack.c.l.s4 1966171168
    %v3857 = vunpack.c.0.s8 %v3856
    %v3858 = vlaneseq
    %v3859 = vshrl.u32 %v3858, 7
    %v3860 = vsub.s32 %v3857, %v3859
    %v3861 = vrot.slane %v3847, %v3860
    %3864 = vst.msk [vmem:[#allocation9 + $0x7] sm:$0x1] %vm3115, %v3854
    %3865 = vst.msk [vmem:[#allocation9 + $0xf] sm:$0x1] %vm3115, %v3861
    // Predicated region
    $region38: #{tpu_custom_call.1} parent=1 // pred_check
      _
    $region39: #{tpu_custom_call.1} parent=1 // pred_check_branch
      %3867 = sbr.rel (0) target = $region41
    $region40: #{tpu_custom_call.1} parent=1 // pred_region
      %s3869 = ssub.s32 256, 256
      %3870 = vsyncadd [#allocation6], %s3869
      %s3871 = sshll.u32 [#allocation9], 4
      %s3872 = int_to_ptr.vmem [resolvable:$true] %s3871
      %3877 = dma.vmem_to_hbm [thread:$0]  %s3872, 256, %s7, [#allocation6], 128, 128, 8
    $region41: #{tpu_custom_call.1} parent=1 // pred_fallthru
      _
    // Predicated region
    $region42: #{tpu_custom_call.1} parent=1 // pred_check
      _
    $region43: #{tpu_custom_call.1} parent=1 // pred_check_branch
      %3879 = sbr.rel (0) target = $region45
    $region44: #{tpu_custom_call.1} parent=1 // pred_region
      %3880 = dma.done [#allocation6], 256
    $region45: #{tpu_custom_call.1} parent=1 // pred_fallthru
      _
    %3881 = vsyncpa [#allocation5], 1
    %3882 = vsyncpa [#allocation8], 1
    %3883 = vsyncpa [#allocation6], 1

</llo_original>
